<compile_context>
chip_gen: v7x
topology: tpu7x:2x2x1
jax: 0.10.0
libtpu: 0.0.40
codegen_flags: <defaults>
</compile_context>

<pallas_src>
import functools

import numpy as np
import jax
import jax.numpy as jnp
from jax import lax
from jax.experimental import pallas as pl
from jax.experimental.pallas import tpu as pltpu


# ------------------------------ fused kernel --------------------------------

def _fused_cnn_kernel(x_ref, *refs):
    """refs = 4 x (B, S, P, Q, bias_row) + (fc_wT, fc_b) + (out_ref,)."""
    out_ref = refs[-1]
    prm = refs[:-1]

    a = x_ref[...].astype(jnp.bfloat16)          # (nb*16, 16*1) lane-dense activation
    k = 0
    for _ in range(4):
        B, S, P, Q, brow = prm[k:k + 5]
        k += 5

        # dy = -1 / +1 shifted copies of the activation (0/1 shift matrices fold in
        # the "same" zero padding in y).  Selection of bf16 values -> exact.
        a_m = jnp.dot(S[0], a, preferred_element_type=jnp.float32).astype(jnp.bfloat16)
        a_p = jnp.dot(S[1], a, preferred_element_type=jnp.float32).astype(jnp.bfloat16)

        # conv3x3 + bias: banded weight matmuls (dx shift + x padding inside B).
        conv = (jnp.dot(a,   B[1], preferred_element_type=jnp.float32)
                + jnp.dot(a_m, B[0], preferred_element_type=jnp.float32)
                + jnp.dot(a_p, B[2], preferred_element_type=jnp.float32)
                + brow[...])                                  # (nb*H, W*Cout) f32
        cb = conv.astype(jnp.bfloat16)

        # 2x2 max-pool (row selection -> max, column selection -> max), then ReLU.
        rows = jnp.maximum(
            jnp.dot(P[0], cb, preferred_element_type=jnp.float32),
            jnp.dot(P[1], cb, preferred_element_type=jnp.float32)).astype(jnp.bfloat16)
        pooled = jnp.maximum(
            jnp.dot(rows, Q[0], preferred_element_type=jnp.float32),
            jnp.dot(rows, Q[1], preferred_element_type=jnp.float32))
        a = jnp.maximum(pooled, 0.0).astype(jnp.bfloat16)     # (nb*Ho, Wo*Cout)

    fc_w, fc_b = prm[k], prm[k + 1]
    logits = jnp.dot(a, fc_w[...], preferred_element_type=jnp.float32) + fc_b[...]
    out_ref[0] = logits                                       # (nb, 10)


# ------------------------- weight / structure packing -----------------------

def _pool_select(n):
    """(n//2, n) 0/1 matrices picking even / odd positions of a length-n axis."""
    h = n // 2
    r0 = np.zeros((h, n), np.float32)
    r1 = np.zeros((h, n), np.float32)
    r0[np.arange(h), 2 * np.arange(h)] = 1.0
    r1[np.arange(h), 2 * np.arange(h) + 1] = 1.0
    return r0, r1


def _layer_operands(w, b, H, W, nb):
    """Kernel operands for one conv3x3(same) + bias + maxpool2x2 + relu layer."""
    cout, cin = int(w.shape[0]), int(w.shape[1])
    ho, wo = H // 2, W // 2
    wt = jnp.transpose(w, (2, 3, 1, 0)).astype(jnp.float32)   # (3, 3, Cin, Cout)

    # B_dy[(x+dx)*Cin+ci, x*Cout+co] = w[co, ci, dy+1, dx+1]  (banded in x).
    Bs = []
    for dy in (-1, 0, 1):
        Bm = jnp.zeros((W * cin, W * cout), jnp.float32)
        for dx in (-1, 0, 1):
            band = np.eye(W, W, -dx, dtype=np.float32)        # [xi, xo]=1 iff xi=xo+dx
            Bm = Bm + jnp.kron(jnp.asarray(band), wt[dy + 1, dx + 1])
        Bs.append(Bm)
    Bs = jnp.stack(Bs).astype(jnp.bfloat16)                   # (3, W*Cin, W*Cout)

    eye_n = np.eye(nb, dtype=np.float32)
    # S_dy[n*H+y, n*H+y+dy] = 1 (zero rows at the y boundary -> "same" padding).
    Ss = np.stack([np.kron(eye_n, np.eye(H, H, -1, dtype=np.float32)),
                   np.kron(eye_n, np.eye(H, H, +1, dtype=np.float32))])
    # Row pooling selectors: P_a[n*Ho+yo, n*H+2yo+a] = 1.
    r0, r1 = _pool_select(H)
    Ps = np.stack([np.kron(eye_n, r0), np.kron(eye_n, r1)])
    # Column pooling selectors: Q_b[(2xo+b)*Cout+co, xo*Cout+co] = 1.
    c0, c1 = _pool_select(W)
    eye_c = np.eye(cout, dtype=np.float32)
    Qs = np.stack([np.kron(c0.T, eye_c), np.kron(c1.T, eye_c)])
    # Bias broadcast row in the lane-dense layout: brow[0, x*Cout+co] = b[co].
    brow = jnp.tile(b.astype(jnp.float32), W).reshape(1, W * cout)

    return [Bs,
            jnp.asarray(Ss, dtype=jnp.bfloat16),
            jnp.asarray(Ps, dtype=jnp.bfloat16),
            jnp.asarray(Qs, dtype=jnp.bfloat16),
            brow]


def pack_operands(params, nb=1):
    """One-time weight preprocessing (independent of the activations / batch data)."""
    ops = []
    h = 16
    for name in ("conv1", "conv2", "conv3", "conv4"):
        w, b = params[name]
        ops += _layer_operands(w, b, h, h, nb)
        h //= 2
    wf, bfc = params["fc"]
    ops.append(jnp.transpose(wf).astype(jnp.bfloat16))        # (128, 10)
    ops.append(bfc.reshape(1, -1).astype(jnp.float32))        # (1, 10)
    return tuple(ops)


# ------------------------------ forward pass ---------------------------------

def _const_index_map(ndim):
    return lambda i: (0,) * ndim


@functools.partial(jax.jit, static_argnames=("nb",))
def cnn_fc_forward(operands, x_nchw, nb=1):
    n = x_nchw.shape[0]
    assert x_nchw.shape[1:] == (1, 16, 16), x_nchw.shape
    assert n % nb == 0
    g = n // nb

    # NCHW, C=1  ->  lane-dense (N*H, W*Cin) rows in raster order.
    x2d = x_nchw.astype(jnp.float32).reshape(n * 16, 16)

    in_specs = [pl.BlockSpec((nb * 16, 16), lambda i: (i, 0))]
    for arr in operands:
        in_specs.append(pl.BlockSpec(arr.shape, _const_index_map(arr.ndim)))

    out = pl.pallas_call(
        _fused_cnn_kernel,
        grid=(g,),
        in_specs=in_specs,
        out_specs=pl.BlockSpec((1, nb, 10), lambda i: (i, 0, 0)),
        out_shape=jax.ShapeDtypeStruct((g, nb, 10), jnp.float32),
        compiler_params=pltpu.CompilerParams(
            dimension_semantics=("parallel",)),
    )(x2d, *operands)
    return out.reshape(n, 10)


# --------------------------- params & XLA reference --------------------------

def init_params(key):
    """PyTorch-default-style init (uniform +/- 1/sqrt(fan_in))."""
    def conv_p(k, cin, cout):
        k1, k2 = jax.random.split(k)
        bound = 1.0 / (cin * 9) ** 0.5
        w = jax.random.uniform(k1, (cout, cin, 3, 3), jnp.float32, -bound, bound)
        b = jax.random.uniform(k2, (cout,), jnp.float32, -bound, bound)
        return w, b

    def fc_p(k, fin, fout):
        k1, k2 = jax.random.split(k)
        bound = 1.0 / fin ** 0.5
        w = jax.random.uniform(k1, (fout, fin), jnp.float32, -bound, bound)
        b = jax.random.uniform(k2, (fout,), jnp.float32, -bound, bound)
        return w, b

    ks = jax.random.split(key, 5)
    return {
        "conv1": conv_p(ks[0], 1, 16),
        "conv2": conv_p(ks[1], 16, 32),
        "conv3": conv_p(ks[2], 32, 64),
        "conv4": conv_p(ks[3], 64, 128),
        "fc": fc_p(ks[4], 128, 10),
    }


def _xla_reference(params, x_nchw):
    """Pure-XLA float32 reference of the PyTorch forward (for validation only)."""
    x = x_nchw.astype(jnp.float32)
    for name in ("conv1", "conv2", "conv3", "conv4"):
        w, b = params[name]
        x = lax.conv_general_dilated(
            x, w.astype(jnp.float32), window_strides=(1, 1), padding="SAME",
            dimension_numbers=("NCHW", "OIHW", "NCHW"))
        x = x + b.reshape(1, -1, 1, 1)
        x = lax.reduce_window(x, -jnp.inf, lax.max,
                              window_dimensions=(1, 1, 2, 2),
                              window_strides=(1, 1, 2, 2), padding="VALID")
        x = jnp.maximum(x, 0.0)
    wf, bfc = params["fc"]
    return x.reshape(x.shape[0], -1) @ wf.T + bfc


# ----------------------------------- main ------------------------------------

if __name__ == "__main__":
    key = jax.random.PRNGKey(0)
    k_param, k_data = jax.random.split(key)

    params = init_params(k_param)
    # 16x16 single-channel input so the 4x-pooled feature map is 1x1x128,
    # matching the Linear(128, 10) head of the PyTorch module.
    x = jax.random.normal(k_data, (2, 1, 16, 16), dtype=jnp.float32)

    operands = pack_operands(params, nb=1)          # one-time weight preprocessing
    out = cnn_fc_forward(operands, x, nb=1)         # single fused Pallas kernel
    out = jax.block_until_ready(out)

    ref = _xla_reference(params, x)
    err = float(jnp.max(jnp.abs(out - ref)))

    assert out.shape == (2, 10), out.shape
    assert bool(jnp.all(jnp.isfinite(out)))
    assert err < 0.1, f"max |kernel - reference| = {err}"   # bf16 MXU drift only
    print("KERNEL_OK")
</pallas_src>

<mosaic_0001>
module attributes {stable_mosaic.version = 11 : i64} {
  func.func @_fused_cnn_kernel(%arg0: i32, %arg1: memref<16x16xf32, #tpu.memory_space<vmem>>, %arg2: memref<3x16x256xbf16, #tpu.memory_space<vmem>>, %arg3: memref<2x16x16xbf16, #tpu.memory_space<vmem>>, %arg4: memref<2x8x16xbf16, #tpu.memory_space<vmem>>, %arg5: memref<2x256x128xbf16, #tpu.memory_space<vmem>>, %arg6: memref<1x256xf32, #tpu.memory_space<vmem>>, %arg7: memref<3x128x256xbf16, #tpu.memory_space<vmem>>, %arg8: memref<2x8x8xbf16, #tpu.memory_space<vmem>>, %arg9: memref<2x4x8xbf16, #tpu.memory_space<vmem>>, %arg10: memref<2x256x128xbf16, #tpu.memory_space<vmem>>, %arg11: memref<1x256xf32, #tpu.memory_space<vmem>>, %arg12: memref<3x128x256xbf16, #tpu.memory_space<vmem>>, %arg13: memref<2x4x4xbf16, #tpu.memory_space<vmem>>, %arg14: memref<2x2x4xbf16, #tpu.memory_space<vmem>>, %arg15: memref<2x256x128xbf16, #tpu.memory_space<vmem>>, %arg16: memref<1x256xf32, #tpu.memory_space<vmem>>, %arg17: memref<3x128x256xbf16, #tpu.memory_space<vmem>>, %arg18: memref<2x2x2xbf16, #tpu.memory_space<vmem>>, %arg19: memref<2x1x2xbf16, #tpu.memory_space<vmem>>, %arg20: memref<2x256x128xbf16, #tpu.memory_space<vmem>>, %arg21: memref<1x256xf32, #tpu.memory_space<vmem>>, %arg22: memref<128x10xbf16, #tpu.memory_space<vmem>>, %arg23: memref<1x10xf32, #tpu.memory_space<vmem>>, %arg24: memref<1x1x10xf32, #tpu.memory_space<vmem>>) attributes {dimension_semantics = [#tpu.dimension_semantics<parallel>], iteration_bounds = array<i64: 2>, scalar_prefetch = 0 : i64, scratch_operands = 0 : i64, tpu.core_type = #tpu.core_type<tc>, window_params = [{transform_indices = @transform_0, window_bounds = array<i64: 16, 16>}, {pipeline_mode = #tpu.pipeline_mode<synchronous>, transform_indices = @transform_1, window_bounds = array<i64: 3, 16, 256>}, {pipeline_mode = #tpu.pipeline_mode<synchronous>, transform_indices = @transform_2, window_bounds = array<i64: 2, 16, 16>}, {pipeline_mode = #tpu.pipeline_mode<synchronous>, transform_indices = @transform_3, window_bounds = array<i64: 2, 8, 16>}, {pipeline_mode = #tpu.pipeline_mode<synchronous>, transform_indices = @transform_4, window_bounds = array<i64: 2, 256, 128>}, {pipeline_mode = #tpu.pipeline_mode<synchronous>, transform_indices = @transform_5, window_bounds = array<i64: 1, 256>}, {pipeline_mode = #tpu.pipeline_mode<synchronous>, transform_indices = @transform_6, window_bounds = array<i64: 3, 128, 256>}, {pipeline_mode = #tpu.pipeline_mode<synchronous>, transform_indices = @transform_7, window_bounds = array<i64: 2, 8, 8>}, {pipeline_mode = #tpu.pipeline_mode<synchronous>, transform_indices = @transform_8, window_bounds = array<i64: 2, 4, 8>}, {pipeline_mode = #tpu.pipeline_mode<synchronous>, transform_indices = @transform_9, window_bounds = array<i64: 2, 256, 128>}, {pipeline_mode = #tpu.pipeline_mode<synchronous>, transform_indices = @transform_10, window_bounds = array<i64: 1, 256>}, {pipeline_mode = #tpu.pipeline_mode<synchronous>, transform_indices = @transform_11, window_bounds = array<i64: 3, 128, 256>}, {pipeline_mode = #tpu.pipeline_mode<synchronous>, transform_indices = @transform_12, window_bounds = array<i64: 2, 4, 4>}, {pipeline_mode = #tpu.pipeline_mode<synchronous>, transform_indices = @transform_13, window_bounds = array<i64: 2, 2, 4>}, {pipeline_mode = #tpu.pipeline_mode<synchronous>, transform_indices = @transform_14, window_bounds = array<i64: 2, 256, 128>}, {pipeline_mode = #tpu.pipeline_mode<synchronous>, transform_indices = @transform_15, window_bounds = array<i64: 1, 256>}, {pipeline_mode = #tpu.pipeline_mode<synchronous>, transform_indices = @transform_16, window_bounds = array<i64: 3, 128, 256>}, {pipeline_mode = #tpu.pipeline_mode<synchronous>, transform_indices = @transform_17, window_bounds = array<i64: 2, 2, 2>}, {pipeline_mode = #tpu.pipeline_mode<synchronous>, transform_indices = @transform_18, window_bounds = array<i64: 2, 1, 2>}, {pipeline_mode = #tpu.pipeline_mode<synchronous>, transform_indices = @transform_19, window_bounds = array<i64: 2, 256, 128>}, {pipeline_mode = #tpu.pipeline_mode<synchronous>, transform_indices = @transform_20, window_bounds = array<i64: 1, 256>}, {pipeline_mode = #tpu.pipeline_mode<synchronous>, transform_indices = @transform_21, window_bounds = array<i64: 128, 10>}, {pipeline_mode = #tpu.pipeline_mode<synchronous>, transform_indices = @transform_22, window_bounds = array<i64: 1, 10>}, {transform_indices = @transform_23, window_bounds = array<i64: 1, 1, 10>}]} {
    %c0 = arith.constant 0 : index
    %c0_0 = arith.constant 0 : index
    %0 = vector.load %arg1[%c0, %c0_0] : memref<16x16xf32, #tpu.memory_space<vmem>>, vector<16x16xf32>
    %1 = arith.truncf %0 : vector<16x16xf32> to vector<16x16xbf16>
    %c0_1 = arith.constant 0 : index
    %c0_2 = arith.constant 0 : index
    %c0_3 = arith.constant 0 : index
    %2 = vector.load %arg3[%c0_1, %c0_2, %c0_3] : memref<2x16x16xbf16, #tpu.memory_space<vmem>>, vector<1x16x16xbf16>
    %3 = vector.shape_cast %2 : vector<1x16x16xbf16> to vector<16x16xbf16>
    %cst = arith.constant dense<0.000000e+00> : vector<16x16xf32>
    %4 = tpu.matmul %3, %1, %cst {dimension_numbers = #tpu.dot_dimension_numbers<[1], [0], [0], [1], [0, 0, 1, 1], [], []>} : vector<16x16xbf16>, vector<16x16xbf16>, vector<16x16xf32> -> vector<16x16xf32>
    %5 = arith.truncf %4 : vector<16x16xf32> to vector<16x16xbf16>
    %c1 = arith.constant 1 : index
    %c0_4 = arith.constant 0 : index
    %c0_5 = arith.constant 0 : index
    %6 = vector.load %arg3[%c1, %c0_4, %c0_5] : memref<2x16x16xbf16, #tpu.memory_space<vmem>>, vector<1x16x16xbf16>
    %7 = vector.shape_cast %6 : vector<1x16x16xbf16> to vector<16x16xbf16>
    %cst_6 = arith.constant dense<0.000000e+00> : vector<16x16xf32>
    %8 = tpu.matmul %7, %1, %cst_6 {dimension_numbers = #tpu.dot_dimension_numbers<[1], [0], [0], [1], [0, 0, 1, 1], [], []>} : vector<16x16xbf16>, vector<16x16xbf16>, vector<16x16xf32> -> vector<16x16xf32>
    %9 = arith.truncf %8 : vector<16x16xf32> to vector<16x16xbf16>
    %c1_7 = arith.constant 1 : index
    %c0_8 = arith.constant 0 : index
    %c0_9 = arith.constant 0 : index
    %10 = vector.load %arg2[%c1_7, %c0_8, %c0_9] : memref<3x16x256xbf16, #tpu.memory_space<vmem>>, vector<1x16x256xbf16>
    %11 = vector.shape_cast %10 : vector<1x16x256xbf16> to vector<16x256xbf16>
    %cst_10 = arith.constant dense<0.000000e+00> : vector<16x256xf32>
    %12 = tpu.matmul %1, %11, %cst_10 {dimension_numbers = #tpu.dot_dimension_numbers<[1], [0], [0], [1], [0, 0, 1, 1], [], []>} : vector<16x16xbf16>, vector<16x256xbf16>, vector<16x256xf32> -> vector<16x256xf32>
    %c0_11 = arith.constant 0 : index
    %c0_12 = arith.constant 0 : index
    %c0_13 = arith.constant 0 : index
    %13 = vector.load %arg2[%c0_11, %c0_12, %c0_13] : memref<3x16x256xbf16, #tpu.memory_space<vmem>>, vector<1x16x256xbf16>
    %14 = vector.shape_cast %13 : vector<1x16x256xbf16> to vector<16x256xbf16>
    %cst_14 = arith.constant dense<0.000000e+00> : vector<16x256xf32>
    %15 = tpu.matmul %5, %14, %cst_14 {dimension_numbers = #tpu.dot_dimension_numbers<[1], [0], [0], [1], [0, 0, 1, 1], [], []>} : vector<16x16xbf16>, vector<16x256xbf16>, vector<16x256xf32> -> vector<16x256xf32>
    %16 = arith.addf %12, %15 : vector<16x256xf32>
    %c2 = arith.constant 2 : index
    %c0_15 = arith.constant 0 : index
    %c0_16 = arith.constant 0 : index
    %17 = vector.load %arg2[%c2, %c0_15, %c0_16] : memref<3x16x256xbf16, #tpu.memory_space<vmem>>, vector<1x16x256xbf16>
    %18 = vector.shape_cast %17 : vector<1x16x256xbf16> to vector<16x256xbf16>
    %cst_17 = arith.constant dense<0.000000e+00> : vector<16x256xf32>
    %19 = tpu.matmul %9, %18, %cst_17 {dimension_numbers = #tpu.dot_dimension_numbers<[1], [0], [0], [1], [0, 0, 1, 1], [], []>} : vector<16x16xbf16>, vector<16x256xbf16>, vector<16x256xf32> -> vector<16x256xf32>
    %20 = arith.addf %16, %19 : vector<16x256xf32>
    %c0_18 = arith.constant 0 : index
    %c0_19 = arith.constant 0 : index
    %21 = vector.load %arg6[%c0_18, %c0_19] : memref<1x256xf32, #tpu.memory_space<vmem>>, vector<1x256xf32>
    %22 = vector.broadcast %21 : vector<1x256xf32> to vector<16x256xf32>
    %23 = arith.addf %20, %22 : vector<16x256xf32>
    %24 = arith.truncf %23 : vector<16x256xf32> to vector<16x256xbf16>
    %c0_20 = arith.constant 0 : index
    %c0_21 = arith.constant 0 : index
    %c0_22 = arith.constant 0 : index
    %25 = vector.load %arg4[%c0_20, %c0_21, %c0_22] : memref<2x8x16xbf16, #tpu.memory_space<vmem>>, vector<1x8x16xbf16>
    %26 = vector.shape_cast %25 : vector<1x8x16xbf16> to vector<8x16xbf16>
    %cst_23 = arith.constant dense<0.000000e+00> : vector<8x256xf32>
    %27 = tpu.matmul %26, %24, %cst_23 {dimension_numbers = #tpu.dot_dimension_numbers<[1], [0], [0], [1], [0, 0, 1, 1], [], []>} : vector<8x16xbf16>, vector<16x256xbf16>, vector<8x256xf32> -> vector<8x256xf32>
    %c1_24 = arith.constant 1 : index
    %c0_25 = arith.constant 0 : index
    %c0_26 = arith.constant 0 : index
    %28 = vector.load %arg4[%c1_24, %c0_25, %c0_26] : memref<2x8x16xbf16, #tpu.memory_space<vmem>>, vector<1x8x16xbf16>
    %29 = vector.shape_cast %28 : vector<1x8x16xbf16> to vector<8x16xbf16>
    %cst_27 = arith.constant dense<0.000000e+00> : vector<8x256xf32>
    %30 = tpu.matmul %29, %24, %cst_27 {dimension_numbers = #tpu.dot_dimension_numbers<[1], [0], [0], [1], [0, 0, 1, 1], [], []>} : vector<8x16xbf16>, vector<16x256xbf16>, vector<8x256xf32> -> vector<8x256xf32>
    %31 = arith.maximumf %27, %30 : vector<8x256xf32>
    %32 = arith.truncf %31 : vector<8x256xf32> to vector<8x256xbf16>
    %c0_28 = arith.constant 0 : index
    %c0_29 = arith.constant 0 : index
    %c0_30 = arith.constant 0 : index
    %33 = vector.load %arg5[%c0_28, %c0_29, %c0_30] : memref<2x256x128xbf16, #tpu.memory_space<vmem>>, vector<1x256x128xbf16>
    %34 = vector.shape_cast %33 : vector<1x256x128xbf16> to vector<256x128xbf16>
    %cst_31 = arith.constant dense<0.000000e+00> : vector<8x128xf32>
    %35 = tpu.matmul %32, %34, %cst_31 {dimension_numbers = #tpu.dot_dimension_numbers<[1], [0], [0], [1], [0, 0, 1, 1], [], []>} : vector<8x256xbf16>, vector<256x128xbf16>, vector<8x128xf32> -> vector<8x128xf32>
    %c1_32 = arith.constant 1 : index
    %c0_33 = arith.constant 0 : index
    %c0_34 = arith.constant 0 : index
    %36 = vector.load %arg5[%c1_32, %c0_33, %c0_34] : memref<2x256x128xbf16, #tpu.memory_space<vmem>>, vector<1x256x128xbf16>
    %37 = vector.shape_cast %36 : vector<1x256x128xbf16> to vector<256x128xbf16>
    %cst_35 = arith.constant dense<0.000000e+00> : vector<8x128xf32>
    %38 = tpu.matmul %32, %37, %cst_35 {dimension_numbers = #tpu.dot_dimension_numbers<[1], [0], [0], [1], [0, 0, 1, 1], [], []>} : vector<8x256xbf16>, vector<256x128xbf16>, vector<8x128xf32> -> vector<8x128xf32>
    %39 = arith.maximumf %35, %38 : vector<8x128xf32>
    %cst_36 = arith.constant 0.000000e+00 : f32
    %40 = vector.broadcast %cst_36 : f32 to vector<8x128xf32>
    %41 = arith.maximumf %39, %40 : vector<8x128xf32>
    %42 = arith.truncf %41 : vector<8x128xf32> to vector<8x128xbf16>
    %c0_37 = arith.constant 0 : index
    %c0_38 = arith.constant 0 : index
    %c0_39 = arith.constant 0 : index
    %43 = vector.load %arg8[%c0_37, %c0_38, %c0_39] : memref<2x8x8xbf16, #tpu.memory_space<vmem>>, vector<1x8x8xbf16>
    %44 = vector.shape_cast %43 : vector<1x8x8xbf16> to vector<8x8xbf16>
    %cst_40 = arith.constant dense<0.000000e+00> : vector<8x128xf32>
    %45 = tpu.matmul %44, %42, %cst_40 {dimension_numbers = #tpu.dot_dimension_numbers<[1], [0], [0], [1], [0, 0, 1, 1], [], []>} : vector<8x8xbf16>, vector<8x128xbf16>, vector<8x128xf32> -> vector<8x128xf32>
    %46 = arith.truncf %45 : vector<8x128xf32> to vector<8x128xbf16>
    %c1_41 = arith.constant 1 : index
    %c0_42 = arith.constant 0 : index
    %c0_43 = arith.constant 0 : index
    %47 = vector.load %arg8[%c1_41, %c0_42, %c0_43] : memref<2x8x8xbf16, #tpu.memory_space<vmem>>, vector<1x8x8xbf16>
    %48 = vector.shape_cast %47 : vector<1x8x8xbf16> to vector<8x8xbf16>
    %cst_44 = arith.constant dense<0.000000e+00> : vector<8x128xf32>
    %49 = tpu.matmul %48, %42, %cst_44 {dimension_numbers = #tpu.dot_dimension_numbers<[1], [0], [0], [1], [0, 0, 1, 1], [], []>} : vector<8x8xbf16>, vector<8x128xbf16>, vector<8x128xf32> -> vector<8x128xf32>
    %50 = arith.truncf %49 : vector<8x128xf32> to vector<8x128xbf16>
    %c1_45 = arith.constant 1 : index
    %c0_46 = arith.constant 0 : index
    %c0_47 = arith.constant 0 : index
    %51 = vector.load %arg7[%c1_45, %c0_46, %c0_47] : memref<3x128x256xbf16, #tpu.memory_space<vmem>>, vector<1x128x256xbf16>
    %52 = vector.shape_cast %51 : vector<1x128x256xbf16> to vector<128x256xbf16>
    %cst_48 = arith.constant dense<0.000000e+00> : vector<8x256xf32>
    %53 = tpu.matmul %42, %52, %cst_48 {dimension_numbers = #tpu.dot_dimension_numbers<[1], [0], [0], [1], [0, 0, 1, 1], [], []>} : vector<8x128xbf16>, vector<128x256xbf16>, vector<8x256xf32> -> vector<8x256xf32>
    %c0_49 = arith.constant 0 : index
    %c0_50 = arith.constant 0 : index
    %c0_51 = arith.constant 0 : index
    %54 = vector.load %arg7[%c0_49, %c0_50, %c0_51] : memref<3x128x256xbf16, #tpu.memory_space<vmem>>, vector<1x128x256xbf16>
    %55 = vector.shape_cast %54 : vector<1x128x256xbf16> to vector<128x256xbf16>
    %cst_52 = arith.constant dense<0.000000e+00> : vector<8x256xf32>
    %56 = tpu.matmul %46, %55, %cst_52 {dimension_numbers = #tpu.dot_dimension_numbers<[1], [0], [0], [1], [0, 0, 1, 1], [], []>} : vector<8x128xbf16>, vector<128x256xbf16>, vector<8x256xf32> -> vector<8x256xf32>
    %57 = arith.addf %53, %56 : vector<8x256xf32>
    %c2_53 = arith.constant 2 : index
    %c0_54 = arith.constant 0 : index
    %c0_55 = arith.constant 0 : index
    %58 = vector.load %arg7[%c2_53, %c0_54, %c0_55] : memref<3x128x256xbf16, #tpu.memory_space<vmem>>, vector<1x128x256xbf16>
    %59 = vector.shape_cast %58 : vector<1x128x256xbf16> to vector<128x256xbf16>
    %cst_56 = arith.constant dense<0.000000e+00> : vector<8x256xf32>
    %60 = tpu.matmul %50, %59, %cst_56 {dimension_numbers = #tpu.dot_dimension_numbers<[1], [0], [0], [1], [0, 0, 1, 1], [], []>} : vector<8x128xbf16>, vector<128x256xbf16>, vector<8x256xf32> -> vector<8x256xf32>
    %61 = arith.addf %57, %60 : vector<8x256xf32>
    %c0_57 = arith.constant 0 : index
    %c0_58 = arith.constant 0 : index
    %62 = vector.load %arg11[%c0_57, %c0_58] : memref<1x256xf32, #tpu.memory_space<vmem>>, vector<1x256xf32>
    %63 = vector.broadcast %62 : vector<1x256xf32> to vector<8x256xf32>
    %64 = arith.addf %61, %63 : vector<8x256xf32>
    %65 = arith.truncf %64 : vector<8x256xf32> to vector<8x256xbf16>
    %c0_59 = arith.constant 0 : index
    %c0_60 = arith.constant 0 : index
    %c0_61 = arith.constant 0 : index
    %66 = vector.load %arg9[%c0_59, %c0_60, %c0_61] : memref<2x4x8xbf16, #tpu.memory_space<vmem>>, vector<1x4x8xbf16>
    %67 = vector.shape_cast %66 : vector<1x4x8xbf16> to vector<4x8xbf16>
    %cst_62 = arith.constant dense<0.000000e+00> : vector<4x256xf32>
    %68 = tpu.matmul %67, %65, %cst_62 {dimension_numbers = #tpu.dot_dimension_numbers<[1], [0], [0], [1], [0, 0, 1, 1], [], []>} : vector<4x8xbf16>, vector<8x256xbf16>, vector<4x256xf32> -> vector<4x256xf32>
    %c1_63 = arith.constant 1 : index
    %c0_64 = arith.constant 0 : index
    %c0_65 = arith.constant 0 : index
    %69 = vector.load %arg9[%c1_63, %c0_64, %c0_65] : memref<2x4x8xbf16, #tpu.memory_space<vmem>>, vector<1x4x8xbf16>
    %70 = vector.shape_cast %69 : vector<1x4x8xbf16> to vector<4x8xbf16>
    %cst_66 = arith.constant dense<0.000000e+00> : vector<4x256xf32>
    %71 = tpu.matmul %70, %65, %cst_66 {dimension_numbers = #tpu.dot_dimension_numbers<[1], [0], [0], [1], [0, 0, 1, 1], [], []>} : vector<4x8xbf16>, vector<8x256xbf16>, vector<4x256xf32> -> vector<4x256xf32>
    %72 = arith.maximumf %68, %71 : vector<4x256xf32>
    %73 = arith.truncf %72 : vector<4x256xf32> to vector<4x256xbf16>
    %c0_67 = arith.constant 0 : index
    %c0_68 = arith.constant 0 : index
    %c0_69 = arith.constant 0 : index
    %74 = vector.load %arg10[%c0_67, %c0_68, %c0_69] : memref<2x256x128xbf16, #tpu.memory_space<vmem>>, vector<1x256x128xbf16>
    %75 = vector.shape_cast %74 : vector<1x256x128xbf16> to vector<256x128xbf16>
    %cst_70 = arith.constant dense<0.000000e+00> : vector<4x128xf32>
    %76 = tpu.matmul %73, %75, %cst_70 {dimension_numbers = #tpu.dot_dimension_numbers<[1], [0], [0], [1], [0, 0, 1, 1], [], []>} : vector<4x256xbf16>, vector<256x128xbf16>, vector<4x128xf32> -> vector<4x128xf32>
    %c1_71 = arith.constant 1 : index
    %c0_72 = arith.constant 0 : index
    %c0_73 = arith.constant 0 : index
    %77 = vector.load %arg10[%c1_71, %c0_72, %c0_73] : memref<2x256x128xbf16, #tpu.memory_space<vmem>>, vector<1x256x128xbf16>
    %78 = vector.shape_cast %77 : vector<1x256x128xbf16> to vector<256x128xbf16>
    %cst_74 = arith.constant dense<0.000000e+00> : vector<4x128xf32>
    %79 = tpu.matmul %73, %78, %cst_74 {dimension_numbers = #tpu.dot_dimension_numbers<[1], [0], [0], [1], [0, 0, 1, 1], [], []>} : vector<4x256xbf16>, vector<256x128xbf16>, vector<4x128xf32> -> vector<4x128xf32>
    %80 = arith.maximumf %76, %79 : vector<4x128xf32>
    %cst_75 = arith.constant 0.000000e+00 : f32
    %81 = vector.broadcast %cst_75 : f32 to vector<4x128xf32>
    %82 = arith.maximumf %80, %81 : vector<4x128xf32>
    %83 = arith.truncf %82 : vector<4x128xf32> to vector<4x128xbf16>
    %c0_76 = arith.constant 0 : index
    %c0_77 = arith.constant 0 : index
    %c0_78 = arith.constant 0 : index
    %84 = vector.load %arg13[%c0_76, %c0_77, %c0_78] : memref<2x4x4xbf16, #tpu.memory_space<vmem>>, vector<1x4x4xbf16>
    %85 = vector.shape_cast %84 : vector<1x4x4xbf16> to vector<4x4xbf16>
    %cst_79 = arith.constant dense<0.000000e+00> : vector<4x128xf32>
    %86 = tpu.matmul %85, %83, %cst_79 {dimension_numbers = #tpu.dot_dimension_numbers<[1], [0], [0], [1], [0, 0, 1, 1], [], []>} : vector<4x4xbf16>, vector<4x128xbf16>, vector<4x128xf32> -> vector<4x128xf32>
    %87 = arith.truncf %86 : vector<4x128xf32> to vector<4x128xbf16>
    %c1_80 = arith.constant 1 : index
    %c0_81 = arith.constant 0 : index
    %c0_82 = arith.constant 0 : index
    %88 = vector.load %arg13[%c1_80, %c0_81, %c0_82] : memref<2x4x4xbf16, #tpu.memory_space<vmem>>, vector<1x4x4xbf16>
    %89 = vector.shape_cast %88 : vector<1x4x4xbf16> to vector<4x4xbf16>
    %cst_83 = arith.constant dense<0.000000e+00> : vector<4x128xf32>
    %90 = tpu.matmul %89, %83, %cst_83 {dimension_numbers = #tpu.dot_dimension_numbers<[1], [0], [0], [1], [0, 0, 1, 1], [], []>} : vector<4x4xbf16>, vector<4x128xbf16>, vector<4x128xf32> -> vector<4x128xf32>
    %91 = arith.truncf %90 : vector<4x128xf32> to vector<4x128xbf16>
    %c1_84 = arith.constant 1 : index
    %c0_85 = arith.constant 0 : index
    %c0_86 = arith.constant 0 : index
    %92 = vector.load %arg12[%c1_84, %c0_85, %c0_86] : memref<3x128x256xbf16, #tpu.memory_space<vmem>>, vector<1x128x256xbf16>
    %93 = vector.shape_cast %92 : vector<1x128x256xbf16> to vector<128x256xbf16>
    %cst_87 = arith.constant dense<0.000000e+00> : vector<4x256xf32>
    %94 = tpu.matmul %83, %93, %cst_87 {dimension_numbers = #tpu.dot_dimension_numbers<[1], [0], [0], [1], [0, 0, 1, 1], [], []>} : vector<4x128xbf16>, vector<128x256xbf16>, vector<4x256xf32> -> vector<4x256xf32>
    %c0_88 = arith.constant 0 : index
    %c0_89 = arith.constant 0 : index
    %c0_90 = arith.constant 0 : index
    %95 = vector.load %arg12[%c0_88, %c0_89, %c0_90] : memref<3x128x256xbf16, #tpu.memory_space<vmem>>, vector<1x128x256xbf16>
    %96 = vector.shape_cast %95 : vector<1x128x256xbf16> to vector<128x256xbf16>
    %cst_91 = arith.constant dense<0.000000e+00> : vector<4x256xf32>
    %97 = tpu.matmul %87, %96, %cst_91 {dimension_numbers = #tpu.dot_dimension_numbers<[1], [0], [0], [1], [0, 0, 1, 1], [], []>} : vector<4x128xbf16>, vector<128x256xbf16>, vector<4x256xf32> -> vector<4x256xf32>
    %98 = arith.addf %94, %97 : vector<4x256xf32>
    %c2_92 = arith.constant 2 : index
    %c0_93 = arith.constant 0 : index
    %c0_94 = arith.constant 0 : index
    %99 = vector.load %arg12[%c2_92, %c0_93, %c0_94] : memref<3x128x256xbf16, #tpu.memory_space<vmem>>, vector<1x128x256xbf16>
    %100 = vector.shape_cast %99 : vector<1x128x256xbf16> to vector<128x256xbf16>
    %cst_95 = arith.constant dense<0.000000e+00> : vector<4x256xf32>
    %101 = tpu.matmul %91, %100, %cst_95 {dimension_numbers = #tpu.dot_dimension_numbers<[1], [0], [0], [1], [0, 0, 1, 1], [], []>} : vector<4x128xbf16>, vector<128x256xbf16>, vector<4x256xf32> -> vector<4x256xf32>
    %102 = arith.addf %98, %101 : vector<4x256xf32>
    %c0_96 = arith.constant 0 : index
    %c0_97 = arith.constant 0 : index
    %103 = vector.load %arg16[%c0_96, %c0_97] : memref<1x256xf32, #tpu.memory_space<vmem>>, vector<1x256xf32>
    %104 = vector.broadcast %103 : vector<1x256xf32> to vector<4x256xf32>
    %105 = arith.addf %102, %104 : vector<4x256xf32>
    %106 = arith.truncf %105 : vector<4x256xf32> to vector<4x256xbf16>
    %c0_98 = arith.constant 0 : index
    %c0_99 = arith.constant 0 : index
    %c0_100 = arith.constant 0 : index
    %107 = vector.load %arg14[%c0_98, %c0_99, %c0_100] : memref<2x2x4xbf16, #tpu.memory_space<vmem>>, vector<1x2x4xbf16>
    %108 = vector.shape_cast %107 : vector<1x2x4xbf16> to vector<2x4xbf16>
    %cst_101 = arith.constant dense<0.000000e+00> : vector<2x256xf32>
    %109 = tpu.matmul %108, %106, %cst_101 {dimension_numbers = #tpu.dot_dimension_numbers<[1], [0], [0], [1], [0, 0, 1, 1], [], []>} : vector<2x4xbf16>, vector<4x256xbf16>, vector<2x256xf32> -> vector<2x256xf32>
    %c1_102 = arith.constant 1 : index
    %c0_103 = arith.constant 0 : index
    %c0_104 = arith.constant 0 : index
    %110 = vector.load %arg14[%c1_102, %c0_103, %c0_104] : memref<2x2x4xbf16, #tpu.memory_space<vmem>>, vector<1x2x4xbf16>
    %111 = vector.shape_cast %110 : vector<1x2x4xbf16> to vector<2x4xbf16>
    %cst_105 = arith.constant dense<0.000000e+00> : vector<2x256xf32>
    %112 = tpu.matmul %111, %106, %cst_105 {dimension_numbers = #tpu.dot_dimension_numbers<[1], [0], [0], [1], [0, 0, 1, 1], [], []>} : vector<2x4xbf16>, vector<4x256xbf16>, vector<2x256xf32> -> vector<2x256xf32>
    %113 = arith.maximumf %109, %112 : vector<2x256xf32>
    %114 = arith.truncf %113 : vector<2x256xf32> to vector<2x256xbf16>
    %c0_106 = arith.constant 0 : index
    %c0_107 = arith.constant 0 : index
    %c0_108 = arith.constant 0 : index
    %115 = vector.load %arg15[%c0_106, %c0_107, %c0_108] : memref<2x256x128xbf16, #tpu.memory_space<vmem>>, vector<1x256x128xbf16>
    %116 = vector.shape_cast %115 : vector<1x256x128xbf16> to vector<256x128xbf16>
    %cst_109 = arith.constant dense<0.000000e+00> : vector<2x128xf32>
    %117 = tpu.matmul %114, %116, %cst_109 {dimension_numbers = #tpu.dot_dimension_numbers<[1], [0], [0], [1], [0, 0, 1, 1], [], []>} : vector<2x256xbf16>, vector<256x128xbf16>, vector<2x128xf32> -> vector<2x128xf32>
    %c1_110 = arith.constant 1 : index
    %c0_111 = arith.constant 0 : index
    %c0_112 = arith.constant 0 : index
    %118 = vector.load %arg15[%c1_110, %c0_111, %c0_112] : memref<2x256x128xbf16, #tpu.memory_space<vmem>>, vector<1x256x128xbf16>
    %119 = vector.shape_cast %118 : vector<1x256x128xbf16> to vector<256x128xbf16>
    %cst_113 = arith.constant dense<0.000000e+00> : vector<2x128xf32>
    %120 = tpu.matmul %114, %119, %cst_113 {dimension_numbers = #tpu.dot_dimension_numbers<[1], [0], [0], [1], [0, 0, 1, 1], [], []>} : vector<2x256xbf16>, vector<256x128xbf16>, vector<2x128xf32> -> vector<2x128xf32>
    %121 = arith.maximumf %117, %120 : vector<2x128xf32>
    %cst_114 = arith.constant 0.000000e+00 : f32
    %122 = vector.broadcast %cst_114 : f32 to vector<2x128xf32>
    %123 = arith.maximumf %121, %122 : vector<2x128xf32>
    %124 = arith.truncf %123 : vector<2x128xf32> to vector<2x128xbf16>
    %c0_115 = arith.constant 0 : index
    %c0_116 = arith.constant 0 : index
    %c0_117 = arith.constant 0 : index
    %125 = vector.load %arg18[%c0_115, %c0_116, %c0_117] : memref<2x2x2xbf16, #tpu.memory_space<vmem>>, vector<1x2x2xbf16>
    %126 = vector.shape_cast %125 : vector<1x2x2xbf16> to vector<2x2xbf16>
    %cst_118 = arith.constant dense<0.000000e+00> : vector<2x128xf32>
    %127 = tpu.matmul %126, %124, %cst_118 {dimension_numbers = #tpu.dot_dimension_numbers<[1], [0], [0], [1], [0, 0, 1, 1], [], []>} : vector<2x2xbf16>, vector<2x128xbf16>, vector<2x128xf32> -> vector<2x128xf32>
    %128 = arith.truncf %127 : vector<2x128xf32> to vector<2x128xbf16>
    %c1_119 = arith.constant 1 : index
    %c0_120 = arith.constant 0 : index
    %c0_121 = arith.constant 0 : index
    %129 = vector.load %arg18[%c1_119, %c0_120, %c0_121] : memref<2x2x2xbf16, #tpu.memory_space<vmem>>, vector<1x2x2xbf16>
    %130 = vector.shape_cast %129 : vector<1x2x2xbf16> to vector<2x2xbf16>
    %cst_122 = arith.constant dense<0.000000e+00> : vector<2x128xf32>
    %131 = tpu.matmul %130, %124, %cst_122 {dimension_numbers = #tpu.dot_dimension_numbers<[1], [0], [0], [1], [0, 0, 1, 1], [], []>} : vector<2x2xbf16>, vector<2x128xbf16>, vector<2x128xf32> -> vector<2x128xf32>
    %132 = arith.truncf %131 : vector<2x128xf32> to vector<2x128xbf16>
    %c1_123 = arith.constant 1 : index
    %c0_124 = arith.constant 0 : index
    %c0_125 = arith.constant 0 : index
    %133 = vector.load %arg17[%c1_123, %c0_124, %c0_125] : memref<3x128x256xbf16, #tpu.memory_space<vmem>>, vector<1x128x256xbf16>
    %134 = vector.shape_cast %133 : vector<1x128x256xbf16> to vector<128x256xbf16>
    %cst_126 = arith.constant dense<0.000000e+00> : vector<2x256xf32>
    %135 = tpu.matmul %124, %134, %cst_126 {dimension_numbers = #tpu.dot_dimension_numbers<[1], [0], [0], [1], [0, 0, 1, 1], [], []>} : vector<2x128xbf16>, vector<128x256xbf16>, vector<2x256xf32> -> vector<2x256xf32>
    %c0_127 = arith.constant 0 : index
    %c0_128 = arith.constant 0 : index
    %c0_129 = arith.constant 0 : index
    %136 = vector.load %arg17[%c0_127, %c0_128, %c0_129] : memref<3x128x256xbf16, #tpu.memory_space<vmem>>, vector<1x128x256xbf16>
    %137 = vector.shape_cast %136 : vector<1x128x256xbf16> to vector<128x256xbf16>
    %cst_130 = arith.constant dense<0.000000e+00> : vector<2x256xf32>
    %138 = tpu.matmul %128, %137, %cst_130 {dimension_numbers = #tpu.dot_dimension_numbers<[1], [0], [0], [1], [0, 0, 1, 1], [], []>} : vector<2x128xbf16>, vector<128x256xbf16>, vector<2x256xf32> -> vector<2x256xf32>
    %139 = arith.addf %135, %138 : vector<2x256xf32>
    %c2_131 = arith.constant 2 : index
    %c0_132 = arith.constant 0 : index
    %c0_133 = arith.constant 0 : index
    %140 = vector.load %arg17[%c2_131, %c0_132, %c0_133] : memref<3x128x256xbf16, #tpu.memory_space<vmem>>, vector<1x128x256xbf16>
    %141 = vector.shape_cast %140 : vector<1x128x256xbf16> to vector<128x256xbf16>
    %cst_134 = arith.constant dense<0.000000e+00> : vector<2x256xf32>
    %142 = tpu.matmul %132, %141, %cst_134 {dimension_numbers = #tpu.dot_dimension_numbers<[1], [0], [0], [1], [0, 0, 1, 1], [], []>} : vector<2x128xbf16>, vector<128x256xbf16>, vector<2x256xf32> -> vector<2x256xf32>
    %143 = arith.addf %139, %142 : vector<2x256xf32>
    %c0_135 = arith.constant 0 : index
    %c0_136 = arith.constant 0 : index
    %144 = vector.load %arg21[%c0_135, %c0_136] : memref<1x256xf32, #tpu.memory_space<vmem>>, vector<1x256xf32>
    %145 = vector.broadcast %144 : vector<1x256xf32> to vector<2x256xf32>
    %146 = arith.addf %143, %145 : vector<2x256xf32>
    %147 = arith.truncf %146 : vector<2x256xf32> to vector<2x256xbf16>
    %c0_137 = arith.constant 0 : index
    %c0_138 = arith.constant 0 : index
    %c0_139 = arith.constant 0 : index
    %148 = vector.load %arg19[%c0_137, %c0_138, %c0_139] : memref<2x1x2xbf16, #tpu.memory_space<vmem>>, vector<1x1x2xbf16>
    %149 = vector.shape_cast %148 : vector<1x1x2xbf16> to vector<1x2xbf16>
    %cst_140 = arith.constant dense<0.000000e+00> : vector<1x256xf32>
    %150 = tpu.matmul %149, %147, %cst_140 {dimension_numbers = #tpu.dot_dimension_numbers<[1], [0], [0], [1], [0, 0, 1, 1], [], []>} : vector<1x2xbf16>, vector<2x256xbf16>, vector<1x256xf32> -> vector<1x256xf32>
    %c1_141 = arith.constant 1 : index
    %c0_142 = arith.constant 0 : index
    %c0_143 = arith.constant 0 : index
    %151 = vector.load %arg19[%c1_141, %c0_142, %c0_143] : memref<2x1x2xbf16, #tpu.memory_space<vmem>>, vector<1x1x2xbf16>
    %152 = vector.shape_cast %151 : vector<1x1x2xbf16> to vector<1x2xbf16>
    %cst_144 = arith.constant dense<0.000000e+00> : vector<1x256xf32>
    %153 = tpu.matmul %152, %147, %cst_144 {dimension_numbers = #tpu.dot_dimension_numbers<[1], [0], [0], [1], [0, 0, 1, 1], [], []>} : vector<1x2xbf16>, vector<2x256xbf16>, vector<1x256xf32> -> vector<1x256xf32>
    %154 = arith.maximumf %150, %153 : vector<1x256xf32>
    %155 = arith.truncf %154 : vector<1x256xf32> to vector<1x256xbf16>
    %c0_145 = arith.constant 0 : index
    %c0_146 = arith.constant 0 : index
    %c0_147 = arith.constant 0 : index
    %156 = vector.load %arg20[%c0_145, %c0_146, %c0_147] : memref<2x256x128xbf16, #tpu.memory_space<vmem>>, vector<1x256x128xbf16>
    %157 = vector.shape_cast %156 : vector<1x256x128xbf16> to vector<256x128xbf16>
    %cst_148 = arith.constant dense<0.000000e+00> : vector<1x128xf32>
    %158 = tpu.matmul %155, %157, %cst_148 {dimension_numbers = #tpu.dot_dimension_numbers<[1], [0], [0], [1], [0, 0, 1, 1], [], []>} : vector<1x256xbf16>, vector<256x128xbf16>, vector<1x128xf32> -> vector<1x128xf32>
    %c1_149 = arith.constant 1 : index
    %c0_150 = arith.constant 0 : index
    %c0_151 = arith.constant 0 : index
    %159 = vector.load %arg20[%c1_149, %c0_150, %c0_151] : memref<2x256x128xbf16, #tpu.memory_space<vmem>>, vector<1x256x128xbf16>
    %160 = vector.shape_cast %159 : vector<1x256x128xbf16> to vector<256x128xbf16>
    %cst_152 = arith.constant dense<0.000000e+00> : vector<1x128xf32>
    %161 = tpu.matmul %155, %160, %cst_152 {dimension_numbers = #tpu.dot_dimension_numbers<[1], [0], [0], [1], [0, 0, 1, 1], [], []>} : vector<1x256xbf16>, vector<256x128xbf16>, vector<1x128xf32> -> vector<1x128xf32>
    %162 = arith.maximumf %158, %161 : vector<1x128xf32>
    %cst_153 = arith.constant 0.000000e+00 : f32
    %163 = vector.broadcast %cst_153 : f32 to vector<1x128xf32>
    %164 = arith.maximumf %162, %163 : vector<1x128xf32>
    %165 = arith.truncf %164 : vector<1x128xf32> to vector<1x128xbf16>
    %c0_154 = arith.constant 0 : index
    %c0_155 = arith.constant 0 : index
    %166 = vector.load %arg22[%c0_154, %c0_155] : memref<128x10xbf16, #tpu.memory_space<vmem>>, vector<128x10xbf16>
    %cst_156 = arith.constant dense<0.000000e+00> : vector<1x10xf32>
    %167 = tpu.matmul %165, %166, %cst_156 {dimension_numbers = #tpu.dot_dimension_numbers<[1], [0], [0], [1], [0, 0, 1, 1], [], []>} : vector<1x128xbf16>, vector<128x10xbf16>, vector<1x10xf32> -> vector<1x10xf32>
    %c0_157 = arith.constant 0 : index
    %c0_158 = arith.constant 0 : index
    %168 = vector.load %arg23[%c0_157, %c0_158] : memref<1x10xf32, #tpu.memory_space<vmem>>, vector<1x10xf32>
    %169 = arith.addf %167, %168 : vector<1x10xf32>
    %c0_159 = arith.constant 0 : index
    %c0_160 = arith.constant 0 : index
    %c0_161 = arith.constant 0 : index
    %170 = vector.load %arg24[%c0_159, %c0_160, %c0_161] : memref<1x1x10xf32, #tpu.memory_space<vmem>>, vector<1x1x10xf32>
    %171 = vector.shape_cast %170 : vector<1x1x10xf32> to vector<1x10xf32>
    %172 = vector.shape_cast %169 : vector<1x10xf32> to vector<1x1x10xf32>
    tpu.vector_store %arg24[%c0_159, %c0_160, %c0_161], %172 {strides = array<i32>} : memref<1x1x10xf32, #tpu.memory_space<vmem>>, vector<1x1x10xf32>,
    return
  }
  func.func @transform_0(%arg0: i32) -> (i32, i32) {
    %c0_i32 = arith.constant 0 : i32
    %c0_i32_0 = arith.constant 0 : i32
    return %arg0, %c0_i32 : i32, i32
  }
  func.func @transform_1(%arg0: i32) -> (i32, i32, i32) {
    %c0_i32 = arith.constant 0 : i32
    %c0_i32_0 = arith.constant 0 : i32
    %c0_i32_1 = arith.constant 0 : i32
    %c0_i32_2 = arith.constant 0 : i32
    return %c0_i32, %c0_i32_0, %c0_i32_1 : i32, i32, i32
  }
  func.func @transform_2(%arg0: i32) -> (i32, i32, i32) {
    %c0_i32 = arith.constant 0 : i32
    %c0_i32_0 = arith.constant 0 : i32
    %c0_i32_1 = arith.constant 0 : i32
    %c0_i32_2 = arith.constant 0 : i32
    return %c0_i32, %c0_i32_0, %c0_i32_1 : i32, i32, i32
  }
  func.func @transform_3(%arg0: i32) -> (i32, i32, i32) {
    %c0_i32 = arith.constant 0 : i32
    %c0_i32_0 = arith.constant 0 : i32
    %c0_i32_1 = arith.constant 0 : i32
    %c0_i32_2 = arith.constant 0 : i32
    return %c0_i32, %c0_i32_0, %c0_i32_1 : i32, i32, i32
  }
  func.func @transform_4(%arg0: i32) -> (i32, i32, i32) {
    %c0_i32 = arith.constant 0 : i32
    %c0_i32_0 = arith.constant 0 : i32
    %c0_i32_1 = arith.constant 0 : i32
    %c0_i32_2 = arith.constant 0 : i32
    return %c0_i32, %c0_i32_0, %c0_i32_1 : i32, i32, i32
  }
  func.func @transform_5(%arg0: i32) -> (i32, i32) {
    %c0_i32 = arith.constant 0 : i32
    %c0_i32_0 = arith.constant 0 : i32
    %c0_i32_1 = arith.constant 0 : i32
    return %c0_i32, %c0_i32_0 : i32, i32
  }
  func.func @transform_6(%arg0: i32) -> (i32, i32, i32) {
    %c0_i32 = arith.constant 0 : i32
    %c0_i32_0 = arith.constant 0 : i32
    %c0_i32_1 = arith.constant 0 : i32
    %c0_i32_2 = arith.constant 0 : i32
    return %c0_i32, %c0_i32_0, %c0_i32_1 : i32, i32, i32
  }
  func.func @transform_7(%arg0: i32) -> (i32, i32, i32) {
    %c0_i32 = arith.constant 0 : i32
    %c0_i32_0 = arith.constant 0 : i32
    %c0_i32_1 = arith.constant 0 : i32
    %c0_i32_2 = arith.constant 0 : i32
    return %c0_i32, %c0_i32_0, %c0_i32_1 : i32, i32, i32
  }
  func.func @transform_8(%arg0: i32) -> (i32, i32, i32) {
    %c0_i32 = arith.constant 0 : i32
    %c0_i32_0 = arith.constant 0 : i32
    %c0_i32_1 = arith.constant 0 : i32
    %c0_i32_2 = arith.constant 0 : i32
    return %c0_i32, %c0_i32_0, %c0_i32_1 : i32, i32, i32
  }
  func.func @transform_9(%arg0: i32) -> (i32, i32, i32) {
    %c0_i32 = arith.constant 0 : i32
    %c0_i32_0 = arith.constant 0 : i32
    %c0_i32_1 = arith.constant 0 : i32
    %c0_i32_2 = arith.constant 0 : i32
    return %c0_i32, %c0_i32_0, %c0_i32_1 : i32, i32, i32
  }
  func.func @transform_10(%arg0: i32) -> (i32, i32) {
    %c0_i32 = arith.constant 0 : i32
    %c0_i32_0 = arith.constant 0 : i32
    %c0_i32_1 = arith.constant 0 : i32
    return %c0_i32, %c0_i32_0 : i32, i32
  }
  func.func @transform_11(%arg0: i32) -> (i32, i32, i32) {
    %c0_i32 = arith.constant 0 : i32
    %c0_i32_0 = arith.constant 0 : i32
    %c0_i32_1 = arith.constant 0 : i32
    %c0_i32_2 = arith.constant 0 : i32
    return %c0_i32, %c0_i32_0, %c0_i32_1 : i32, i32, i32
  }
  func.func @transform_12(%arg0: i32) -> (i32, i32, i32) {
    %c0_i32 = arith.constant 0 : i32
    %c0_i32_0 = arith.constant 0 : i32
    %c0_i32_1 = arith.constant 0 : i32
    %c0_i32_2 = arith.constant 0 : i32
    return %c0_i32, %c0_i32_0, %c0_i32_1 : i32, i32, i32
  }
  func.func @transform_13(%arg0: i32) -> (i32, i32, i32) {
    %c0_i32 = arith.constant 0 : i32
    %c0_i32_0 = arith.constant 0 : i32
    %c0_i32_1 = arith.constant 0 : i32
    %c0_i32_2 = arith.constant 0 : i32
    return %c0_i32, %c0_i32_0, %c0_i32_1 : i32, i32, i32
  }
  func.func @transform_14(%arg0: i32) -> (i32, i32, i32) {
    %c0_i32 = arith.constant 0 : i32
    %c0_i32_0 = arith.constant 0 : i32
    %c0_i32_1 = arith.constant 0 : i32
    %c0_i32_2 = arith.constant 0 : i32
    return %c0_i32, %c0_i32_0, %c0_i32_1 : i32, i32, i32
  }
  func.func @transform_15(%arg0: i32) -> (i32, i32) {
    %c0_i32 = arith.constant 0 : i32
    %c0_i32_0 = arith.constant 0 : i32
    %c0_i32_1 = arith.constant 0 : i32
    return %c0_i32, %c0_i32_0 : i32, i32
  }
  func.func @transform_16(%arg0: i32) -> (i32, i32, i32) {
    %c0_i32 = arith.constant 0 : i32
    %c0_i32_0 = arith.constant 0 : i32
    %c0_i32_1 = arith.constant 0 : i32
    %c0_i32_2 = arith.constant 0 : i32
    return %c0_i32, %c0_i32_0, %c0_i32_1 : i32, i32, i32
  }
  func.func @transform_17(%arg0: i32) -> (i32, i32, i32) {
    %c0_i32 = arith.constant 0 : i32
    %c0_i32_0 = arith.constant 0 : i32
    %c0_i32_1 = arith.constant 0 : i32
    %c0_i32_2 = arith.constant 0 : i32
    return %c0_i32, %c0_i32_0, %c0_i32_1 : i32, i32, i32
  }
  func.func @transform_18(%arg0: i32) -> (i32, i32, i32) {
    %c0_i32 = arith.constant 0 : i32
    %c0_i32_0 = arith.constant 0 : i32
    %c0_i32_1 = arith.constant 0 : i32
    %c0_i32_2 = arith.constant 0 : i32
    return %c0_i32, %c0_i32_0, %c0_i32_1 : i32, i32, i32
  }
  func.func @transform_19(%arg0: i32) -> (i32, i32, i32) {
    %c0_i32 = arith.constant 0 : i32
    %c0_i32_0 = arith.constant 0 : i32
    %c0_i32_1 = arith.constant 0 : i32
    %c0_i32_2 = arith.constant 0 : i32
    return %c0_i32, %c0_i32_0, %c0_i32_1 : i32, i32, i32
  }
  func.func @transform_20(%arg0: i32) -> (i32, i32) {
    %c0_i32 = arith.constant 0 : i32
    %c0_i32_0 = arith.constant 0 : i32
    %c0_i32_1 = arith.constant 0 : i32
    return %c0_i32, %c0_i32_0 : i32, i32
  }
  func.func @transform_21(%arg0: i32) -> (i32, i32) {
    %c0_i32 = arith.constant 0 : i32
    %c0_i32_0 = arith.constant 0 : i32
    %c0_i32_1 = arith.constant 0 : i32
    return %c0_i32, %c0_i32_0 : i32, i32
  }
  func.func @transform_22(%arg0: i32) -> (i32, i32) {
    %c0_i32 = arith.constant 0 : i32
    %c0_i32_0 = arith.constant 0 : i32
    %c0_i32_1 = arith.constant 0 : i32
    return %c0_i32, %c0_i32_0 : i32, i32
  }
  func.func @transform_23(%arg0: i32) -> (i32, i32, i32) {
    %c0_i32 = arith.constant 0 : i32
    %c0_i32_0 = arith.constant 0 : i32
    %c0_i32_1 = arith.constant 0 : i32
    return %arg0, %c0_i32, %c0_i32_0 : i32, i32, i32
  }
}

</mosaic_0001>

<llo_original>
// kernel: cnn_fc_forward.1
$region0: #{cnn_fc_forward.1}
  #allocation0 [shape = 'u32[]', space=smem, size = 0x4, offset = 0x4, fixed_abs, tag = 'smem constant byte address 0x4 - core index']
  #allocation1 [shape = 'u32[144,128]{1,0:T(1,128)}', space=vmem, size = 0x12000, scoped, tag = 'internal scratch']
  %s0 = inlined_call_operand.vmem [shape: f32[32,16], index: 0, kind: input, shape index: {}]
  %s1 = inlined_call_operand.vmem [shape: bf16[3,16,256], index: 1, kind: input, shape index: {}]
  %s2 = inlined_call_operand.hbm [shape: bf16[2,16,16], index: 2, kind: input, shape index: {}]
  %s3 = inlined_call_operand.hbm [shape: bf16[2,8,16], index: 3, kind: input, shape index: {}]
  %s4 = inlined_call_operand.hbm [shape: bf16[2,256,128], index: 4, kind: input, shape index: {}]
  %s5 = inlined_call_operand.vmem [shape: f32[1,256], index: 5, kind: input, shape index: {}]
  %s6 = inlined_call_operand.hbm [shape: bf16[3,128,256], index: 6, kind: input, shape index: {}]
  %s7 = inlined_call_operand.vmem [shape: bf16[2,8,8], index: 7, kind: input, shape index: {}]
  %s8 = inlined_call_operand.vmem [shape: bf16[2,4,8], index: 8, kind: input, shape index: {}]
  %s9 = inlined_call_operand.hbm [shape: bf16[2,256,128], index: 9, kind: input, shape index: {}]
  %s10 = inlined_call_operand.vmem [shape: f32[1,256], index: 10, kind: input, shape index: {}]
  %s11 = inlined_call_operand.hbm [shape: bf16[3,128,256], index: 11, kind: input, shape index: {}]
  %s12 = inlined_call_operand.vmem [shape: bf16[2,4,4], index: 12, kind: input, shape index: {}]
  %s13 = inlined_call_operand.vmem [shape: bf16[2,2,4], index: 13, kind: input, shape index: {}]
  %s14 = inlined_call_operand.hbm [shape: bf16[2,256,128], index: 14, kind: input, shape index: {}]
  %s15 = inlined_call_operand.vmem [shape: f32[1,256], index: 15, kind: input, shape index: {}]
  %s16 = inlined_call_operand.hbm [shape: bf16[3,128,256], index: 16, kind: input, shape index: {}]
  %s17 = inlined_call_operand.vmem [shape: bf16[2,2,2], index: 17, kind: input, shape index: {}]
  %s18 = inlined_call_operand.vmem [shape: bf16[2,1,2], index: 18, kind: input, shape index: {}]
  %s19 = inlined_call_operand.hbm [shape: bf16[2,256,128], index: 19, kind: input, shape index: {}]
  %s20 = inlined_call_operand.vmem [shape: f32[1,256], index: 20, kind: input, shape index: {}]
  %s21 = inlined_call_operand.vmem [shape: bf16[128,10], index: 21, kind: input, shape index: {}]
  %s22 = inlined_call_operand.vmem [shape: f32[1,10], index: 22, kind: input, shape index: {}]
  %s23 = inlined_call_operand.hbm [shape: f32[2,1,10], index: 23, kind: output, shape index: {}]
  %s24 = sld [smem:[#allocation0]]
  $region161: #{cnn_fc_forward.1} parent=0
    _
  %s26 = ssub.s32 1, %s24
  %s27 = scalar_select 0, %s26, %s24
  $region1: #{cnn_fc_forward.1} parent=0
    #allocation2 [shape = 'u8[8192]{0}', space=vmem, size = 0x2000, scoped, tag = 'input window, operand 2, single buffered']
    #allocation3 [shape = 's32[2]{0}', space=sflag, size = 0x8, scoped, tag = 'scoped memory for cnn_fc_forward.1']
    #allocation4 [shape = 's32[2]{0}', space=sflag, size = 0x8, scoped, tag = 'scoped memory for cnn_fc_forward.1']
    #allocation5 [shape = 'u8[4096]{0}', space=vmem, size = 0x1000, scoped, tag = 'input window, operand 3, single buffered']
    #allocation6 [shape = 's32[1]{0}', space=sflag, size = 0x4, scoped, tag = 'scoped memory for cnn_fc_forward.1']
    #allocation7 [shape = 'u8[131072]{0}', space=vmem, size = 0x20000, scoped, tag = 'input window, operand 4, single buffered']
    #allocation8 [shape = 'u8[196608]{0}', space=vmem, size = 0x30000, scoped, tag = 'input window, operand 6, single buffered']
    #allocation9 [shape = 's32[1]{0}', space=sflag, size = 0x4, scoped, tag = 'scoped memory for cnn_fc_forward.1']
    #allocation10 [shape = 'u8[131072]{0}', space=vmem, size = 0x20000, scoped, tag = 'input window, operand 9, single buffered']
    #allocation11 [shape = 'u8[196608]{0}', space=vmem, size = 0x30000, scoped, tag = 'input window, operand 11, single buffered']
    #allocation12 [shape = 's32[1]{0}', space=sflag, size = 0x4, scoped, tag = 'scoped memory for cnn_fc_forward.1']
    #allocation13 [shape = 'u8[131072]{0}', space=vmem, size = 0x20000, scoped, tag = 'input window, operand 14, single buffered']
    #allocation14 [shape = 'u8[196608]{0}', space=vmem, size = 0x30000, scoped, tag = 'input window, operand 16, single buffered']
    #allocation15 [shape = 's32[1]{0}', space=sflag, size = 0x4, scoped, tag = 'scoped memory for cnn_fc_forward.1']
    #allocation16 [shape = 'u8[131072]{0}', space=vmem, size = 0x20000, scoped, tag = 'input window, operand 19, single buffered']
    #allocation17 [shape = 'u8[1024]{0}', space=vmem, size = 0x400, scoped, tag = 'output window, operand 0']
    %28 = vsyncpa [#allocation3], 0
    %29 = vsyncpa [#allocation6], 0
    %30 = vsyncpa [#allocation9], 0
    %31 = vsyncpa [#allocation12], 0
    %32 = vsyncpa [#allocation15], 0
    %33 = vsyncpa [#allocation4], 0
    %s34 = scalar_lea.sflag [#allocation4], 1
    %35 = vsyncpa %s34, 0
    loop: start=0, step=1, limit=4
    $region2: #{cnn_fc_forward.1} parent=1 // loop_pre_header
      _
    $region3: #{cnn_fc_forward.1} parent=1 // loop_header
      %s37 = sphi 0, %s41
      %p38 = scmp.ge.s32.totalorder %s37, 4
      %s47 = sphi 0, %s49
      %s50 = sphi 0, %s47
      %s51 = sphi 0, %s50
      %s67 = sphi 0, %s51
      %s71 = sphi 0, %s71
      %s73 = sphi 0, %s71
      %s74 = sphi 0, %s73
      %s88 = sphi 0, %s74
      %s92 = sphi 0, %s92
      %s94 = sphi 0, %s92
      %s95 = sphi 0, %s94
      %s109 = sphi 0, %s95
      %s113 = sphi 0, %s113
      %s115 = sphi 0, %s113
      %s116 = sphi 0, %s115
      %s130 = sphi 0, %s116
      %s134 = sphi 0, %s134
      %s136 = sphi 0, %s134
      %s137 = sphi 0, %s136
      %s151 = sphi 0, %s137
      %s155 = sphi 0, %s155
      %s157 = sphi 0, %s155
      %s158 = sphi 0, %s157
      %s172 = sphi 0, %s158
      %s176 = sphi 0, %s176
      %s178 = sphi 0, %s176
      %s179 = sphi 0, %s178
      %s193 = sphi 0, %s179
      %s197 = sphi 0, %s197
      %s199 = sphi 0, %s197
      %s200 = sphi 0, %s199
      %s214 = sphi 0, %s200
      %s218 = sphi 0, %s218
      %s220 = sphi 0, %s218
      %s221 = sphi 0, %s220
      %s235 = sphi 0, %s221
      %s239 = sphi 0, %s239
      %s241 = sphi 0, %s239
      %s242 = sphi 0, %s241
      %s256 = sphi 0, %s242
      %s260 = sphi 0, %s260
      %s262 = sphi 0, %s260
      %s263 = sphi 0, %s262
      %s277 = sphi 0, %s263
      %s281 = sphi 0, %s281
      %s283 = sphi 0, %s281
      %s284 = sphi 0, %s283
      %s298 = sphi 0, %s284
      %s302 = sphi 0, %s302
      %s304 = sphi 0, %s302
      %s305 = sphi 0, %s304
      %s319 = sphi 0, %s305
      %s323 = sphi 0, %s323
      %s325 = sphi 0, %s323
      %s326 = sphi 0, %s325
      %s340 = sphi 0, %s326
      %s344 = sphi 0, %s344
      %s346 = sphi 0, %s344
      %s347 = sphi 0, %s346
      %s361 = sphi 0, %s347
      %s365 = sphi 0, %s365
      %s367 = sphi 0, %s365
      %s368 = sphi 0, %s367
      %s382 = sphi 0, %s368
      %s386 = sphi 0, %s386
      %s388 = sphi 0, %s386
      %s389 = sphi 0, %s388
      %s403 = sphi 0, %s389
      %s407 = sphi 0, %s407
      %s409 = sphi 0, %s407
      %s410 = sphi 0, %s409
      %s424 = sphi 0, %s410
      %s428 = sphi 0, %s428
      %s430 = sphi 0, %s428
      %s431 = sphi 0, %s430
      %s445 = sphi 0, %s431
      %s449 = sphi 0, %s449
      %s451 = sphi 0, %s449
      %s452 = sphi 0, %s451
      %s466 = sphi 0, %s452
      %s470 = sphi 0, %s470
      %s472 = sphi 0, %s470
      %s473 = sphi 0, %s472
      %s487 = sphi 0, %s473
      %s491 = sphi 0, %s491
      %s493 = sphi 0, %s491
      %s494 = sphi 0, %s493
      %s508 = sphi 0, %s494
      %s512 = sphi 0, %s512
      %s514 = sphi 0, %s512
      %s515 = sphi 0, %s514
      %s529 = sphi 0, %s515
      %s535 = sphi 0, %s537
      %s538 = sphi 0, %s535
      %s539 = sphi 0, %s538
      %s555 = sphi 0, %s539
    $region4: #{cnn_fc_forward.1} parent=1 // loop_header_branch
      %40 = sbr.rel (%p38) target = $region8
    $region5: #{cnn_fc_forward.1} parent=1 // loop_body
      %s42 = ssub.s32 %s37, 1
      %s43 = ssub.s32 %s37, 2
      %s44 = sadd.s32 %s37, 1
      %s45 = ssub.s32 %s37, %s44
      %p46 = scmp.eq.s32.totalorder %s45, 0
      %s48 = sadd.s32 %s47, 1
      %s49 = scalar_select %p46, %s47, %s48
      %p52 = pneg %p46
      %p53 = scmp.eq.s32.totalorder %s37, 1
      %p54 = por %p52, %p53
      %p55 = scmp.ne.s32.totalorder %s47, %s50
      %p56 = scmp.eq.s32.totalorder %s37, 0
      %p57 = por %p55, %p56
      %p58 = scmp.ne.s32.totalorder %s47, %s50
      %p59 = scmp.eq.s32.totalorder %s42, 1
      %p60 = por %p58, %p59
      %p61 = scmp.ne.s32.totalorder %s50, %s51
      %p62 = scmp.eq.s32.totalorder %s42, 0
      %p63 = por %p61, %p62
      %p64 = scmp.ne.s32.totalorder %s50, %s51
      %p65 = scmp.eq.s32.totalorder %s43, 1
      %p66 = por %p64, %p65
      %p68 = scmp.ne.s32.totalorder %s51, %s67
      %p69 = scmp.eq.s32.totalorder %s43, 0
      %p70 = por %p68, %p69
      %s72 = sadd.s32 %s71, 1
      %p75 = scmp.eq.s32.totalorder %s37, 1
      %p76 = scmp.ne.s32.totalorder %s71, %s73
      %p77 = scmp.eq.s32.totalorder %s37, 0
      %p78 = por %p76, %p77
      %p79 = scmp.ne.s32.totalorder %s71, %s73
      %p80 = scmp.eq.s32.totalorder %s42, 1
      %p81 = por %p79, %p80
      %p82 = scmp.ne.s32.totalorder %s73, %s74
      %p83 = scmp.eq.s32.totalorder %s42, 0
      %p84 = por %p82, %p83
      %p85 = scmp.ne.s32.totalorder %s73, %s74
      %p86 = scmp.eq.s32.totalorder %s43, 1
      %p87 = por %p85, %p86
      %p89 = scmp.ne.s32.totalorder %s74, %s88
      %p90 = scmp.eq.s32.totalorder %s43, 0
      %p91 = por %p89, %p90
      %s93 = sadd.s32 %s92, 1
      %p96 = scmp.eq.s32.totalorder %s37, 1
      %p97 = scmp.ne.s32.totalorder %s92, %s94
      %p98 = scmp.eq.s32.totalorder %s37, 0
      %p99 = por %p97, %p98
      %p100 = scmp.ne.s32.totalorder %s92, %s94
      %p101 = scmp.eq.s32.totalorder %s42, 1
      %p102 = por %p100, %p101
      %p103 = scmp.ne.s32.totalorder %s94, %s95
      %p104 = scmp.eq.s32.totalorder %s42, 0
      %p105 = por %p103, %p104
      %p106 = scmp.ne.s32.totalorder %s94, %s95
      %p107 = scmp.eq.s32.totalorder %s43, 1
      %p108 = por %p106, %p107
      %p110 = scmp.ne.s32.totalorder %s95, %s109
      %p111 = scmp.eq.s32.totalorder %s43, 0
      %p112 = por %p110, %p111
      %s114 = sadd.s32 %s113, 1
      %p117 = scmp.eq.s32.totalorder %s37, 1
      %p118 = scmp.ne.s32.totalorder %s113, %s115
      %p119 = scmp.eq.s32.totalorder %s37, 0
      %p120 = por %p118, %p119
      %p121 = scmp.ne.s32.totalorder %s113, %s115
      %p122 = scmp.eq.s32.totalorder %s42, 1
      %p123 = por %p121, %p122
      %p124 = scmp.ne.s32.totalorder %s115, %s116
      %p125 = scmp.eq.s32.totalorder %s42, 0
      %p126 = por %p124, %p125
      %p127 = scmp.ne.s32.totalorder %s115, %s116
      %p128 = scmp.eq.s32.totalorder %s43, 1
      %p129 = por %p127, %p128
      %p131 = scmp.ne.s32.totalorder %s116, %s130
      %p132 = scmp.eq.s32.totalorder %s43, 0
      %p133 = por %p131, %p132
      %s135 = sadd.s32 %s134, 1
      %p138 = scmp.eq.s32.totalorder %s37, 1
      %p139 = scmp.ne.s32.totalorder %s134, %s136
      %p140 = scmp.eq.s32.totalorder %s37, 0
      %p141 = por %p139, %p140
      %p142 = scmp.ne.s32.totalorder %s134, %s136
      %p143 = scmp.eq.s32.totalorder %s42, 1
      %p144 = por %p142, %p143
      %p145 = scmp.ne.s32.totalorder %s136, %s137
      %p146 = scmp.eq.s32.totalorder %s42, 0
      %p147 = por %p145, %p146
      %p148 = scmp.ne.s32.totalorder %s136, %s137
      %p149 = scmp.eq.s32.totalorder %s43, 1
      %p150 = por %p148, %p149
      %p152 = scmp.ne.s32.totalorder %s137, %s151
      %p153 = scmp.eq.s32.totalorder %s43, 0
      %p154 = por %p152, %p153
      %s156 = sadd.s32 %s155, 1
      %p159 = scmp.eq.s32.totalorder %s37, 1
      %p160 = scmp.ne.s32.totalorder %s155, %s157
      %p161 = scmp.eq.s32.totalorder %s37, 0
      %p162 = por %p160, %p161
      %p163 = scmp.ne.s32.totalorder %s155, %s157
      %p164 = scmp.eq.s32.totalorder %s42, 1
      %p165 = por %p163, %p164
      %p166 = scmp.ne.s32.totalorder %s157, %s158
      %p167 = scmp.eq.s32.totalorder %s42, 0
      %p168 = por %p166, %p167
      %p169 = scmp.ne.s32.totalorder %s157, %s158
      %p170 = scmp.eq.s32.totalorder %s43, 1
      %p171 = por %p169, %p170
      %p173 = scmp.ne.s32.totalorder %s158, %s172
      %p174 = scmp.eq.s32.totalorder %s43, 0
      %p175 = por %p173, %p174
      %s177 = sadd.s32 %s176, 1
      %p180 = scmp.eq.s32.totalorder %s37, 1
      %p181 = scmp.ne.s32.totalorder %s176, %s178
      %p182 = scmp.eq.s32.totalorder %s37, 0
      %p183 = por %p181, %p182
      %p184 = scmp.ne.s32.totalorder %s176, %s178
      %p185 = scmp.eq.s32.totalorder %s42, 1
      %p186 = por %p184, %p185
      %p187 = scmp.ne.s32.totalorder %s178, %s179
      %p188 = scmp.eq.s32.totalorder %s42, 0
      %p189 = por %p187, %p188
      %p190 = scmp.ne.s32.totalorder %s178, %s179
      %p191 = scmp.eq.s32.totalorder %s43, 1
      %p192 = por %p190, %p191
      %p194 = scmp.ne.s32.totalorder %s179, %s193
      %p195 = scmp.eq.s32.totalorder %s43, 0
      %p196 = por %p194, %p195
      %s198 = sadd.s32 %s197, 1
      %p201 = scmp.eq.s32.totalorder %s37, 1
      %p202 = scmp.ne.s32.totalorder %s197, %s199
      %p203 = scmp.eq.s32.totalorder %s37, 0
      %p204 = por %p202, %p203
      %p205 = scmp.ne.s32.totalorder %s197, %s199
      %p206 = scmp.eq.s32.totalorder %s42, 1
      %p207 = por %p205, %p206
      %p208 = scmp.ne.s32.totalorder %s199, %s200
      %p209 = scmp.eq.s32.totalorder %s42, 0
      %p210 = por %p208, %p209
      %p211 = scmp.ne.s32.totalorder %s199, %s200
      %p212 = scmp.eq.s32.totalorder %s43, 1
      %p213 = por %p211, %p212
      %p215 = scmp.ne.s32.totalorder %s200, %s214
      %p216 = scmp.eq.s32.totalorder %s43, 0
      %p217 = por %p215, %p216
      %s219 = sadd.s32 %s218, 1
      %p222 = scmp.eq.s32.totalorder %s37, 1
      %p223 = scmp.ne.s32.totalorder %s218, %s220
      %p224 = scmp.eq.s32.totalorder %s37, 0
      %p225 = por %p223, %p224
      %p226 = scmp.ne.s32.totalorder %s218, %s220
      %p227 = scmp.eq.s32.totalorder %s42, 1
      %p228 = por %p226, %p227
      %p229 = scmp.ne.s32.totalorder %s220, %s221
      %p230 = scmp.eq.s32.totalorder %s42, 0
      %p231 = por %p229, %p230
      %p232 = scmp.ne.s32.totalorder %s220, %s221
      %p233 = scmp.eq.s32.totalorder %s43, 1
      %p234 = por %p232, %p233
      %p236 = scmp.ne.s32.totalorder %s221, %s235
      %p237 = scmp.eq.s32.totalorder %s43, 0
      %p238 = por %p236, %p237
      %s240 = sadd.s32 %s239, 1
      %p243 = scmp.eq.s32.totalorder %s37, 1
      %p244 = scmp.ne.s32.totalorder %s239, %s241
      %p245 = scmp.eq.s32.totalorder %s37, 0
      %p246 = por %p244, %p245
      %p247 = scmp.ne.s32.totalorder %s239, %s241
      %p248 = scmp.eq.s32.totalorder %s42, 1
      %p249 = por %p247, %p248
      %p250 = scmp.ne.s32.totalorder %s241, %s242
      %p251 = scmp.eq.s32.totalorder %s42, 0
      %p252 = por %p250, %p251
      %p253 = scmp.ne.s32.totalorder %s241, %s242
      %p254 = scmp.eq.s32.totalorder %s43, 1
      %p255 = por %p253, %p254
      %p257 = scmp.ne.s32.totalorder %s242, %s256
      %p258 = scmp.eq.s32.totalorder %s43, 0
      %p259 = por %p257, %p258
      %s261 = sadd.s32 %s260, 1
      %p264 = scmp.eq.s32.totalorder %s37, 1
      %p265 = scmp.ne.s32.totalorder %s260, %s262
      %p266 = scmp.eq.s32.totalorder %s37, 0
      %p267 = por %p265, %p266
      %p268 = scmp.ne.s32.totalorder %s260, %s262
      %p269 = scmp.eq.s32.totalorder %s42, 1
      %p270 = por %p268, %p269
      %p271 = scmp.ne.s32.totalorder %s262, %s263
      %p272 = scmp.eq.s32.totalorder %s42, 0
      %p273 = por %p271, %p272
      %p274 = scmp.ne.s32.totalorder %s262, %s263
      %p275 = scmp.eq.s32.totalorder %s43, 1
      %p276 = por %p274, %p275
      %p278 = scmp.ne.s32.totalorder %s263, %s277
      %p279 = scmp.eq.s32.totalorder %s43, 0
      %p280 = por %p278, %p279
      %s282 = sadd.s32 %s281, 1
      %p285 = scmp.eq.s32.totalorder %s37, 1
      %p286 = scmp.ne.s32.totalorder %s281, %s283
      %p287 = scmp.eq.s32.totalorder %s37, 0
      %p288 = por %p286, %p287
      %p289 = scmp.ne.s32.totalorder %s281, %s283
      %p290 = scmp.eq.s32.totalorder %s42, 1
      %p291 = por %p289, %p290
      %p292 = scmp.ne.s32.totalorder %s283, %s284
      %p293 = scmp.eq.s32.totalorder %s42, 0
      %p294 = por %p292, %p293
      %p295 = scmp.ne.s32.totalorder %s283, %s284
      %p296 = scmp.eq.s32.totalorder %s43, 1
      %p297 = por %p295, %p296
      %p299 = scmp.ne.s32.totalorder %s284, %s298
      %p300 = scmp.eq.s32.totalorder %s43, 0
      %p301 = por %p299, %p300
      %s303 = sadd.s32 %s302, 1
      %p306 = scmp.eq.s32.totalorder %s37, 1
      %p307 = scmp.ne.s32.totalorder %s302, %s304
      %p308 = scmp.eq.s32.totalorder %s37, 0
      %p309 = por %p307, %p308
      %p310 = scmp.ne.s32.totalorder %s302, %s304
      %p311 = scmp.eq.s32.totalorder %s42, 1
      %p312 = por %p310, %p311
      %p313 = scmp.ne.s32.totalorder %s304, %s305
      %p314 = scmp.eq.s32.totalorder %s42, 0
      %p315 = por %p313, %p314
      %p316 = scmp.ne.s32.totalorder %s304, %s305
      %p317 = scmp.eq.s32.totalorder %s43, 1
      %p318 = por %p316, %p317
      %p320 = scmp.ne.s32.totalorder %s305, %s319
      %p321 = scmp.eq.s32.totalorder %s43, 0
      %p322 = por %p320, %p321
      %s324 = sadd.s32 %s323, 1
      %p327 = scmp.eq.s32.totalorder %s37, 1
      %p328 = scmp.ne.s32.totalorder %s323, %s325
      %p329 = scmp.eq.s32.totalorder %s37, 0
      %p330 = por %p328, %p329
      %p331 = scmp.ne.s32.totalorder %s323, %s325
      %p332 = scmp.eq.s32.totalorder %s42, 1
      %p333 = por %p331, %p332
      %p334 = scmp.ne.s32.totalorder %s325, %s326
      %p335 = scmp.eq.s32.totalorder %s42, 0
      %p336 = por %p334, %p335
      %p337 = scmp.ne.s32.totalorder %s325, %s326
      %p338 = scmp.eq.s32.totalorder %s43, 1
      %p339 = por %p337, %p338
      %p341 = scmp.ne.s32.totalorder %s326, %s340
      %p342 = scmp.eq.s32.totalorder %s43, 0
      %p343 = por %p341, %p342
      %s345 = sadd.s32 %s344, 1
      %p348 = scmp.eq.s32.totalorder %s37, 1
      %p349 = scmp.ne.s32.totalorder %s344, %s346
      %p350 = scmp.eq.s32.totalorder %s37, 0
      %p351 = por %p349, %p350
      %p352 = scmp.ne.s32.totalorder %s344, %s346
      %p353 = scmp.eq.s32.totalorder %s42, 1
      %p354 = por %p352, %p353
      %p355 = scmp.ne.s32.totalorder %s346, %s347
      %p356 = scmp.eq.s32.totalorder %s42, 0
      %p357 = por %p355, %p356
      %p358 = scmp.ne.s32.totalorder %s346, %s347
      %p359 = scmp.eq.s32.totalorder %s43, 1
      %p360 = por %p358, %p359
      %p362 = scmp.ne.s32.totalorder %s347, %s361
      %p363 = scmp.eq.s32.totalorder %s43, 0
      %p364 = por %p362, %p363
      %s366 = sadd.s32 %s365, 1
      %p369 = scmp.eq.s32.totalorder %s37, 1
      %p370 = scmp.ne.s32.totalorder %s365, %s367
      %p371 = scmp.eq.s32.totalorder %s37, 0
      %p372 = por %p370, %p371
      %p373 = scmp.ne.s32.totalorder %s365, %s367
      %p374 = scmp.eq.s32.totalorder %s42, 1
      %p375 = por %p373, %p374
      %p376 = scmp.ne.s32.totalorder %s367, %s368
      %p377 = scmp.eq.s32.totalorder %s42, 0
      %p378 = por %p376, %p377
      %p379 = scmp.ne.s32.totalorder %s367, %s368
      %p380 = scmp.eq.s32.totalorder %s43, 1
      %p381 = por %p379, %p380
      %p383 = scmp.ne.s32.totalorder %s368, %s382
      %p384 = scmp.eq.s32.totalorder %s43, 0
      %p385 = por %p383, %p384
      %s387 = sadd.s32 %s386, 1
      %p390 = scmp.eq.s32.totalorder %s37, 1
      %p391 = scmp.ne.s32.totalorder %s386, %s388
      %p392 = scmp.eq.s32.totalorder %s37, 0
      %p393 = por %p391, %p392
      %p394 = scmp.ne.s32.totalorder %s386, %s388
      %p395 = scmp.eq.s32.totalorder %s42, 1
      %p396 = por %p394, %p395
      %p397 = scmp.ne.s32.totalorder %s388, %s389
      %p398 = scmp.eq.s32.totalorder %s42, 0
      %p399 = por %p397, %p398
      %p400 = scmp.ne.s32.totalorder %s388, %s389
      %p401 = scmp.eq.s32.totalorder %s43, 1
      %p402 = por %p400, %p401
      %p404 = scmp.ne.s32.totalorder %s389, %s403
      %p405 = scmp.eq.s32.totalorder %s43, 0
      %p406 = por %p404, %p405
      %s408 = sadd.s32 %s407, 1
      %p411 = scmp.eq.s32.totalorder %s37, 1
      %p412 = scmp.ne.s32.totalorder %s407, %s409
      %p413 = scmp.eq.s32.totalorder %s37, 0
      %p414 = por %p412, %p413
      %p415 = scmp.ne.s32.totalorder %s407, %s409
      %p416 = scmp.eq.s32.totalorder %s42, 1
      %p417 = por %p415, %p416
      %p418 = scmp.ne.s32.totalorder %s409, %s410
      %p419 = scmp.eq.s32.totalorder %s42, 0
      %p420 = por %p418, %p419
      %p421 = scmp.ne.s32.totalorder %s409, %s410
      %p422 = scmp.eq.s32.totalorder %s43, 1
      %p423 = por %p421, %p422
      %p425 = scmp.ne.s32.totalorder %s410, %s424
      %p426 = scmp.eq.s32.totalorder %s43, 0
      %p427 = por %p425, %p426
      %s429 = sadd.s32 %s428, 1
      %p432 = scmp.eq.s32.totalorder %s37, 1
      %p433 = scmp.ne.s32.totalorder %s428, %s430
      %p434 = scmp.eq.s32.totalorder %s37, 0
      %p435 = por %p433, %p434
      %p436 = scmp.ne.s32.totalorder %s428, %s430
      %p437 = scmp.eq.s32.totalorder %s42, 1
      %p438 = por %p436, %p437
      %p439 = scmp.ne.s32.totalorder %s430, %s431
      %p440 = scmp.eq.s32.totalorder %s42, 0
      %p441 = por %p439, %p440
      %p442 = scmp.ne.s32.totalorder %s430, %s431
      %p443 = scmp.eq.s32.totalorder %s43, 1
      %p444 = por %p442, %p443
      %p446 = scmp.ne.s32.totalorder %s431, %s445
      %p447 = scmp.eq.s32.totalorder %s43, 0
      %p448 = por %p446, %p447
      %s450 = sadd.s32 %s449, 1
      %p453 = scmp.eq.s32.totalorder %s37, 1
      %p454 = scmp.ne.s32.totalorder %s449, %s451
      %p455 = scmp.eq.s32.totalorder %s37, 0
      %p456 = por %p454, %p455
      %p457 = scmp.ne.s32.totalorder %s449, %s451
      %p458 = scmp.eq.s32.totalorder %s42, 1
      %p459 = por %p457, %p458
      %p460 = scmp.ne.s32.totalorder %s451, %s452
      %p461 = scmp.eq.s32.totalorder %s42, 0
      %p462 = por %p460, %p461
      %p463 = scmp.ne.s32.totalorder %s451, %s452
      %p464 = scmp.eq.s32.totalorder %s43, 1
      %p465 = por %p463, %p464
      %p467 = scmp.ne.s32.totalorder %s452, %s466
      %p468 = scmp.eq.s32.totalorder %s43, 0
      %p469 = por %p467, %p468
      %s471 = sadd.s32 %s470, 1
      %p474 = scmp.eq.s32.totalorder %s37, 1
      %p475 = scmp.ne.s32.totalorder %s470, %s472
      %p476 = scmp.eq.s32.totalorder %s37, 0
      %p477 = por %p475, %p476
      %p478 = scmp.ne.s32.totalorder %s470, %s472
      %p479 = scmp.eq.s32.totalorder %s42, 1
      %p480 = por %p478, %p479
      %p481 = scmp.ne.s32.totalorder %s472, %s473
      %p482 = scmp.eq.s32.totalorder %s42, 0
      %p483 = por %p481, %p482
      %p484 = scmp.ne.s32.totalorder %s472, %s473
      %p485 = scmp.eq.s32.totalorder %s43, 1
      %p486 = por %p484, %p485
      %p488 = scmp.ne.s32.totalorder %s473, %s487
      %p489 = scmp.eq.s32.totalorder %s43, 0
      %p490 = por %p488, %p489
      %s492 = sadd.s32 %s491, 1
      %p495 = scmp.eq.s32.totalorder %s37, 1
      %p496 = scmp.ne.s32.totalorder %s491, %s493
      %p497 = scmp.eq.s32.totalorder %s37, 0
      %p498 = por %p496, %p497
      %p499 = scmp.ne.s32.totalorder %s491, %s493
      %p500 = scmp.eq.s32.totalorder %s42, 1
      %p501 = por %p499, %p500
      %p502 = scmp.ne.s32.totalorder %s493, %s494
      %p503 = scmp.eq.s32.totalorder %s42, 0
      %p504 = por %p502, %p503
      %p505 = scmp.ne.s32.totalorder %s493, %s494
      %p506 = scmp.eq.s32.totalorder %s43, 1
      %p507 = por %p505, %p506
      %p509 = scmp.ne.s32.totalorder %s494, %s508
      %p510 = scmp.eq.s32.totalorder %s43, 0
      %p511 = por %p509, %p510
      %s513 = sadd.s32 %s512, 1
      %p516 = scmp.eq.s32.totalorder %s37, 1
      %p517 = scmp.ne.s32.totalorder %s512, %s514
      %p518 = scmp.eq.s32.totalorder %s37, 0
      %p519 = por %p517, %p518
      %p520 = scmp.ne.s32.totalorder %s512, %s514
      %p521 = scmp.eq.s32.totalorder %s42, 1
      %p522 = por %p520, %p521
      %p523 = scmp.ne.s32.totalorder %s514, %s515
      %p524 = scmp.eq.s32.totalorder %s42, 0
      %p525 = por %p523, %p524
      %p526 = scmp.ne.s32.totalorder %s514, %s515
      %p527 = scmp.eq.s32.totalorder %s43, 1
      %p528 = por %p526, %p527
      %p530 = scmp.ne.s32.totalorder %s515, %s529
      %p531 = scmp.eq.s32.totalorder %s43, 0
      %p532 = por %p530, %p531
      %s533 = ssub.s32 %s37, %s44
      %p534 = scmp.eq.s32.totalorder %s533, 0
      %s536 = sadd.s32 %s535, 1
      %s537 = scalar_select %p534, %s535, %s536
      %p540 = pneg %p534
      %p541 = scmp.eq.s32.totalorder %s37, 1
      %p542 = por %p540, %p541
      %p543 = scmp.ne.s32.totalorder %s535, %s538
      %p544 = scmp.eq.s32.totalorder %s37, 0
      %p545 = por %p543, %p544
      %p546 = scmp.ne.s32.totalorder %s535, %s538
      %p547 = scmp.eq.s32.totalorder %s42, 1
      %p548 = por %p546, %p547
      %p549 = scmp.ne.s32.totalorder %s538, %s539
      %p550 = scmp.eq.s32.totalorder %s42, 0
      %p551 = por %p549, %p550
      %p552 = scmp.ne.s32.totalorder %s538, %s539
      %p553 = scmp.eq.s32.totalorder %s43, 1
      %p554 = por %p552, %p553
      %p556 = scmp.ne.s32.totalorder %s539, %s555
      %p557 = scmp.eq.s32.totalorder %s43, 0
      %p558 = por %p556, %p557
      %p559 = scmp.le.s32.totalorder 1, %s37
      %p560 = scmp.lt.s32.totalorder %s37, 3
      %p561 = pnand %p559, %p560
      %p562 = pneg %p561
      // Predicated region
      $region9: #{cnn_fc_forward.1} parent=5 // pred_check
        _
      $region10: #{cnn_fc_forward.1} parent=5 // pred_check_branch
        %564 = sbr.rel (%p561) target = $region12
      $region11: #{cnn_fc_forward.1} parent=5 // pred_region
        %s565 = ssub.s32 %s37, 1
        // Predicated region
        $region13: #{cnn_fc_forward.1} parent=11 // pred_check
          %p566 = pneg %p84
        $region14: #{cnn_fc_forward.1} parent=11 // pred_check_branch
          %568 = sbr.rel (%p566) target = $region16
        $region15: #{cnn_fc_forward.1} parent=11 // pred_region
          _
        $region16: #{cnn_fc_forward.1} parent=11 // pred_fallthru
          _
        // Predicated region
        $region17: #{cnn_fc_forward.1} parent=11 // pred_check
          %p569 = pneg %p105
        $region18: #{cnn_fc_forward.1} parent=11 // pred_check_branch
          %571 = sbr.rel (%p569) target = $region20
        $region19: #{cnn_fc_forward.1} parent=11 // pred_region
          %s573 = ssub.s32 256, 256
          %574 = vsyncadd [#allocation3], %s573
          %s575 = sshll.u32 [#allocation2], 4
          %s576 = int_to_ptr.vmem [resolvable:$true] %s575
          %581 = dma.hbm_to_vmem [thread:$0]  %s2, 256, %s576, [#allocation3], 64, 64, 4
        $region20: #{cnn_fc_forward.1} parent=11 // pred_fallthru
          _
        // Predicated region
        $region21: #{cnn_fc_forward.1} parent=11 // pred_check
          %p582 = pneg %p126
        $region22: #{cnn_fc_forward.1} parent=11 // pred_check_branch
          %584 = sbr.rel (%p582) target = $region24
        $region23: #{cnn_fc_forward.1} parent=11 // pred_region
          %s586 = ssub.s32 128, 128
          %587 = vsyncadd [#allocation6], %s586
          %s588 = sshll.u32 [#allocation5], 4
          %s589 = int_to_ptr.vmem [resolvable:$true] %s588
          %594 = dma.hbm_to_vmem [thread:$0]  %s3, 128, %s589, [#allocation6], 64, 64, 4
        $region24: #{cnn_fc_forward.1} parent=11 // pred_fallthru
          _
        // Predicated region
        $region25: #{cnn_fc_forward.1} parent=11 // pred_check
          %p595 = pneg %p147
        $region26: #{cnn_fc_forward.1} parent=11 // pred_check_branch
          %597 = sbr.rel (%p595) target = $region28
        $region27: #{cnn_fc_forward.1} parent=11 // pred_region
          %s599 = ssub.s32 4096, 4096
          %600 = vsyncadd [#allocation6], %s599
          %s601 = sshll.u32 [#allocation7], 4
          %s602 = int_to_ptr.vmem [resolvable:$true] %s601
          %607 = dma.hbm_to_vmem [thread:$0]  %s4, 4096, %s602, [#allocation6], 64, 64, 4
        $region28: #{cnn_fc_forward.1} parent=11 // pred_fallthru
          _
        // Predicated region
        $region29: #{cnn_fc_forward.1} parent=11 // pred_check
          %p608 = pneg %p168
        $region30: #{cnn_fc_forward.1} parent=11 // pred_check_branch
          %610 = sbr.rel (%p608) target = $region32
        $region31: #{cnn_fc_forward.1} parent=11 // pred_region
          _
        $region32: #{cnn_fc_forward.1} parent=11 // pred_fallthru
          _
        // Predicated region
        $region33: #{cnn_fc_forward.1} parent=11 // pred_check
          %p611 = pneg %p189
        $region34: #{cnn_fc_forward.1} parent=11 // pred_check_branch
          %613 = sbr.rel (%p611) target = $region36
        $region35: #{cnn_fc_forward.1} parent=11 // pred_region
          %s615 = ssub.s32 6144, 6144
          %616 = vsyncadd [#allocation9], %s615
          %s617 = sshll.u32 [#allocation8], 4
          %s618 = int_to_ptr.vmem [resolvable:$true] %s617
          %623 = dma.hbm_to_vmem [thread:$0]  %s6, 6144, %s618, [#allocation9], 128, 128, 8
        $region36: #{cnn_fc_forward.1} parent=11 // pred_fallthru
          _
        // Predicated region
        $region37: #{cnn_fc_forward.1} parent=11 // pred_check
          %p624 = pneg %p210
        $region38: #{cnn_fc_forward.1} parent=11 // pred_check_branch
          %626 = sbr.rel (%p624) target = $region40
        $region39: #{cnn_fc_forward.1} parent=11 // pred_region
          _
        $region40: #{cnn_fc_forward.1} parent=11 // pred_fallthru
          _
        // Predicated region
        $region41: #{cnn_fc_forward.1} parent=11 // pred_check
          %p627 = pneg %p231
        $region42: #{cnn_fc_forward.1} parent=11 // pred_check_branch
          %629 = sbr.rel (%p627) target = $region44
        $region43: #{cnn_fc_forward.1} parent=11 // pred_region
          _
        $region44: #{cnn_fc_forward.1} parent=11 // pred_fallthru
          _
        // Predicated region
        $region45: #{cnn_fc_forward.1} parent=11 // pred_check
          %p630 = pneg %p252
        $region46: #{cnn_fc_forward.1} parent=11 // pred_check_branch
          %632 = sbr.rel (%p630) target = $region48
        $region47: #{cnn_fc_forward.1} parent=11 // pred_region
          %s634 = ssub.s32 4096, 4096
          %635 = vsyncadd [#allocation9], %s634
          %s636 = sshll.u32 [#allocation10], 4
          %s637 = int_to_ptr.vmem [resolvable:$true] %s636
          %642 = dma.hbm_to_vmem [thread:$0]  %s9, 4096, %s637, [#allocation9], 64, 64, 4
        $region48: #{cnn_fc_forward.1} parent=11 // pred_fallthru
          _
        // Predicated region
        $region49: #{cnn_fc_forward.1} parent=11 // pred_check
          %p643 = pneg %p273
        $region50: #{cnn_fc_forward.1} parent=11 // pred_check_branch
          %645 = sbr.rel (%p643) target = $region52
        $region51: #{cnn_fc_forward.1} parent=11 // pred_region
          _
        $region52: #{cnn_fc_forward.1} parent=11 // pred_fallthru
          _
        // Predicated region
        $region53: #{cnn_fc_forward.1} parent=11 // pred_check
          %p646 = pneg %p294
        $region54: #{cnn_fc_forward.1} parent=11 // pred_check_branch
          %648 = sbr.rel (%p646) target = $region56
        $region55: #{cnn_fc_forward.1} parent=11 // pred_region
          %s650 = ssub.s32 6144, 6144
          %651 = vsyncadd [#allocation12], %s650
          %s652 = sshll.u32 [#allocation11], 4
          %s653 = int_to_ptr.vmem [resolvable:$true] %s652
          %658 = dma.hbm_to_vmem [thread:$0]  %s11, 6144, %s653, [#allocation12], 128, 128, 8
        $region56: #{cnn_fc_forward.1} parent=11 // pred_fallthru
          _
        // Predicated region
        $region57: #{cnn_fc_forward.1} parent=11 // pred_check
          %p659 = pneg %p315
        $region58: #{cnn_fc_forward.1} parent=11 // pred_check_branch
          %661 = sbr.rel (%p659) target = $region60
        $region59: #{cnn_fc_forward.1} parent=11 // pred_region
          _
        $region60: #{cnn_fc_forward.1} parent=11 // pred_fallthru
          _
        // Predicated region
        $region61: #{cnn_fc_forward.1} parent=11 // pred_check
          %p662 = pneg %p336
        $region62: #{cnn_fc_forward.1} parent=11 // pred_check_branch
          %664 = sbr.rel (%p662) target = $region64
        $region63: #{cnn_fc_forward.1} parent=11 // pred_region
          _
        $region64: #{cnn_fc_forward.1} parent=11 // pred_fallthru
          _
        // Predicated region
        $region65: #{cnn_fc_forward.1} parent=11 // pred_check
          %p665 = pneg %p357
        $region66: #{cnn_fc_forward.1} parent=11 // pred_check_branch
          %667 = sbr.rel (%p665) target = $region68
        $region67: #{cnn_fc_forward.1} parent=11 // pred_region
          %s669 = ssub.s32 4096, 4096
          %670 = vsyncadd [#allocation12], %s669
          %s671 = sshll.u32 [#allocation13], 4
          %s672 = int_to_ptr.vmem [resolvable:$true] %s671
          %677 = dma.hbm_to_vmem [thread:$0]  %s14, 4096, %s672, [#allocation12], 64, 64, 4
        $region68: #{cnn_fc_forward.1} parent=11 // pred_fallthru
          _
        // Predicated region
        $region69: #{cnn_fc_forward.1} parent=11 // pred_check
          %p678 = pneg %p378
        $region70: #{cnn_fc_forward.1} parent=11 // pred_check_branch
          %680 = sbr.rel (%p678) target = $region72
        $region71: #{cnn_fc_forward.1} parent=11 // pred_region
          _
        $region72: #{cnn_fc_forward.1} parent=11 // pred_fallthru
          _
        // Predicated region
        $region73: #{cnn_fc_forward.1} parent=11 // pred_check
          %p681 = pneg %p399
        $region74: #{cnn_fc_forward.1} parent=11 // pred_check_branch
          %683 = sbr.rel (%p681) target = $region76
        $region75: #{cnn_fc_forward.1} parent=11 // pred_region
          %s685 = ssub.s32 6144, 6144
          %686 = vsyncadd [#allocation15], %s685
          %s687 = sshll.u32 [#allocation14], 4
          %s688 = int_to_ptr.vmem [resolvable:$true] %s687
          %693 = dma.hbm_to_vmem [thread:$0]  %s16, 6144, %s688, [#allocation15], 128, 128, 8
        $region76: #{cnn_fc_forward.1} parent=11 // pred_fallthru
          _
        // Predicated region
        $region77: #{cnn_fc_forward.1} parent=11 // pred_check
          %p694 = pneg %p420
        $region78: #{cnn_fc_forward.1} parent=11 // pred_check_branch
          %696 = sbr.rel (%p694) target = $region80
        $region79: #{cnn_fc_forward.1} parent=11 // pred_region
          _
        $region80: #{cnn_fc_forward.1} parent=11 // pred_fallthru
          _
        // Predicated region
        $region81: #{cnn_fc_forward.1} parent=11 // pred_check
          %p697 = pneg %p441
        $region82: #{cnn_fc_forward.1} parent=11 // pred_check_branch
          %699 = sbr.rel (%p697) target = $region84
        $region83: #{cnn_fc_forward.1} parent=11 // pred_region
          _
        $region84: #{cnn_fc_forward.1} parent=11 // pred_fallthru
          _
        // Predicated region
        $region85: #{cnn_fc_forward.1} parent=11 // pred_check
          %p700 = pneg %p462
        $region86: #{cnn_fc_forward.1} parent=11 // pred_check_branch
          %702 = sbr.rel (%p700) target = $region88
        $region87: #{cnn_fc_forward.1} parent=11 // pred_region
          %s704 = ssub.s32 4096, 4096
          %705 = vsyncadd [#allocation15], %s704
          %s706 = sshll.u32 [#allocation16], 4
          %s707 = int_to_ptr.vmem [resolvable:$true] %s706
          %712 = dma.hbm_to_vmem [thread:$0]  %s19, 4096, %s707, [#allocation15], 64, 64, 4
        $region88: #{cnn_fc_forward.1} parent=11 // pred_fallthru
          _
        // Predicated region
        $region89: #{cnn_fc_forward.1} parent=11 // pred_check
          %p713 = pneg %p483
        $region90: #{cnn_fc_forward.1} parent=11 // pred_check_branch
          %715 = sbr.rel (%p713) target = $region92
        $region91: #{cnn_fc_forward.1} parent=11 // pred_region
          _
        $region92: #{cnn_fc_forward.1} parent=11 // pred_fallthru
          _
        // Predicated region
        $region93: #{cnn_fc_forward.1} parent=11 // pred_check
          %p716 = pneg %p504
        $region94: #{cnn_fc_forward.1} parent=11 // pred_check_branch
          %718 = sbr.rel (%p716) target = $region96
        $region95: #{cnn_fc_forward.1} parent=11 // pred_region
          _
        $region96: #{cnn_fc_forward.1} parent=11 // pred_fallthru
          _
        // Predicated region
        $region97: #{cnn_fc_forward.1} parent=11 // pred_check
          %p719 = pneg %p525
        $region98: #{cnn_fc_forward.1} parent=11 // pred_check_branch
          %721 = sbr.rel (%p719) target = $region100
        $region99: #{cnn_fc_forward.1} parent=11 // pred_region
          _
        $region100: #{cnn_fc_forward.1} parent=11 // pred_fallthru
          _
      $region12: #{cnn_fc_forward.1} parent=5 // pred_fallthru
        _
      %p722 = scmp.lt.s32.totalorder %s37, 2
      // Predicated region
      $region101: #{cnn_fc_forward.1} parent=5 // pred_check
        %p723 = pneg %p722
      $region102: #{cnn_fc_forward.1} parent=5 // pred_check_branch
        %725 = sbr.rel (%p723) target = $region104
      $region103: #{cnn_fc_forward.1} parent=5 // pred_region
        // Predicated region
        $region105: #{cnn_fc_forward.1} parent=103 // pred_check
          %p726 = pneg %p57
        $region106: #{cnn_fc_forward.1} parent=103 // pred_check_branch
          %728 = sbr.rel (%p726) target = $region108
        $region107: #{cnn_fc_forward.1} parent=103 // pred_region
          %s729 = smul.u32 2, %s37
          %p730 = scmp.lt.s32.totalorder %s729, 3
          %s731 = scalar_select %p730, %s729, 3
          %s732 = smul.addr %s731, 8
          %s733 = scalar_lea.vmem %s0, %s732
          %s734 = smul.u32 2, %s37
        $region108: #{cnn_fc_forward.1} parent=103 // pred_fallthru
          _
      $region104: #{cnn_fc_forward.1} parent=5 // pred_fallthru
        _
      %p735 = scmp.le.s32.totalorder 1, %s37
      %p736 = scmp.lt.s32.totalorder %s37, 3
      %p737 = pnand %p735, %p736
      %p738 = pneg %p737
      // Predicated region
      $region109: #{cnn_fc_forward.1} parent=5 // pred_check
        _
      $region110: #{cnn_fc_forward.1} parent=5 // pred_check_branch
        %740 = sbr.rel (%p737) target = $region112
      $region111: #{cnn_fc_forward.1} parent=5 // pred_region
        %s741 = ssub.s32 %s37, 1
        // Predicated region
        $region113: #{cnn_fc_forward.1} parent=111 // pred_check
          %p742 = pneg %p105
        $region114: #{cnn_fc_forward.1} parent=111 // pred_check_branch
          %744 = sbr.rel (%p742) target = $region116
        $region115: #{cnn_fc_forward.1} parent=111 // pred_region
          %745 = dma.done [#allocation3], 256
        $region116: #{cnn_fc_forward.1} parent=111 // pred_fallthru
          _
        // Predicated region
        $region117: #{cnn_fc_forward.1} parent=111 // pred_check
          %p746 = pneg %p126
        $region118: #{cnn_fc_forward.1} parent=111 // pred_check_branch
          %748 = sbr.rel (%p746) target = $region120
        $region119: #{cnn_fc_forward.1} parent=111 // pred_region
          %749 = dma.done [#allocation6], 128
        $region120: #{cnn_fc_forward.1} parent=111 // pred_fallthru
          _
        // Predicated region
        $region121: #{cnn_fc_forward.1} parent=111 // pred_check
          %p750 = pneg %p147
        $region122: #{cnn_fc_forward.1} parent=111 // pred_check_branch
          %752 = sbr.rel (%p750) target = $region124
        $region123: #{cnn_fc_forward.1} parent=111 // pred_region
          %753 = dma.done [#allocation6], 4096
        $region124: #{cnn_fc_forward.1} parent=111 // pred_fallthru
          _
        // Predicated region
        $region125: #{cnn_fc_forward.1} parent=111 // pred_check
          %p754 = pneg %p189
        $region126: #{cnn_fc_forward.1} parent=111 // pred_check_branch
          %756 = sbr.rel (%p754) target = $region128
        $region127: #{cnn_fc_forward.1} parent=111 // pred_region
          %757 = dma.done [#allocation9], 6144
        $region128: #{cnn_fc_forward.1} parent=111 // pred_fallthru
          _
        // Predicated region
        $region129: #{cnn_fc_forward.1} parent=111 // pred_check
          %p758 = pneg %p252
        $region130: #{cnn_fc_forward.1} parent=111 // pred_check_branch
          %760 = sbr.rel (%p758) target = $region132
        $region131: #{cnn_fc_forward.1} parent=111 // pred_region
          %761 = dma.done [#allocation9], 4096
        $region132: #{cnn_fc_forward.1} parent=111 // pred_fallthru
          _
        // Predicated region
        $region133: #{cnn_fc_forward.1} parent=111 // pred_check
          %p762 = pneg %p294
        $region134: #{cnn_fc_forward.1} parent=111 // pred_check_branch
          %764 = sbr.rel (%p762) target = $region136
        $region135: #{cnn_fc_forward.1} parent=111 // pred_region
          %765 = dma.done [#allocation12], 6144
        $region136: #{cnn_fc_forward.1} parent=111 // pred_fallthru
          _
        // Predicated region
        $region137: #{cnn_fc_forward.1} parent=111 // pred_check
          %p766 = pneg %p357
        $region138: #{cnn_fc_forward.1} parent=111 // pred_check_branch
          %768 = sbr.rel (%p766) target = $region140
        $region139: #{cnn_fc_forward.1} parent=111 // pred_region
          %769 = dma.done [#allocation12], 4096
        $region140: #{cnn_fc_forward.1} parent=111 // pred_fallthru
          _
        // Predicated region
        $region141: #{cnn_fc_forward.1} parent=111 // pred_check
          %p770 = pneg %p399
        $region142: #{cnn_fc_forward.1} parent=111 // pred_check_branch
          %772 = sbr.rel (%p770) target = $region144
        $region143: #{cnn_fc_forward.1} parent=111 // pred_region
          %773 = dma.done [#allocation15], 6144
        $region144: #{cnn_fc_forward.1} parent=111 // pred_fallthru
          _
        // Predicated region
        $region145: #{cnn_fc_forward.1} parent=111 // pred_check
          %p774 = pneg %p462
        $region146: #{cnn_fc_forward.1} parent=111 // pred_check_branch
          %776 = sbr.rel (%p774) target = $region148
        $region147: #{cnn_fc_forward.1} parent=111 // pred_region
          %777 = dma.done [#allocation15], 4096
        $region148: #{cnn_fc_forward.1} parent=111 // pred_fallthru
          _
        %s778 = smul.u32 2, %s42
        %p779 = scmp.lt.s32.totalorder %s778, 3
        %s780 = scalar_select %p779, %s778, 3
        %s781 = smul.addr %s780, 8
        %s782 = scalar_lea.vmem %s0, %s781
        %p783 = pneg %p63
        %p784 = pneg %p60
        %p785 = pneg %p84
        %p786 = pneg %p81
        %p787 = pneg %p105
        %p788 = pneg %p102
        %p789 = pneg %p126
        %p790 = pneg %p123
        %p791 = pneg %p147
        %p792 = pneg %p144
        %p793 = pneg %p168
        %p794 = pneg %p165
        %p795 = pneg %p189
        %p796 = pneg %p186
        %p797 = pneg %p210
        %p798 = pneg %p207
        %p799 = pneg %p231
        %p800 = pneg %p228
        %p801 = pneg %p252
        %p802 = pneg %p249
        %p803 = pneg %p273
        %p804 = pneg %p270
        %p805 = pneg %p294
        %p806 = pneg %p291
        %p807 = pneg %p315
        %p808 = pneg %p312
        %p809 = pneg %p336
        %p810 = pneg %p333
        %p811 = pneg %p357
        %p812 = pneg %p354
        %p813 = pneg %p378
        %p814 = pneg %p375
        %p815 = pneg %p399
        %p816 = pneg %p396
        %p817 = pneg %p420
        %p818 = pneg %p417
        %p819 = pneg %p441
        %p820 = pneg %p438
        %p821 = pneg %p462
        %p822 = pneg %p459
        %p823 = pneg %p483
        %p824 = pneg %p480
        %p825 = pneg %p504
        %p826 = pneg %p501
        %p827 = pneg %p525
        %p828 = pneg %p522
        %p829 = pneg %p551
        %p830 = pneg %p548
        %s831 = sand.u32 %s538, 1
        %s832 = scalar_lea.sflag [#allocation4], %s831
        %s833 = sand.u32 %s538, 1
        %s834 = scalar_lea.vmem [#allocation17], %s833
        %s835 = smul.u32 2, %s42
        %p836 = scmp.lt.s32.totalorder %s835, 3
        %s837 = scalar_select %p836, %s835, 3
        %s838 = smul.addr %s837, 8
        %s839 = scalar_lea.vmem %s0, %s838
        %s840 = smul.u32 2, %s42
        %v842 = vld [vmem:[%s839] sm:$0xff]
        %v843 = vld [vmem:[%s839 + $0x8] sm:$0xff]
        %v844 = vpack.c.bf16 %v843, %v842
        %v845 = vld [vmem:[#allocation2] sm:$0xf]
        %v846 = vld [vmem:[#allocation2 + $0x4] sm:$0xf]
        %v849 = vunpack.c.l.b16 %v845
        %v850 = vunpack.c.l.b16 %v846
        %v851 = vpack.c.b16 %v850, %v849
        %vm852 = vcmask 130048
        %v854 = vsel %vm852, %v851, 0
        %856 = vmatprep.subr.bf16.mxu0 0
        %857 = vmatpush1.bf16.msra.mxu0 %v844
        %858 = vmatprep.subr.bf16.mxu0 0
        %859 = vmatpush1.bf16.msra.mxu0 0
        %860 = vmatprep.subr.bf16.mxu0 0
        %861 = vmatpush1.bf16.msra.mxu0 0
        %862 = vmatprep.subr.bf16.mxu0 0
        %863 = vmatpush1.bf16.msra.mxu0 0
        %864 = vmatprep.subr.bf16.mxu0 0
        %865 = vmatpush1.bf16.msra.mxu0 0
        %866 = vmatprep.subr.bf16.mxu0 0
        %867 = vmatpush1.bf16.msra.mxu0 0
        %868 = vmatprep.subr.bf16.mxu0 0
        %869 = vmatpush1.bf16.msra.mxu0 0
        %870 = vmatprep.subr.bf16.mxu0 0
        %871 = vmatpush1.bf16.msra.mxu0 0
        %872 = vmatprep.subr.bf16.mxu0 0
        %873 = vmatpush1.bf16.msra.mxu0 0
        %874 = vmatprep.subr.bf16.mxu0 0
        %875 = vmatpush1.bf16.msra.mxu0 0
        %876 = vmatprep.subr.bf16.mxu0 0
        %877 = vmatpush1.bf16.msra.mxu0 0
        %878 = vmatprep.subr.bf16.mxu0 0
        %879 = vmatpush1.bf16.msra.mxu0 0
        %880 = vmatprep.subr.bf16.mxu0 0
        %881 = vmatpush1.bf16.msra.mxu0 0
        %882 = vmatprep.subr.bf16.mxu0 0
        %883 = vmatpush1.bf16.msra.mxu0 0
        %884 = vmatprep.subr.bf16.mxu0 0
        %885 = vmatpush1.bf16.msra.mxu0 0
        %886 = vmatprep.subr.bf16.mxu0 0
        %887 = vmatpush1.bf16.msra.mxu0 0
        %888 = vmatprep.mubr.bf16.mxu0 0
        %889 = vmatmul.mubr.bf16.gmra.mrb[0].mxu0 %v854
        %v890 = vpop.f32.mrb[0].mxu0
        %v891 = vadd.f32 0.0, %v890
        %v892 = vpop.f32.mrb[0].mxu0
        %v893 = vpop.f32.mrb[0].mxu0
        %v894 = vadd.f32 0.0, %v893
        %v895 = vpop.f32.mrb[0].mxu0
        %896 = vdwg.mxu0
        %v897 = vpack.c.bf16 %v894, %v891
        %s898 = scalar_lea.vmem [#allocation2], 8
        %v899 = vld [vmem:[%s898] sm:$0xf]
        %v900 = vld [vmem:[%s898 + $0x4] sm:$0xf]
        %v903 = vunpack.c.l.b16 %v899
        %v904 = vunpack.c.l.b16 %v900
        %v905 = vpack.c.b16 %v904, %v903
        %v907 = vsel %vm852, %v905, 0
        %909 = vmatprep.subr.bf16.mxu0 0
        %910 = vmatpush1.bf16.msra.mxu0 %v844
        %911 = vmatprep.subr.bf16.mxu0 0
        %912 = vmatpush1.bf16.msra.mxu0 0
        %913 = vmatprep.subr.bf16.mxu0 0
        %914 = vmatpush1.bf16.msra.mxu0 0
        %915 = vmatprep.subr.bf16.mxu0 0
        %916 = vmatpush1.bf16.msra.mxu0 0
        %917 = vmatprep.subr.bf16.mxu0 0
        %918 = vmatpush1.bf16.msra.mxu0 0
        %919 = vmatprep.subr.bf16.mxu0 0
        %920 = vmatpush1.bf16.msra.mxu0 0
        %921 = vmatprep.subr.bf16.mxu0 0
        %922 = vmatpush1.bf16.msra.mxu0 0
        %923 = vmatprep.subr.bf16.mxu0 0
        %924 = vmatpush1.bf16.msra.mxu0 0
        %925 = vmatprep.subr.bf16.mxu0 0
        %926 = vmatpush1.bf16.msra.mxu0 0
        %927 = vmatprep.subr.bf16.mxu0 0
        %928 = vmatpush1.bf16.msra.mxu0 0
        %929 = vmatprep.subr.bf16.mxu0 0
        %930 = vmatpush1.bf16.msra.mxu0 0
        %931 = vmatprep.subr.bf16.mxu0 0
        %932 = vmatpush1.bf16.msra.mxu0 0
        %933 = vmatprep.subr.bf16.mxu0 0
        %934 = vmatpush1.bf16.msra.mxu0 0
        %935 = vmatprep.subr.bf16.mxu0 0
        %936 = vmatpush1.bf16.msra.mxu0 0
        %937 = vmatprep.subr.bf16.mxu0 0
        %938 = vmatpush1.bf16.msra.mxu0 0
        %939 = vmatprep.subr.bf16.mxu0 0
        %940 = vmatpush1.bf16.msra.mxu0 0
        %941 = vmatprep.mubr.bf16.mxu0 0
        %942 = vmatmul.mubr.bf16.gmra.mrb[0].mxu0 %v907
        %v943 = vpop.f32.mrb[0].mxu0
        %v944 = vadd.f32 0.0, %v943
        %v945 = vpop.f32.mrb[0].mxu0
        %v946 = vpop.f32.mrb[0].mxu0
        %v947 = vadd.f32 0.0, %v946
        %v948 = vpop.f32.mrb[0].mxu0
        %949 = vdwg.mxu0
        %v950 = vpack.c.bf16 %v947, %v944
        %s951 = scalar_lea.vmem %s1, 16
        %v952 = vld [vmem:[%s951] sm:$0xff]
        %v953 = vld [vmem:[%s951 + $0x8] sm:$0xff]
        %v954 = vld [vmem:[%s1] sm:$0xff]
        %v955 = vld [vmem:[%s1 + $0x8] sm:$0xff]
        %v958 = vunpack.c.l.b16 %v954
        %v959 = vunpack.c.h.b16 %v954
        %v960 = vunpack.c.l.b16 %v955
        %v961 = vunpack.c.h.b16 %v955
        %v962 = vpack.c.b16 %v960, %v958
        %v963 = vpack.c.b16 %v961, %v959
        %v967 = vsel %vm852, %v897, 0
        %969 = vmatprep.subr.bf16.mxu0 %v963
        %970 = vmatpush1.bf16.msra.mxu0 %v962
        %971 = vmatprep.subr.bf16.mxu0 0
        %972 = vmatpush1.bf16.msra.mxu0 0
        %973 = vmatprep.subr.bf16.mxu0 0
        %974 = vmatpush1.bf16.msra.mxu0 0
        %975 = vmatprep.subr.bf16.mxu0 0
        %976 = vmatpush1.bf16.msra.mxu0 0
        %977 = vmatprep.subr.bf16.mxu0 0
        %978 = vmatpush1.bf16.msra.mxu0 0
        %979 = vmatprep.subr.bf16.mxu0 0
        %980 = vmatpush1.bf16.msra.mxu0 0
        %981 = vmatprep.subr.bf16.mxu0 0
        %982 = vmatpush1.bf16.msra.mxu0 0
        %983 = vmatprep.subr.bf16.mxu0 0
        %984 = vmatpush1.bf16.msra.mxu0 0
        %985 = vmatprep.subr.bf16.mxu0 0
        %986 = vmatpush1.bf16.msra.mxu0 0
        %987 = vmatprep.subr.bf16.mxu0 0
        %988 = vmatpush1.bf16.msra.mxu0 0
        %989 = vmatprep.subr.bf16.mxu0 0
        %990 = vmatpush1.bf16.msra.mxu0 0
        %991 = vmatprep.subr.bf16.mxu0 0
        %992 = vmatpush1.bf16.msra.mxu0 0
        %993 = vmatprep.subr.bf16.mxu0 0
        %994 = vmatpush1.bf16.msra.mxu0 0
        %995 = vmatprep.subr.bf16.mxu0 0
        %996 = vmatpush1.bf16.msra.mxu0 0
        %997 = vmatprep.subr.bf16.mxu0 0
        %998 = vmatpush1.bf16.msra.mxu0 0
        %999 = vmatprep.subr.bf16.mxu0 0
        %1000 = vmatpush1.bf16.msra.mxu0 0
        %1001 = vmatprep.mubr.bf16.mxu0 0
        %1002 = vmatmul.mubr.bf16.gmra.mrb[0].mxu0 %v967
        %v1003 = vpop.f32.mrb[0].mxu0
        %v1004 = vadd.f32 0.0, %v1003
        %v1005 = vpop.f32.mrb[0].mxu0
        %v1006 = vadd.f32 0.0, %v1005
        %v1007 = vpop.f32.mrb[0].mxu0
        %v1008 = vadd.f32 0.0, %v1007
        %v1009 = vpop.f32.mrb[0].mxu0
        %v1010 = vadd.f32 0.0, %v1009
        %1011 = vdwg.mxu0
        %v1014 = vunpack.c.l.b16 %v952
        %v1015 = vunpack.c.h.b16 %v952
        %v1016 = vunpack.c.l.b16 %v953
        %v1017 = vunpack.c.h.b16 %v953
        %v1018 = vpack.c.b16 %v1016, %v1014
        %v1019 = vpack.c.b16 %v1017, %v1015
        %v1023 = vsel %vm852, %v844, 0
        %1025 = vmatprep.subr.bf16.mxu0 %v1019
        %1026 = vmatpush1.bf16.msra.mxu0 %v1018
        %1027 = vmatprep.subr.bf16.mxu0 0
        %1028 = vmatpush1.bf16.msra.mxu0 0
        %1029 = vmatprep.subr.bf16.mxu0 0
        %1030 = vmatpush1.bf16.msra.mxu0 0
        %1031 = vmatprep.subr.bf16.mxu0 0
        %1032 = vmatpush1.bf16.msra.mxu0 0
        %1033 = vmatprep.subr.bf16.mxu0 0
        %1034 = vmatpush1.bf16.msra.mxu0 0
        %1035 = vmatprep.subr.bf16.mxu0 0
        %1036 = vmatpush1.bf16.msra.mxu0 0
        %1037 = vmatprep.subr.bf16.mxu0 0
        %1038 = vmatpush1.bf16.msra.mxu0 0
        %1039 = vmatprep.subr.bf16.mxu0 0
        %1040 = vmatpush1.bf16.msra.mxu0 0
        %1041 = vmatprep.subr.bf16.mxu0 0
        %1042 = vmatpush1.bf16.msra.mxu0 0
        %1043 = vmatprep.subr.bf16.mxu0 0
        %1044 = vmatpush1.bf16.msra.mxu0 0
        %1045 = vmatprep.subr.bf16.mxu0 0
        %1046 = vmatpush1.bf16.msra.mxu0 0
        %1047 = vmatprep.subr.bf16.mxu0 0
        %1048 = vmatpush1.bf16.msra.mxu0 0
        %1049 = vmatprep.subr.bf16.mxu0 0
        %1050 = vmatpush1.bf16.msra.mxu0 0
        %1051 = vmatprep.subr.bf16.mxu0 0
        %1052 = vmatpush1.bf16.msra.mxu0 0
        %1053 = vmatprep.subr.bf16.mxu0 0
        %1054 = vmatpush1.bf16.msra.mxu0 0
        %1055 = vmatprep.subr.bf16.mxu0 0
        %1056 = vmatpush1.bf16.msra.mxu0 0
        %1057 = vmatprep.mubr.bf16.mxu0 0
        %1058 = vmatmul.mubr.bf16.gmra.mrb[0].mxu0 %v1023
        %v1059 = vpop.f32.mrb[0].mxu0
        %v1060 = vadd.f32 %v1004, %v1059
        %v1061 = vpop.f32.mrb[0].mxu0
        %v1062 = vadd.f32 %v1006, %v1061
        %v1063 = vpop.f32.mrb[0].mxu0
        %v1064 = vadd.f32 %v1008, %v1063
        %v1065 = vpop.f32.mrb[0].mxu0
        %v1066 = vadd.f32 %v1010, %v1065
        %1067 = vdwg.mxu0
        %s1068 = scalar_lea.vmem %s1, 32
        %v1069 = vld [vmem:[%s1068] sm:$0xff]
        %v1070 = vld [vmem:[%s1068 + $0x8] sm:$0xff]
        %v1073 = vunpack.c.l.b16 %v1069
        %v1074 = vunpack.c.h.b16 %v1069
        %v1075 = vunpack.c.l.b16 %v1070
        %v1076 = vunpack.c.h.b16 %v1070
        %v1077 = vpack.c.b16 %v1075, %v1073
        %v1078 = vpack.c.b16 %v1076, %v1074
        %v1082 = vsel %vm852, %v950, 0
        %1084 = vmatprep.subr.bf16.mxu0 %v1078
        %1085 = vmatpush1.bf16.msra.mxu0 %v1077
        %1086 = vmatprep.subr.bf16.mxu0 0
        %1087 = vmatpush1.bf16.msra.mxu0 0
        %1088 = vmatprep.subr.bf16.mxu0 0
        %1089 = vmatpush1.bf16.msra.mxu0 0
        %1090 = vmatprep.subr.bf16.mxu0 0
        %1091 = vmatpush1.bf16.msra.mxu0 0
        %1092 = vmatprep.subr.bf16.mxu0 0
        %1093 = vmatpush1.bf16.msra.mxu0 0
        %1094 = vmatprep.subr.bf16.mxu0 0
        %1095 = vmatpush1.bf16.msra.mxu0 0
        %1096 = vmatprep.subr.bf16.mxu0 0
        %1097 = vmatpush1.bf16.msra.mxu0 0
        %1098 = vmatprep.subr.bf16.mxu0 0
        %1099 = vmatpush1.bf16.msra.mxu0 0
        %1100 = vmatprep.subr.bf16.mxu0 0
        %1101 = vmatpush1.bf16.msra.mxu0 0
        %1102 = vmatprep.subr.bf16.mxu0 0
        %1103 = vmatpush1.bf16.msra.mxu0 0
        %1104 = vmatprep.subr.bf16.mxu0 0
        %1105 = vmatpush1.bf16.msra.mxu0 0
        %1106 = vmatprep.subr.bf16.mxu0 0
        %1107 = vmatpush1.bf16.msra.mxu0 0
        %1108 = vmatprep.subr.bf16.mxu0 0
        %1109 = vmatpush1.bf16.msra.mxu0 0
        %1110 = vmatprep.subr.bf16.mxu0 0
        %1111 = vmatpush1.bf16.msra.mxu0 0
        %1112 = vmatprep.subr.bf16.mxu0 0
        %1113 = vmatpush1.bf16.msra.mxu0 0
        %1114 = vmatprep.subr.bf16.mxu0 0
        %1115 = vmatpush1.bf16.msra.mxu0 0
        %1116 = vmatprep.mubr.bf16.mxu0 0
        %1117 = vmatmul.mubr.bf16.gmra.mrb[0].mxu0 %v1082
        %v1118 = vpop.f32.mrb[0].mxu0
        %v1119 = vadd.f32 0.0, %v1118
        %v1120 = vpop.f32.mrb[0].mxu0
        %v1121 = vadd.f32 0.0, %v1120
        %v1122 = vpop.f32.mrb[0].mxu0
        %v1123 = vadd.f32 0.0, %v1122
        %v1124 = vpop.f32.mrb[0].mxu0
        %v1125 = vadd.f32 0.0, %v1124
        %1126 = vdwg.mxu0
        %v1127 = vadd.f32 %v1060, %v1119
        %v1128 = vadd.f32 %v1062, %v1121
        %v1129 = vadd.f32 %v1064, %v1123
        %v1130 = vadd.f32 %v1066, %v1125
        %v1131 = vld [vmem:[%s5] sm:$0x3]
        %v1133 = vlaneseq
        %v1134 = vshrl.u32 %v1133, 7
        %v1135 = vsub.s32 0, %v1134
        %v1136 = vrot.slane %v1131, %v1135
        %v1137 = vlaneseq
        %v1138 = vshrl.u32 %v1137, 7
        %v1139 = vsub.s32 1, %v1138
        %v1140 = vrot.slane %v1131, %v1139
        %v1143 = vadd.f32 %v1127, %v1136
        %v1144 = vadd.f32 %v1128, %v1140
        %v1145 = vadd.f32 %v1129, %v1136
        %v1146 = vadd.f32 %v1130, %v1140
        %v1147 = vpack.c.bf16 %v1145, %v1143
        %v1148 = vpack.c.bf16 %v1146, %v1144
        %v1149 = vld [vmem:[#allocation5] sm:$0xf]
        %v1151 = vsel %vm852, %v1149, 0
        %1153 = vmatprep.subr.bf16.mxu0 %v1148
        %1154 = vmatpush1.bf16.msra.mxu0 %v1147
        %1155 = vmatprep.subr.bf16.mxu0 0
        %1156 = vmatpush1.bf16.msra.mxu0 0
        %1157 = vmatprep.subr.bf16.mxu0 0
        %1158 = vmatpush1.bf16.msra.mxu0 0
        %1159 = vmatprep.subr.bf16.mxu0 0
        %1160 = vmatpush1.bf16.msra.mxu0 0
        %1161 = vmatprep.subr.bf16.mxu0 0
        %1162 = vmatpush1.bf16.msra.mxu0 0
        %1163 = vmatprep.subr.bf16.mxu0 0
        %1164 = vmatpush1.bf16.msra.mxu0 0
        %1165 = vmatprep.subr.bf16.mxu0 0
        %1166 = vmatpush1.bf16.msra.mxu0 0
        %1167 = vmatprep.subr.bf16.mxu0 0
        %1168 = vmatpush1.bf16.msra.mxu0 0
        %1169 = vmatprep.subr.bf16.mxu0 0
        %1170 = vmatpush1.bf16.msra.mxu0 0
        %1171 = vmatprep.subr.bf16.mxu0 0
        %1172 = vmatpush1.bf16.msra.mxu0 0
        %1173 = vmatprep.subr.bf16.mxu0 0
        %1174 = vmatpush1.bf16.msra.mxu0 0
        %1175 = vmatprep.subr.bf16.mxu0 0
        %1176 = vmatpush1.bf16.msra.mxu0 0
        %1177 = vmatprep.subr.bf16.mxu0 0
        %1178 = vmatpush1.bf16.msra.mxu0 0
        %1179 = vmatprep.subr.bf16.mxu0 0
        %1180 = vmatpush1.bf16.msra.mxu0 0
        %1181 = vmatprep.subr.bf16.mxu0 0
        %1182 = vmatpush1.bf16.msra.mxu0 0
        %1183 = vmatprep.subr.bf16.mxu0 0
        %1184 = vmatpush1.bf16.msra.mxu0 0
        %1185 = vmatprep.mubr.bf16.mxu0 0
        %1186 = vmatmul.mubr.bf16.gmra.mrb[0].mxu0 %v1151
        %v1187 = vpop.f32.mrb[0].mxu0
        %v1188 = vadd.f32 0.0, %v1187
        %v1189 = vpop.f32.mrb[0].mxu0
        %v1190 = vadd.f32 0.0, %v1189
        %v1191 = vpop.f32.mrb[0].mxu0
        %v1192 = vpop.f32.mrb[0].mxu0
        %1193 = vdwg.mxu0
        %s1194 = scalar_lea.vmem [#allocation5], 4
        %v1195 = vld [vmem:[%s1194] sm:$0xf]
        %v1197 = vsel %vm852, %v1195, 0
        %1199 = vmatprep.subr.bf16.mxu0 %v1148
        %1200 = vmatpush1.bf16.msra.mxu0 %v1147
        %1201 = vmatprep.subr.bf16.mxu0 0
        %1202 = vmatpush1.bf16.msra.mxu0 0
        %1203 = vmatprep.subr.bf16.mxu0 0
        %1204 = vmatpush1.bf16.msra.mxu0 0
        %1205 = vmatprep.subr.bf16.mxu0 0
        %1206 = vmatpush1.bf16.msra.mxu0 0
        %1207 = vmatprep.subr.bf16.mxu0 0
        %1208 = vmatpush1.bf16.msra.mxu0 0
        %1209 = vmatprep.subr.bf16.mxu0 0
        %1210 = vmatpush1.bf16.msra.mxu0 0
        %1211 = vmatprep.subr.bf16.mxu0 0
        %1212 = vmatpush1.bf16.msra.mxu0 0
        %1213 = vmatprep.subr.bf16.mxu0 0
        %1214 = vmatpush1.bf16.msra.mxu0 0
        %1215 = vmatprep.subr.bf16.mxu0 0
        %1216 = vmatpush1.bf16.msra.mxu0 0
        %1217 = vmatprep.subr.bf16.mxu0 0
        %1218 = vmatpush1.bf16.msra.mxu0 0
        %1219 = vmatprep.subr.bf16.mxu0 0
        %1220 = vmatpush1.bf16.msra.mxu0 0
        %1221 = vmatprep.subr.bf16.mxu0 0
        %1222 = vmatpush1.bf16.msra.mxu0 0
        %1223 = vmatprep.subr.bf16.mxu0 0
        %1224 = vmatpush1.bf16.msra.mxu0 0
        %1225 = vmatprep.subr.bf16.mxu0 0
        %1226 = vmatpush1.bf16.msra.mxu0 0
        %1227 = vmatprep.subr.bf16.mxu0 0
        %1228 = vmatpush1.bf16.msra.mxu0 0
        %1229 = vmatprep.subr.bf16.mxu0 0
        %1230 = vmatpush1.bf16.msra.mxu0 0
        %1231 = vmatprep.mubr.bf16.mxu0 0
        %1232 = vmatmul.mubr.bf16.gmra.mrb[0].mxu0 %v1197
        %v1233 = vpop.f32.mrb[0].mxu0
        %v1234 = vadd.f32 0.0, %v1233
        %v1235 = vpop.f32.mrb[0].mxu0
        %v1236 = vadd.f32 0.0, %v1235
        %v1237 = vpop.f32.mrb[0].mxu0
        %v1238 = vpop.f32.mrb[0].mxu0
        %1239 = vdwg.mxu0
        %v1240 = vmax.f32 %v1188, %v1234
        %v1241 = vmax.f32 %v1190, %v1236
        %v1242 = vpack.c.bf16 %v1240, %v1240
        %v1243 = vpack.c.bf16 %v1241, %v1241
        %v1244 = vld [vmem:[#allocation7] sm:$0xf]
        %v1245 = vld [vmem:[#allocation7 + $0x4] sm:$0xf]
        %v1246 = vld [vmem:[#allocation7 + $0x8] sm:$0xf]
        %v1247 = vld [vmem:[#allocation7 + $0xc] sm:$0xf]
        %v1248 = vld [vmem:[#allocation7 + $0x10] sm:$0xf]
        %v1249 = vld [vmem:[#allocation7 + $0x14] sm:$0xf]
        %v1250 = vld [vmem:[#allocation7 + $0x18] sm:$0xf]
        %v1251 = vld [vmem:[#allocation7 + $0x1c] sm:$0xf]
        %v1252 = vld [vmem:[#allocation7 + $0x20] sm:$0xf]
        %v1253 = vld [vmem:[#allocation7 + $0x24] sm:$0xf]
        %v1254 = vld [vmem:[#allocation7 + $0x28] sm:$0xf]
        %v1255 = vld [vmem:[#allocation7 + $0x2c] sm:$0xf]
        %v1256 = vld [vmem:[#allocation7 + $0x30] sm:$0xf]
        %v1257 = vld [vmem:[#allocation7 + $0x34] sm:$0xf]
        %v1258 = vld [vmem:[#allocation7 + $0x38] sm:$0xf]
        %v1259 = vld [vmem:[#allocation7 + $0x3c] sm:$0xf]
        %v1260 = vld [vmem:[#allocation7 + $0x40] sm:$0xf]
        %v1261 = vld [vmem:[#allocation7 + $0x44] sm:$0xf]
        %v1262 = vld [vmem:[#allocation7 + $0x48] sm:$0xf]
        %v1263 = vld [vmem:[#allocation7 + $0x4c] sm:$0xf]
        %v1264 = vld [vmem:[#allocation7 + $0x50] sm:$0xf]
        %v1265 = vld [vmem:[#allocation7 + $0x54] sm:$0xf]
        %v1266 = vld [vmem:[#allocation7 + $0x58] sm:$0xf]
        %v1267 = vld [vmem:[#allocation7 + $0x5c] sm:$0xf]
        %v1268 = vld [vmem:[#allocation7 + $0x60] sm:$0xf]
        %v1269 = vld [vmem:[#allocation7 + $0x64] sm:$0xf]
        %v1270 = vld [vmem:[#allocation7 + $0x68] sm:$0xf]
        %v1271 = vld [vmem:[#allocation7 + $0x6c] sm:$0xf]
        %v1272 = vld [vmem:[#allocation7 + $0x70] sm:$0xf]
        %v1273 = vld [vmem:[#allocation7 + $0x74] sm:$0xf]
        %v1274 = vld [vmem:[#allocation7 + $0x78] sm:$0xf]
        %v1275 = vld [vmem:[#allocation7 + $0x7c] sm:$0xf]
        %v1308 = vunpack.c.l.b16 %v1244
        %v1309 = vunpack.c.l.b16 %v1245
        %v1310 = vunpack.c.l.b16 %v1246
        %v1311 = vunpack.c.l.b16 %v1247
        %v1312 = vunpack.c.l.b16 %v1248
        %v1313 = vunpack.c.l.b16 %v1249
        %v1314 = vunpack.c.l.b16 %v1250
        %v1315 = vunpack.c.l.b16 %v1251
        %v1316 = vunpack.c.l.b16 %v1252
        %v1317 = vunpack.c.l.b16 %v1253
        %v1318 = vunpack.c.l.b16 %v1254
        %v1319 = vunpack.c.l.b16 %v1255
        %v1320 = vunpack.c.l.b16 %v1256
        %v1321 = vunpack.c.l.b16 %v1257
        %v1322 = vunpack.c.l.b16 %v1258
        %v1323 = vunpack.c.l.b16 %v1259
        %v1324 = vunpack.c.l.b16 %v1260
        %v1325 = vunpack.c.l.b16 %v1261
        %v1326 = vunpack.c.l.b16 %v1262
        %v1327 = vunpack.c.l.b16 %v1263
        %v1328 = vunpack.c.l.b16 %v1264
        %v1329 = vunpack.c.l.b16 %v1265
        %v1330 = vunpack.c.l.b16 %v1266
        %v1331 = vunpack.c.l.b16 %v1267
        %v1332 = vunpack.c.l.b16 %v1268
        %v1333 = vunpack.c.l.b16 %v1269
        %v1334 = vunpack.c.l.b16 %v1270
        %v1335 = vunpack.c.l.b16 %v1271
        %v1336 = vunpack.c.l.b16 %v1272
        %v1337 = vunpack.c.l.b16 %v1273
        %v1338 = vunpack.c.l.b16 %v1274
        %v1339 = vunpack.c.l.b16 %v1275
        %v1340 = vpack.c.b16 %v1309, %v1308
        %v1341 = vpack.c.b16 %v1311, %v1310
        %v1342 = vpack.c.b16 %v1313, %v1312
        %v1343 = vpack.c.b16 %v1315, %v1314
        %v1344 = vpack.c.b16 %v1317, %v1316
        %v1345 = vpack.c.b16 %v1319, %v1318
        %v1346 = vpack.c.b16 %v1321, %v1320
        %v1347 = vpack.c.b16 %v1323, %v1322
        %v1348 = vpack.c.b16 %v1325, %v1324
        %v1349 = vpack.c.b16 %v1327, %v1326
        %v1350 = vpack.c.b16 %v1329, %v1328
        %v1351 = vpack.c.b16 %v1331, %v1330
        %v1352 = vpack.c.b16 %v1333, %v1332
        %v1353 = vpack.c.b16 %v1335, %v1334
        %v1354 = vpack.c.b16 %v1337, %v1336
        %v1355 = vpack.c.b16 %v1339, %v1338
        %1372 = vmatprep.subr.bf16.mxu0 0
        %1373 = vmatpush1.bf16.msra.mxu0 %v1340
        %1374 = vmatprep.subr.bf16.mxu0 0
        %1375 = vmatpush1.bf16.msra.mxu0 %v1341
        %1376 = vmatprep.subr.bf16.mxu0 0
        %1377 = vmatpush1.bf16.msra.mxu0 %v1342
        %1378 = vmatprep.subr.bf16.mxu0 0
        %1379 = vmatpush1.bf16.msra.mxu0 %v1343
        %1380 = vmatprep.subr.bf16.mxu0 0
        %1381 = vmatpush1.bf16.msra.mxu0 %v1344
        %1382 = vmatprep.subr.bf16.mxu0 0
        %1383 = vmatpush1.bf16.msra.mxu0 %v1345
        %1384 = vmatprep.subr.bf16.mxu0 0
        %1385 = vmatpush1.bf16.msra.mxu0 %v1346
        %1386 = vmatprep.subr.bf16.mxu0 0
        %1387 = vmatpush1.bf16.msra.mxu0 %v1347
        %1388 = vmatprep.subr.bf16.mxu0 0
        %1389 = vmatpush1.bf16.msra.mxu0 %v1348
        %1390 = vmatprep.subr.bf16.mxu0 0
        %1391 = vmatpush1.bf16.msra.mxu0 %v1349
        %1392 = vmatprep.subr.bf16.mxu0 0
        %1393 = vmatpush1.bf16.msra.mxu0 %v1350
        %1394 = vmatprep.subr.bf16.mxu0 0
        %1395 = vmatpush1.bf16.msra.mxu0 %v1351
        %1396 = vmatprep.subr.bf16.mxu0 0
        %1397 = vmatpush1.bf16.msra.mxu0 %v1352
        %1398 = vmatprep.subr.bf16.mxu0 0
        %1399 = vmatpush1.bf16.msra.mxu0 %v1353
        %1400 = vmatprep.subr.bf16.mxu0 0
        %1401 = vmatpush1.bf16.msra.mxu0 %v1354
        %1402 = vmatprep.subr.bf16.mxu0 0
        %1403 = vmatpush1.bf16.msra.mxu0 %v1355
        %1404 = vmatprep.mubr.bf16.mxu0 %v1243
        %1405 = vmatmul.mubr.bf16.gmra.mrb[0].mxu0 %v1242
        %v1406 = vpop.f32.mrb[0].mxu0
        %v1407 = vadd.f32 0.0, %v1406
        %v1408 = vpop.f32.mrb[0].mxu0
        %v1409 = vpop.f32.mrb[0].mxu0
        %v1410 = vpop.f32.mrb[0].mxu0
        %1411 = vdwg.mxu0
        %s1412 = scalar_lea.vmem [#allocation7], 128
        %v1413 = vld [vmem:[%s1412] sm:$0xf]
        %v1414 = vld [vmem:[%s1412 + $0x4] sm:$0xf]
        %v1415 = vld [vmem:[%s1412 + $0x8] sm:$0xf]
        %v1416 = vld [vmem:[%s1412 + $0xc] sm:$0xf]
        %v1417 = vld [vmem:[%s1412 + $0x10] sm:$0xf]
        %v1418 = vld [vmem:[%s1412 + $0x14] sm:$0xf]
        %v1419 = vld [vmem:[%s1412 + $0x18] sm:$0xf]
        %v1420 = vld [vmem:[%s1412 + $0x1c] sm:$0xf]
        %v1421 = vld [vmem:[%s1412 + $0x20] sm:$0xf]
        %v1422 = vld [vmem:[%s1412 + $0x24] sm:$0xf]
        %v1423 = vld [vmem:[%s1412 + $0x28] sm:$0xf]
        %v1424 = vld [vmem:[%s1412 + $0x2c] sm:$0xf]
        %v1425 = vld [vmem:[%s1412 + $0x30] sm:$0xf]
        %v1426 = vld [vmem:[%s1412 + $0x34] sm:$0xf]
        %v1427 = vld [vmem:[%s1412 + $0x38] sm:$0xf]
        %v1428 = vld [vmem:[%s1412 + $0x3c] sm:$0xf]
        %v1429 = vld [vmem:[%s1412 + $0x40] sm:$0xf]
        %v1430 = vld [vmem:[%s1412 + $0x44] sm:$0xf]
        %v1431 = vld [vmem:[%s1412 + $0x48] sm:$0xf]
        %v1432 = vld [vmem:[%s1412 + $0x4c] sm:$0xf]
        %v1433 = vld [vmem:[%s1412 + $0x50] sm:$0xf]
        %v1434 = vld [vmem:[%s1412 + $0x54] sm:$0xf]
        %v1435 = vld [vmem:[%s1412 + $0x58] sm:$0xf]
        %v1436 = vld [vmem:[%s1412 + $0x5c] sm:$0xf]
        %v1437 = vld [vmem:[%s1412 + $0x60] sm:$0xf]
        %v1438 = vld [vmem:[%s1412 + $0x64] sm:$0xf]
        %v1439 = vld [vmem:[%s1412 + $0x68] sm:$0xf]
        %v1440 = vld [vmem:[%s1412 + $0x6c] sm:$0xf]
        %v1441 = vld [vmem:[%s1412 + $0x70] sm:$0xf]
        %v1442 = vld [vmem:[%s1412 + $0x74] sm:$0xf]
        %v1443 = vld [vmem:[%s1412 + $0x78] sm:$0xf]
        %v1444 = vld [vmem:[%s1412 + $0x7c] sm:$0xf]
        %v1477 = vunpack.c.l.b16 %v1413
        %v1478 = vunpack.c.l.b16 %v1414
        %v1479 = vunpack.c.l.b16 %v1415
        %v1480 = vunpack.c.l.b16 %v1416
        %v1481 = vunpack.c.l.b16 %v1417
        %v1482 = vunpack.c.l.b16 %v1418
        %v1483 = vunpack.c.l.b16 %v1419
        %v1484 = vunpack.c.l.b16 %v1420
        %v1485 = vunpack.c.l.b16 %v1421
        %v1486 = vunpack.c.l.b16 %v1422
        %v1487 = vunpack.c.l.b16 %v1423
        %v1488 = vunpack.c.l.b16 %v1424
        %v1489 = vunpack.c.l.b16 %v1425
        %v1490 = vunpack.c.l.b16 %v1426
        %v1491 = vunpack.c.l.b16 %v1427
        %v1492 = vunpack.c.l.b16 %v1428
        %v1493 = vunpack.c.l.b16 %v1429
        %v1494 = vunpack.c.l.b16 %v1430
        %v1495 = vunpack.c.l.b16 %v1431
        %v1496 = vunpack.c.l.b16 %v1432
        %v1497 = vunpack.c.l.b16 %v1433
        %v1498 = vunpack.c.l.b16 %v1434
        %v1499 = vunpack.c.l.b16 %v1435
        %v1500 = vunpack.c.l.b16 %v1436
        %v1501 = vunpack.c.l.b16 %v1437
        %v1502 = vunpack.c.l.b16 %v1438
        %v1503 = vunpack.c.l.b16 %v1439
        %v1504 = vunpack.c.l.b16 %v1440
        %v1505 = vunpack.c.l.b16 %v1441
        %v1506 = vunpack.c.l.b16 %v1442
        %v1507 = vunpack.c.l.b16 %v1443
        %v1508 = vunpack.c.l.b16 %v1444
        %v1509 = vpack.c.b16 %v1478, %v1477
        %v1510 = vpack.c.b16 %v1480, %v1479
        %v1511 = vpack.c.b16 %v1482, %v1481
        %v1512 = vpack.c.b16 %v1484, %v1483
        %v1513 = vpack.c.b16 %v1486, %v1485
        %v1514 = vpack.c.b16 %v1488, %v1487
        %v1515 = vpack.c.b16 %v1490, %v1489
        %v1516 = vpack.c.b16 %v1492, %v1491
        %v1517 = vpack.c.b16 %v1494, %v1493
        %v1518 = vpack.c.b16 %v1496, %v1495
        %v1519 = vpack.c.b16 %v1498, %v1497
        %v1520 = vpack.c.b16 %v1500, %v1499
        %v1521 = vpack.c.b16 %v1502, %v1501
        %v1522 = vpack.c.b16 %v1504, %v1503
        %v1523 = vpack.c.b16 %v1506, %v1505
        %v1524 = vpack.c.b16 %v1508, %v1507
        %1541 = vmatprep.subr.bf16.mxu0 0
        %1542 = vmatpush1.bf16.msra.mxu0 %v1509
        %1543 = vmatprep.subr.bf16.mxu0 0
        %1544 = vmatpush1.bf16.msra.mxu0 %v1510
        %1545 = vmatprep.subr.bf16.mxu0 0
        %1546 = vmatpush1.bf16.msra.mxu0 %v1511
        %1547 = vmatprep.subr.bf16.mxu0 0
        %1548 = vmatpush1.bf16.msra.mxu0 %v1512
        %1549 = vmatprep.subr.bf16.mxu0 0
        %1550 = vmatpush1.bf16.msra.mxu0 %v1513
        %1551 = vmatprep.subr.bf16.mxu0 0
        %1552 = vmatpush1.bf16.msra.mxu0 %v1514
        %1553 = vmatprep.subr.bf16.mxu0 0
        %1554 = vmatpush1.bf16.msra.mxu0 %v1515
        %1555 = vmatprep.subr.bf16.mxu0 0
        %1556 = vmatpush1.bf16.msra.mxu0 %v1516
        %1557 = vmatprep.subr.bf16.mxu0 0
        %1558 = vmatpush1.bf16.msra.mxu0 %v1517
        %1559 = vmatprep.subr.bf16.mxu0 0
        %1560 = vmatpush1.bf16.msra.mxu0 %v1518
        %1561 = vmatprep.subr.bf16.mxu0 0
        %1562 = vmatpush1.bf16.msra.mxu0 %v1519
        %1563 = vmatprep.subr.bf16.mxu0 0
        %1564 = vmatpush1.bf16.msra.mxu0 %v1520
        %1565 = vmatprep.subr.bf16.mxu0 0
        %1566 = vmatpush1.bf16.msra.mxu0 %v1521
        %1567 = vmatprep.subr.bf16.mxu0 0
        %1568 = vmatpush1.bf16.msra.mxu0 %v1522
        %1569 = vmatprep.subr.bf16.mxu0 0
        %1570 = vmatpush1.bf16.msra.mxu0 %v1523
        %1571 = vmatprep.subr.bf16.mxu0 0
        %1572 = vmatpush1.bf16.msra.mxu0 %v1524
        %1573 = vmatprep.mubr.bf16.mxu0 %v1243
        %1574 = vmatmul.mubr.bf16.gmra.mrb[0].mxu0 %v1242
        %v1575 = vpop.f32.mrb[0].mxu0
        %v1576 = vadd.f32 0.0, %v1575
        %v1577 = vpop.f32.mrb[0].mxu0
        %v1578 = vpop.f32.mrb[0].mxu0
        %v1579 = vpop.f32.mrb[0].mxu0
        %1580 = vdwg.mxu0
        %v1581 = vmax.f32 %v1407, %v1576
        %v1582 = vmax.f32 %v1581, 0.0
        %v1583 = vpack.c.bf16 %v1582, %v1582
        %v1584 = vld [vmem:[%s7] sm:$0xf]
        %vm1585 = vcmask 64512
        %v1587 = vsel %vm1585, %v1584, 0
        %vm1589 = vcmask 1043456
        %v1591 = vsel %vm1589, %v1583, 0
        %1593 = vmatprep.subr.bf16.mxu0 0
        %1594 = vmatpush1.bf16.msra.mxu0 %v1591
        %1595 = vmatprep.subr.bf16.mxu0 0
        %1596 = vmatpush1.bf16.msra.mxu0 0
        %1597 = vmatprep.subr.bf16.mxu0 0
        %1598 = vmatpush1.bf16.msra.mxu0 0
        %1599 = vmatprep.subr.bf16.mxu0 0
        %1600 = vmatpush1.bf16.msra.mxu0 0
        %1601 = vmatprep.subr.bf16.mxu0 0
        %1602 = vmatpush1.bf16.msra.mxu0 0
        %1603 = vmatprep.subr.bf16.mxu0 0
        %1604 = vmatpush1.bf16.msra.mxu0 0
        %1605 = vmatprep.subr.bf16.mxu0 0
        %1606 = vmatpush1.bf16.msra.mxu0 0
        %1607 = vmatprep.subr.bf16.mxu0 0
        %1608 = vmatpush1.bf16.msra.mxu0 0
        %1609 = vmatprep.subr.bf16.mxu0 0
        %1610 = vmatpush1.bf16.msra.mxu0 0
        %1611 = vmatprep.subr.bf16.mxu0 0
        %1612 = vmatpush1.bf16.msra.mxu0 0
        %1613 = vmatprep.subr.bf16.mxu0 0
        %1614 = vmatpush1.bf16.msra.mxu0 0
        %1615 = vmatprep.subr.bf16.mxu0 0
        %1616 = vmatpush1.bf16.msra.mxu0 0
        %1617 = vmatprep.subr.bf16.mxu0 0
        %1618 = vmatpush1.bf16.msra.mxu0 0
        %1619 = vmatprep.subr.bf16.mxu0 0
        %1620 = vmatpush1.bf16.msra.mxu0 0
        %1621 = vmatprep.subr.bf16.mxu0 0
        %1622 = vmatpush1.bf16.msra.mxu0 0
        %1623 = vmatprep.subr.bf16.mxu0 0
        %1624 = vmatpush1.bf16.msra.mxu0 0
        %1625 = vmatprep.mubr.bf16.mxu0 0
        %1626 = vmatmul.mubr.bf16.gmra.mrb[0].mxu0 %v1587
        %v1627 = vpop.f32.mrb[0].mxu0
        %v1628 = vadd.f32 0.0, %v1627
        %v1629 = vpop.f32.mrb[0].mxu0
        %v1630 = vpop.f32.mrb[0].mxu0
        %v1631 = vpop.f32.mrb[0].mxu0
        %1632 = vdwg.mxu0
        %v1633 = vpack.c.bf16 %v1628, %v1628
        %s1634 = scalar_lea.vmem %s7, 4
        %v1635 = vld [vmem:[%s1634] sm:$0xf]
        %v1637 = vsel %vm1585, %v1635, 0
        %1639 = vmatprep.subr.bf16.mxu0 0
        %1640 = vmatpush1.bf16.msra.mxu0 %v1591
        %1641 = vmatprep.subr.bf16.mxu0 0
        %1642 = vmatpush1.bf16.msra.mxu0 0
        %1643 = vmatprep.subr.bf16.mxu0 0
        %1644 = vmatpush1.bf16.msra.mxu0 0
        %1645 = vmatprep.subr.bf16.mxu0 0
        %1646 = vmatpush1.bf16.msra.mxu0 0
        %1647 = vmatprep.subr.bf16.mxu0 0
        %1648 = vmatpush1.bf16.msra.mxu0 0
        %1649 = vmatprep.subr.bf16.mxu0 0
        %1650 = vmatpush1.bf16.msra.mxu0 0
        %1651 = vmatprep.subr.bf16.mxu0 0
        %1652 = vmatpush1.bf16.msra.mxu0 0
        %1653 = vmatprep.subr.bf16.mxu0 0
        %1654 = vmatpush1.bf16.msra.mxu0 0
        %1655 = vmatprep.subr.bf16.mxu0 0
        %1656 = vmatpush1.bf16.msra.mxu0 0
        %1657 = vmatprep.subr.bf16.mxu0 0
        %1658 = vmatpush1.bf16.msra.mxu0 0
        %1659 = vmatprep.subr.bf16.mxu0 0
        %1660 = vmatpush1.bf16.msra.mxu0 0
        %1661 = vmatprep.subr.bf16.mxu0 0
        %1662 = vmatpush1.bf16.msra.mxu0 0
        %1663 = vmatprep.subr.bf16.mxu0 0
        %1664 = vmatpush1.bf16.msra.mxu0 0
        %1665 = vmatprep.subr.bf16.mxu0 0
        %1666 = vmatpush1.bf16.msra.mxu0 0
        %1667 = vmatprep.subr.bf16.mxu0 0
        %1668 = vmatpush1.bf16.msra.mxu0 0
        %1669 = vmatprep.subr.bf16.mxu0 0
        %1670 = vmatpush1.bf16.msra.mxu0 0
        %1671 = vmatprep.mubr.bf16.mxu0 0
        %1672 = vmatmul.mubr.bf16.gmra.mrb[0].mxu0 %v1637
        %v1673 = vpop.f32.mrb[0].mxu0
        %v1674 = vadd.f32 0.0, %v1673
        %v1675 = vpop.f32.mrb[0].mxu0
        %v1676 = vpop.f32.mrb[0].mxu0
        %v1677 = vpop.f32.mrb[0].mxu0
        %1678 = vdwg.mxu0
        %v1679 = vpack.c.bf16 %v1674, %v1674
        %s1680 = scalar_lea.vmem [#allocation8], 128
        %v1681 = vld [vmem:[%s1680] sm:$0xff]
        %v1682 = vld [vmem:[%s1680 + $0x8] sm:$0xff]
        %v1683 = vld [vmem:[%s1680 + $0x10] sm:$0xff]
        %v1684 = vld [vmem:[%s1680 + $0x18] sm:$0xff]
        %v1685 = vld [vmem:[%s1680 + $0x20] sm:$0xff]
        %v1686 = vld [vmem:[%s1680 + $0x28] sm:$0xff]
        %v1687 = vld [vmem:[%s1680 + $0x30] sm:$0xff]
        %v1688 = vld [vmem:[%s1680 + $0x38] sm:$0xff]
        %v1689 = vld [vmem:[%s1680 + $0x40] sm:$0xff]
        %v1690 = vld [vmem:[%s1680 + $0x48] sm:$0xff]
        %v1691 = vld [vmem:[%s1680 + $0x50] sm:$0xff]
        %v1692 = vld [vmem:[%s1680 + $0x58] sm:$0xff]
        %v1693 = vld [vmem:[%s1680 + $0x60] sm:$0xff]
        %v1694 = vld [vmem:[%s1680 + $0x68] sm:$0xff]
        %v1695 = vld [vmem:[%s1680 + $0x70] sm:$0xff]
        %v1696 = vld [vmem:[%s1680 + $0x78] sm:$0xff]
        %v1697 = vld [vmem:[#allocation8] sm:$0xff]
        %v1698 = vld [vmem:[#allocation8 + $0x8] sm:$0xff]
        %v1699 = vld [vmem:[#allocation8 + $0x10] sm:$0xff]
        %v1700 = vld [vmem:[#allocation8 + $0x18] sm:$0xff]
        %v1701 = vld [vmem:[#allocation8 + $0x20] sm:$0xff]
        %v1702 = vld [vmem:[#allocation8 + $0x28] sm:$0xff]
        %v1703 = vld [vmem:[#allocation8 + $0x30] sm:$0xff]
        %v1704 = vld [vmem:[#allocation8 + $0x38] sm:$0xff]
        %v1705 = vld [vmem:[#allocation8 + $0x40] sm:$0xff]
        %v1706 = vld [vmem:[#allocation8 + $0x48] sm:$0xff]
        %v1707 = vld [vmem:[#allocation8 + $0x50] sm:$0xff]
        %v1708 = vld [vmem:[#allocation8 + $0x58] sm:$0xff]
        %v1709 = vld [vmem:[#allocation8 + $0x60] sm:$0xff]
        %v1710 = vld [vmem:[#allocation8 + $0x68] sm:$0xff]
        %v1711 = vld [vmem:[#allocation8 + $0x70] sm:$0xff]
        %v1712 = vld [vmem:[#allocation8 + $0x78] sm:$0xff]
        %v1729 = vunpack.c.l.b16 %v1697
        %v1730 = vunpack.c.h.b16 %v1697
        %v1731 = vunpack.c.l.b16 %v1698
        %v1732 = vunpack.c.h.b16 %v1698
        %v1733 = vunpack.c.l.b16 %v1699
        %v1734 = vunpack.c.h.b16 %v1699
        %v1735 = vunpack.c.l.b16 %v1700
        %v1736 = vunpack.c.h.b16 %v1700
        %v1737 = vunpack.c.l.b16 %v1701
        %v1738 = vunpack.c.h.b16 %v1701
        %v1739 = vunpack.c.l.b16 %v1702
        %v1740 = vunpack.c.h.b16 %v1702
        %v1741 = vunpack.c.l.b16 %v1703
        %v1742 = vunpack.c.h.b16 %v1703
        %v1743 = vunpack.c.l.b16 %v1704
        %v1744 = vunpack.c.h.b16 %v1704
        %v1745 = vunpack.c.l.b16 %v1705
        %v1746 = vunpack.c.h.b16 %v1705
        %v1747 = vunpack.c.l.b16 %v1706
        %v1748 = vunpack.c.h.b16 %v1706
        %v1749 = vunpack.c.l.b16 %v1707
        %v1750 = vunpack.c.h.b16 %v1707
        %v1751 = vunpack.c.l.b16 %v1708
        %v1752 = vunpack.c.h.b16 %v1708
        %v1753 = vunpack.c.l.b16 %v1709
        %v1754 = vunpack.c.h.b16 %v1709
        %v1755 = vunpack.c.l.b16 %v1710
        %v1756 = vunpack.c.h.b16 %v1710
        %v1757 = vunpack.c.l.b16 %v1711
        %v1758 = vunpack.c.h.b16 %v1711
        %v1759 = vunpack.c.l.b16 %v1712
        %v1760 = vunpack.c.h.b16 %v1712
        %v1761 = vpack.c.b16 %v1731, %v1729
        %v1762 = vpack.c.b16 %v1732, %v1730
        %v1763 = vpack.c.b16 %v1735, %v1733
        %v1764 = vpack.c.b16 %v1736, %v1734
        %v1765 = vpack.c.b16 %v1739, %v1737
        %v1766 = vpack.c.b16 %v1740, %v1738
        %v1767 = vpack.c.b16 %v1743, %v1741
        %v1768 = vpack.c.b16 %v1744, %v1742
        %v1769 = vpack.c.b16 %v1747, %v1745
        %v1770 = vpack.c.b16 %v1748, %v1746
        %v1771 = vpack.c.b16 %v1751, %v1749
        %v1772 = vpack.c.b16 %v1752, %v1750
        %v1773 = vpack.c.b16 %v1755, %v1753
        %v1774 = vpack.c.b16 %v1756, %v1754
        %v1775 = vpack.c.b16 %v1759, %v1757
        %v1776 = vpack.c.b16 %v1760, %v1758
        %1793 = vmatprep.subr.bf16.mxu0 %v1762
        %1794 = vmatpush1.bf16.msra.mxu0 %v1761
        %1795 = vmatprep.subr.bf16.mxu0 %v1764
        %1796 = vmatpush1.bf16.msra.mxu0 %v1763
        %1797 = vmatprep.subr.bf16.mxu0 %v1766
        %1798 = vmatpush1.bf16.msra.mxu0 %v1765
        %1799 = vmatprep.subr.bf16.mxu0 %v1768
        %1800 = vmatpush1.bf16.msra.mxu0 %v1767
        %1801 = vmatprep.subr.bf16.mxu0 %v1770
        %1802 = vmatpush1.bf16.msra.mxu0 %v1769
        %1803 = vmatprep.subr.bf16.mxu0 %v1772
        %1804 = vmatpush1.bf16.msra.mxu0 %v1771
        %1805 = vmatprep.subr.bf16.mxu0 %v1774
        %1806 = vmatpush1.bf16.msra.mxu0 %v1773
        %1807 = vmatprep.subr.bf16.mxu0 %v1776
        %1808 = vmatpush1.bf16.msra.mxu0 %v1775
        %1809 = vmatprep.subr.bf16.mxu0 0
        %1810 = vmatpush1.bf16.msra.mxu0 0
        %1811 = vmatprep.subr.bf16.mxu0 0
        %1812 = vmatpush1.bf16.msra.mxu0 0
        %1813 = vmatprep.subr.bf16.mxu0 0
        %1814 = vmatpush1.bf16.msra.mxu0 0
        %1815 = vmatprep.subr.bf16.mxu0 0
        %1816 = vmatpush1.bf16.msra.mxu0 0
        %1817 = vmatprep.subr.bf16.mxu0 0
        %1818 = vmatpush1.bf16.msra.mxu0 0
        %1819 = vmatprep.subr.bf16.mxu0 0
        %1820 = vmatpush1.bf16.msra.mxu0 0
        %1821 = vmatprep.subr.bf16.mxu0 0
        %1822 = vmatpush1.bf16.msra.mxu0 0
        %1823 = vmatprep.subr.bf16.mxu0 0
        %1824 = vmatpush1.bf16.msra.mxu0 0
        %1825 = vmatprep.mubr.bf16.mxu0 0
        %1826 = vmatmul.mubr.bf16.gmra.mrb[0].mxu0 %v1633
        %v1827 = vpop.f32.mrb[0].mxu0
        %v1828 = vadd.f32 0.0, %v1827
        %v1829 = vpop.f32.mrb[0].mxu0
        %v1830 = vadd.f32 0.0, %v1829
        %v1831 = vpop.f32.mrb[0].mxu0
        %v1832 = vpop.f32.mrb[0].mxu0
        %1833 = vdwg.mxu0
        %v1850 = vunpack.c.l.b16 %v1681
        %v1851 = vunpack.c.h.b16 %v1681
        %v1852 = vunpack.c.l.b16 %v1682
        %v1853 = vunpack.c.h.b16 %v1682
        %v1854 = vunpack.c.l.b16 %v1683
        %v1855 = vunpack.c.h.b16 %v1683
        %v1856 = vunpack.c.l.b16 %v1684
        %v1857 = vunpack.c.h.b16 %v1684
        %v1858 = vunpack.c.l.b16 %v1685
        %v1859 = vunpack.c.h.b16 %v1685
        %v1860 = vunpack.c.l.b16 %v1686
        %v1861 = vunpack.c.h.b16 %v1686
        %v1862 = vunpack.c.l.b16 %v1687
        %v1863 = vunpack.c.h.b16 %v1687
        %v1864 = vunpack.c.l.b16 %v1688
        %v1865 = vunpack.c.h.b16 %v1688
        %v1866 = vunpack.c.l.b16 %v1689
        %v1867 = vunpack.c.h.b16 %v1689
        %v1868 = vunpack.c.l.b16 %v1690
        %v1869 = vunpack.c.h.b16 %v1690
        %v1870 = vunpack.c.l.b16 %v1691
        %v1871 = vunpack.c.h.b16 %v1691
        %v1872 = vunpack.c.l.b16 %v1692
        %v1873 = vunpack.c.h.b16 %v1692
        %v1874 = vunpack.c.l.b16 %v1693
        %v1875 = vunpack.c.h.b16 %v1693
        %v1876 = vunpack.c.l.b16 %v1694
        %v1877 = vunpack.c.h.b16 %v1694
        %v1878 = vunpack.c.l.b16 %v1695
        %v1879 = vunpack.c.h.b16 %v1695
        %v1880 = vunpack.c.l.b16 %v1696
        %v1881 = vunpack.c.h.b16 %v1696
        %v1882 = vpack.c.b16 %v1852, %v1850
        %v1883 = vpack.c.b16 %v1853, %v1851
        %v1884 = vpack.c.b16 %v1856, %v1854
        %v1885 = vpack.c.b16 %v1857, %v1855
        %v1886 = vpack.c.b16 %v1860, %v1858
        %v1887 = vpack.c.b16 %v1861, %v1859
        %v1888 = vpack.c.b16 %v1864, %v1862
        %v1889 = vpack.c.b16 %v1865, %v1863
        %v1890 = vpack.c.b16 %v1868, %v1866
        %v1891 = vpack.c.b16 %v1869, %v1867
        %v1892 = vpack.c.b16 %v1872, %v1870
        %v1893 = vpack.c.b16 %v1873, %v1871
        %v1894 = vpack.c.b16 %v1876, %v1874
        %v1895 = vpack.c.b16 %v1877, %v1875
        %v1896 = vpack.c.b16 %v1880, %v1878
        %v1897 = vpack.c.b16 %v1881, %v1879
        %1914 = vmatprep.subr.bf16.mxu0 %v1883
        %1915 = vmatpush1.bf16.msra.mxu0 %v1882
        %1916 = vmatprep.subr.bf16.mxu0 %v1885
        %1917 = vmatpush1.bf16.msra.mxu0 %v1884
        %1918 = vmatprep.subr.bf16.mxu0 %v1887
        %1919 = vmatpush1.bf16.msra.mxu0 %v1886
        %1920 = vmatprep.subr.bf16.mxu0 %v1889
        %1921 = vmatpush1.bf16.msra.mxu0 %v1888
        %1922 = vmatprep.subr.bf16.mxu0 %v1891
        %1923 = vmatpush1.bf16.msra.mxu0 %v1890
        %1924 = vmatprep.subr.bf16.mxu0 %v1893
        %1925 = vmatpush1.bf16.msra.mxu0 %v1892
        %1926 = vmatprep.subr.bf16.mxu0 %v1895
        %1927 = vmatpush1.bf16.msra.mxu0 %v1894
        %1928 = vmatprep.subr.bf16.mxu0 %v1897
        %1929 = vmatpush1.bf16.msra.mxu0 %v1896
        %1930 = vmatprep.subr.bf16.mxu0 0
        %1931 = vmatpush1.bf16.msra.mxu0 0
        %1932 = vmatprep.subr.bf16.mxu0 0
        %1933 = vmatpush1.bf16.msra.mxu0 0
        %1934 = vmatprep.subr.bf16.mxu0 0
        %1935 = vmatpush1.bf16.msra.mxu0 0
        %1936 = vmatprep.subr.bf16.mxu0 0
        %1937 = vmatpush1.bf16.msra.mxu0 0
        %1938 = vmatprep.subr.bf16.mxu0 0
        %1939 = vmatpush1.bf16.msra.mxu0 0
        %1940 = vmatprep.subr.bf16.mxu0 0
        %1941 = vmatpush1.bf16.msra.mxu0 0
        %1942 = vmatprep.subr.bf16.mxu0 0
        %1943 = vmatpush1.bf16.msra.mxu0 0
        %1944 = vmatprep.subr.bf16.mxu0 0
        %1945 = vmatpush1.bf16.msra.mxu0 0
        %1946 = vmatprep.mubr.bf16.mxu0 0
        %1947 = vmatmul.mubr.bf16.gmra.mrb[0].mxu0 %v1583
        %v1948 = vpop.f32.mrb[0].mxu0
        %v1949 = vadd.f32 %v1828, %v1948
        %v1950 = vpop.f32.mrb[0].mxu0
        %v1951 = vadd.f32 %v1830, %v1950
        %v1952 = vpop.f32.mrb[0].mxu0
        %v1953 = vpop.f32.mrb[0].mxu0
        %1954 = vdwg.mxu0
        %s1955 = scalar_lea.vmem [#allocation8], 256
        %v1956 = vld [vmem:[%s1955] sm:$0xff]
        %v1957 = vld [vmem:[%s1955 + $0x8] sm:$0xff]
        %v1958 = vld [vmem:[%s1955 + $0x10] sm:$0xff]
        %v1959 = vld [vmem:[%s1955 + $0x18] sm:$0xff]
        %v1960 = vld [vmem:[%s1955 + $0x20] sm:$0xff]
        %v1961 = vld [vmem:[%s1955 + $0x28] sm:$0xff]
        %v1962 = vld [vmem:[%s1955 + $0x30] sm:$0xff]
        %v1963 = vld [vmem:[%s1955 + $0x38] sm:$0xff]
        %v1964 = vld [vmem:[%s1955 + $0x40] sm:$0xff]
        %v1965 = vld [vmem:[%s1955 + $0x48] sm:$0xff]
        %v1966 = vld [vmem:[%s1955 + $0x50] sm:$0xff]
        %v1967 = vld [vmem:[%s1955 + $0x58] sm:$0xff]
        %v1968 = vld [vmem:[%s1955 + $0x60] sm:$0xff]
        %v1969 = vld [vmem:[%s1955 + $0x68] sm:$0xff]
        %v1970 = vld [vmem:[%s1955 + $0x70] sm:$0xff]
        %v1971 = vld [vmem:[%s1955 + $0x78] sm:$0xff]
        %v1988 = vunpack.c.l.b16 %v1956
        %v1989 = vunpack.c.h.b16 %v1956
        %v1990 = vunpack.c.l.b16 %v1957
        %v1991 = vunpack.c.h.b16 %v1957
        %v1992 = vunpack.c.l.b16 %v1958
        %v1993 = vunpack.c.h.b16 %v1958
        %v1994 = vunpack.c.l.b16 %v1959
        %v1995 = vunpack.c.h.b16 %v1959
        %v1996 = vunpack.c.l.b16 %v1960
        %v1997 = vunpack.c.h.b16 %v1960
        %v1998 = vunpack.c.l.b16 %v1961
        %v1999 = vunpack.c.h.b16 %v1961
        %v2000 = vunpack.c.l.b16 %v1962
        %v2001 = vunpack.c.h.b16 %v1962
        %v2002 = vunpack.c.l.b16 %v1963
        %v2003 = vunpack.c.h.b16 %v1963
        %v2004 = vunpack.c.l.b16 %v1964
        %v2005 = vunpack.c.h.b16 %v1964
        %v2006 = vunpack.c.l.b16 %v1965
        %v2007 = vunpack.c.h.b16 %v1965
        %v2008 = vunpack.c.l.b16 %v1966
        %v2009 = vunpack.c.h.b16 %v1966
        %v2010 = vunpack.c.l.b16 %v1967
        %v2011 = vunpack.c.h.b16 %v1967
        %v2012 = vunpack.c.l.b16 %v1968
        %v2013 = vunpack.c.h.b16 %v1968
        %v2014 = vunpack.c.l.b16 %v1969
        %v2015 = vunpack.c.h.b16 %v1969
        %v2016 = vunpack.c.l.b16 %v1970
        %v2017 = vunpack.c.h.b16 %v1970
        %v2018 = vunpack.c.l.b16 %v1971
        %v2019 = vunpack.c.h.b16 %v1971
        %v2020 = vpack.c.b16 %v1990, %v1988
        %v2021 = vpack.c.b16 %v1991, %v1989
        %v2022 = vpack.c.b16 %v1994, %v1992
        %v2023 = vpack.c.b16 %v1995, %v1993
        %v2024 = vpack.c.b16 %v1998, %v1996
        %v2025 = vpack.c.b16 %v1999, %v1997
        %v2026 = vpack.c.b16 %v2002, %v2000
        %v2027 = vpack.c.b16 %v2003, %v2001
        %v2028 = vpack.c.b16 %v2006, %v2004
        %v2029 = vpack.c.b16 %v2007, %v2005
        %v2030 = vpack.c.b16 %v2010, %v2008
        %v2031 = vpack.c.b16 %v2011, %v2009
        %v2032 = vpack.c.b16 %v2014, %v2012
        %v2033 = vpack.c.b16 %v2015, %v2013
        %v2034 = vpack.c.b16 %v2018, %v2016
        %v2035 = vpack.c.b16 %v2019, %v2017
        %2052 = vmatprep.subr.bf16.mxu0 %v2021
        %2053 = vmatpush1.bf16.msra.mxu0 %v2020
        %2054 = vmatprep.subr.bf16.mxu0 %v2023
        %2055 = vmatpush1.bf16.msra.mxu0 %v2022
        %2056 = vmatprep.subr.bf16.mxu0 %v2025
        %2057 = vmatpush1.bf16.msra.mxu0 %v2024
        %2058 = vmatprep.subr.bf16.mxu0 %v2027
        %2059 = vmatpush1.bf16.msra.mxu0 %v2026
        %2060 = vmatprep.subr.bf16.mxu0 %v2029
        %2061 = vmatpush1.bf16.msra.mxu0 %v2028
        %2062 = vmatprep.subr.bf16.mxu0 %v2031
        %2063 = vmatpush1.bf16.msra.mxu0 %v2030
        %2064 = vmatprep.subr.bf16.mxu0 %v2033
        %2065 = vmatpush1.bf16.msra.mxu0 %v2032
        %2066 = vmatprep.subr.bf16.mxu0 %v2035
        %2067 = vmatpush1.bf16.msra.mxu0 %v2034
        %2068 = vmatprep.subr.bf16.mxu0 0
        %2069 = vmatpush1.bf16.msra.mxu0 0
        %2070 = vmatprep.subr.bf16.mxu0 0
        %2071 = vmatpush1.bf16.msra.mxu0 0
        %2072 = vmatprep.subr.bf16.mxu0 0
        %2073 = vmatpush1.bf16.msra.mxu0 0
        %2074 = vmatprep.subr.bf16.mxu0 0
        %2075 = vmatpush1.bf16.msra.mxu0 0
        %2076 = vmatprep.subr.bf16.mxu0 0
        %2077 = vmatpush1.bf16.msra.mxu0 0
        %2078 = vmatprep.subr.bf16.mxu0 0
        %2079 = vmatpush1.bf16.msra.mxu0 0
        %2080 = vmatprep.subr.bf16.mxu0 0
        %2081 = vmatpush1.bf16.msra.mxu0 0
        %2082 = vmatprep.subr.bf16.mxu0 0
        %2083 = vmatpush1.bf16.msra.mxu0 0
        %2084 = vmatprep.mubr.bf16.mxu0 0
        %2085 = vmatmul.mubr.bf16.gmra.mrb[0].mxu0 %v1679
        %v2086 = vpop.f32.mrb[0].mxu0
        %v2087 = vadd.f32 0.0, %v2086
        %v2088 = vpop.f32.mrb[0].mxu0
        %v2089 = vadd.f32 0.0, %v2088
        %v2090 = vpop.f32.mrb[0].mxu0
        %v2091 = vpop.f32.mrb[0].mxu0
        %2092 = vdwg.mxu0
        %v2093 = vadd.f32 %v1949, %v2087
        %v2094 = vadd.f32 %v1951, %v2089
        %v2095 = vld [vmem:[%s10] sm:$0x3]
        %v2097 = vlaneseq
        %v2098 = vshrl.u32 %v2097, 7
        %v2099 = vsub.s32 0, %v2098
        %v2100 = vrot.slane %v2095, %v2099
        %v2101 = vlaneseq
        %v2102 = vshrl.u32 %v2101, 7
        %v2103 = vsub.s32 1, %v2102
        %v2104 = vrot.slane %v2095, %v2103
        %v2107 = vadd.f32 %v2093, %v2100
        %v2108 = vadd.f32 %v2094, %v2104
        %v2109 = vpack.c.bf16 %v2107, %v2107
        %v2110 = vpack.c.bf16 %v2108, %v2108
        %v2111 = vld [vmem:[%s8] sm:$0x3]
        %v2113 = vsel %vm1585, %v2111, 0
        %v2116 = vsel %vm1589, %v2109, 0
        %v2119 = vsel %vm1589, %v2110, 0
        %2121 = vmatprep.subr.bf16.mxu0 %v2119
        %2122 = vmatpush1.bf16.msra.mxu0 %v2116
        %2123 = vmatprep.subr.bf16.mxu0 0
        %2124 = vmatpush1.bf16.msra.mxu0 0
        %2125 = vmatprep.subr.bf16.mxu0 0
        %2126 = vmatpush1.bf16.msra.mxu0 0
        %2127 = vmatprep.subr.bf16.mxu0 0
        %2128 = vmatpush1.bf16.msra.mxu0 0
        %2129 = vmatprep.subr.bf16.mxu0 0
        %2130 = vmatpush1.bf16.msra.mxu0 0
        %2131 = vmatprep.subr.bf16.mxu0 0
        %2132 = vmatpush1.bf16.msra.mxu0 0
        %2133 = vmatprep.subr.bf16.mxu0 0
        %2134 = vmatpush1.bf16.msra.mxu0 0
        %2135 = vmatprep.subr.bf16.mxu0 0
        %2136 = vmatpush1.bf16.msra.mxu0 0
        %2137 = vmatprep.subr.bf16.mxu0 0
        %2138 = vmatpush1.bf16.msra.mxu0 0
        %2139 = vmatprep.subr.bf16.mxu0 0
        %2140 = vmatpush1.bf16.msra.mxu0 0
        %2141 = vmatprep.subr.bf16.mxu0 0
        %2142 = vmatpush1.bf16.msra.mxu0 0
        %2143 = vmatprep.subr.bf16.mxu0 0
        %2144 = vmatpush1.bf16.msra.mxu0 0
        %2145 = vmatprep.subr.bf16.mxu0 0
        %2146 = vmatpush1.bf16.msra.mxu0 0
        %2147 = vmatprep.subr.bf16.mxu0 0
        %2148 = vmatpush1.bf16.msra.mxu0 0
        %2149 = vmatprep.subr.bf16.mxu0 0
        %2150 = vmatpush1.bf16.msra.mxu0 0
        %2151 = vmatprep.subr.bf16.mxu0 0
        %2152 = vmatpush1.bf16.msra.mxu0 0
        %2153 = vmatprep.mubr.bf16.mxu0 0
        %2154 = vmatmul.mubr.bf16.gmra.mrb[0].mxu0 %v2113
        %v2155 = vpop.f32.mrb[0].mxu0
        %v2156 = vadd.f32 0.0, %v2155
        %v2157 = vpop.f32.mrb[0].mxu0
        %v2158 = vadd.f32 0.0, %v2157
        %v2159 = vpop.f32.mrb[0].mxu0
        %v2160 = vpop.f32.mrb[0].mxu0
        %2161 = vdwg.mxu0
        %s2162 = scalar_lea.vmem %s8, 2
        %v2163 = vld [vmem:[%s2162] sm:$0x3]
        %v2165 = vsel %vm1585, %v2163, 0
        %2167 = vmatprep.subr.bf16.mxu0 %v2119
        %2168 = vmatpush1.bf16.msra.mxu0 %v2116
        %2169 = vmatprep.subr.bf16.mxu0 0
        %2170 = vmatpush1.bf16.msra.mxu0 0
        %2171 = vmatprep.subr.bf16.mxu0 0
        %2172 = vmatpush1.bf16.msra.mxu0 0
        %2173 = vmatprep.subr.bf16.mxu0 0
        %2174 = vmatpush1.bf16.msra.mxu0 0
        %2175 = vmatprep.subr.bf16.mxu0 0
        %2176 = vmatpush1.bf16.msra.mxu0 0
        %2177 = vmatprep.subr.bf16.mxu0 0
        %2178 = vmatpush1.bf16.msra.mxu0 0
        %2179 = vmatprep.subr.bf16.mxu0 0
        %2180 = vmatpush1.bf16.msra.mxu0 0
        %2181 = vmatprep.subr.bf16.mxu0 0
        %2182 = vmatpush1.bf16.msra.mxu0 0
        %2183 = vmatprep.subr.bf16.mxu0 0
        %2184 = vmatpush1.bf16.msra.mxu0 0
        %2185 = vmatprep.subr.bf16.mxu0 0
        %2186 = vmatpush1.bf16.msra.mxu0 0
        %2187 = vmatprep.subr.bf16.mxu0 0
        %2188 = vmatpush1.bf16.msra.mxu0 0
        %2189 = vmatprep.subr.bf16.mxu0 0
        %2190 = vmatpush1.bf16.msra.mxu0 0
        %2191 = vmatprep.subr.bf16.mxu0 0
        %2192 = vmatpush1.bf16.msra.mxu0 0
        %2193 = vmatprep.subr.bf16.mxu0 0
        %2194 = vmatpush1.bf16.msra.mxu0 0
        %2195 = vmatprep.subr.bf16.mxu0 0
        %2196 = vmatpush1.bf16.msra.mxu0 0
        %2197 = vmatprep.subr.bf16.mxu0 0
        %2198 = vmatpush1.bf16.msra.mxu0 0
        %2199 = vmatprep.mubr.bf16.mxu0 0
        %2200 = vmatmul.mubr.bf16.gmra.mrb[0].mxu0 %v2165
        %v2201 = vpop.f32.mrb[0].mxu0
        %v2202 = vadd.f32 0.0, %v2201
        %v2203 = vpop.f32.mrb[0].mxu0
        %v2204 = vadd.f32 0.0, %v2203
        %v2205 = vpop.f32.mrb[0].mxu0
        %v2206 = vpop.f32.mrb[0].mxu0
        %2207 = vdwg.mxu0
        %v2208 = vmax.f32 %v2156, %v2202
        %v2209 = vmax.f32 %v2158, %v2204
        %v2210 = vpack.c.bf16 %v2208, %v2208
        %v2211 = vpack.c.bf16 %v2209, %v2209
        %v2212 = vld [vmem:[#allocation10] sm:$0xf]
        %v2213 = vld [vmem:[#allocation10 + $0x4] sm:$0xf]
        %v2214 = vld [vmem:[#allocation10 + $0x8] sm:$0xf]
        %v2215 = vld [vmem:[#allocation10 + $0xc] sm:$0xf]
        %v2216 = vld [vmem:[#allocation10 + $0x10] sm:$0xf]
        %v2217 = vld [vmem:[#allocation10 + $0x14] sm:$0xf]
        %v2218 = vld [vmem:[#allocation10 + $0x18] sm:$0xf]
        %v2219 = vld [vmem:[#allocation10 + $0x1c] sm:$0xf]
        %v2220 = vld [vmem:[#allocation10 + $0x20] sm:$0xf]
        %v2221 = vld [vmem:[#allocation10 + $0x24] sm:$0xf]
        %v2222 = vld [vmem:[#allocation10 + $0x28] sm:$0xf]
        %v2223 = vld [vmem:[#allocation10 + $0x2c] sm:$0xf]
        %v2224 = vld [vmem:[#allocation10 + $0x30] sm:$0xf]
        %v2225 = vld [vmem:[#allocation10 + $0x34] sm:$0xf]
        %v2226 = vld [vmem:[#allocation10 + $0x38] sm:$0xf]
        %v2227 = vld [vmem:[#allocation10 + $0x3c] sm:$0xf]
        %v2228 = vld [vmem:[#allocation10 + $0x40] sm:$0xf]
        %v2229 = vld [vmem:[#allocation10 + $0x44] sm:$0xf]
        %v2230 = vld [vmem:[#allocation10 + $0x48] sm:$0xf]
        %v2231 = vld [vmem:[#allocation10 + $0x4c] sm:$0xf]
        %v2232 = vld [vmem:[#allocation10 + $0x50] sm:$0xf]
        %v2233 = vld [vmem:[#allocation10 + $0x54] sm:$0xf]
        %v2234 = vld [vmem:[#allocation10 + $0x58] sm:$0xf]
        %v2235 = vld [vmem:[#allocation10 + $0x5c] sm:$0xf]
        %v2236 = vld [vmem:[#allocation10 + $0x60] sm:$0xf]
        %v2237 = vld [vmem:[#allocation10 + $0x64] sm:$0xf]
        %v2238 = vld [vmem:[#allocation10 + $0x68] sm:$0xf]
        %v2239 = vld [vmem:[#allocation10 + $0x6c] sm:$0xf]
        %v2240 = vld [vmem:[#allocation10 + $0x70] sm:$0xf]
        %v2241 = vld [vmem:[#allocation10 + $0x74] sm:$0xf]
        %v2242 = vld [vmem:[#allocation10 + $0x78] sm:$0xf]
        %v2243 = vld [vmem:[#allocation10 + $0x7c] sm:$0xf]
        %v2276 = vunpack.c.l.b16 %v2212
        %v2277 = vunpack.c.l.b16 %v2213
        %v2278 = vunpack.c.l.b16 %v2214
        %v2279 = vunpack.c.l.b16 %v2215
        %v2280 = vunpack.c.l.b16 %v2216
        %v2281 = vunpack.c.l.b16 %v2217
        %v2282 = vunpack.c.l.b16 %v2218
        %v2283 = vunpack.c.l.b16 %v2219
        %v2284 = vunpack.c.l.b16 %v2220
        %v2285 = vunpack.c.l.b16 %v2221
        %v2286 = vunpack.c.l.b16 %v2222
        %v2287 = vunpack.c.l.b16 %v2223
        %v2288 = vunpack.c.l.b16 %v2224
        %v2289 = vunpack.c.l.b16 %v2225
        %v2290 = vunpack.c.l.b16 %v2226
        %v2291 = vunpack.c.l.b16 %v2227
        %v2292 = vunpack.c.l.b16 %v2228
        %v2293 = vunpack.c.l.b16 %v2229
        %v2294 = vunpack.c.l.b16 %v2230
        %v2295 = vunpack.c.l.b16 %v2231
        %v2296 = vunpack.c.l.b16 %v2232
        %v2297 = vunpack.c.l.b16 %v2233
        %v2298 = vunpack.c.l.b16 %v2234
        %v2299 = vunpack.c.l.b16 %v2235
        %v2300 = vunpack.c.l.b16 %v2236
        %v2301 = vunpack.c.l.b16 %v2237
        %v2302 = vunpack.c.l.b16 %v2238
        %v2303 = vunpack.c.l.b16 %v2239
        %v2304 = vunpack.c.l.b16 %v2240
        %v2305 = vunpack.c.l.b16 %v2241
        %v2306 = vunpack.c.l.b16 %v2242
        %v2307 = vunpack.c.l.b16 %v2243
        %v2308 = vpack.c.b16 %v2277, %v2276
        %v2309 = vpack.c.b16 %v2279, %v2278
        %v2310 = vpack.c.b16 %v2281, %v2280
        %v2311 = vpack.c.b16 %v2283, %v2282
        %v2312 = vpack.c.b16 %v2285, %v2284
        %v2313 = vpack.c.b16 %v2287, %v2286
        %v2314 = vpack.c.b16 %v2289, %v2288
        %v2315 = vpack.c.b16 %v2291, %v2290
        %v2316 = vpack.c.b16 %v2293, %v2292
        %v2317 = vpack.c.b16 %v2295, %v2294
        %v2318 = vpack.c.b16 %v2297, %v2296
        %v2319 = vpack.c.b16 %v2299, %v2298
        %v2320 = vpack.c.b16 %v2301, %v2300
        %v2321 = vpack.c.b16 %v2303, %v2302
        %v2322 = vpack.c.b16 %v2305, %v2304
        %v2323 = vpack.c.b16 %v2307, %v2306
        %2340 = vmatprep.subr.bf16.mxu0 0
        %2341 = vmatpush1.bf16.msra.mxu0 %v2308
        %2342 = vmatprep.subr.bf16.mxu0 0
        %2343 = vmatpush1.bf16.msra.mxu0 %v2309
        %2344 = vmatprep.subr.bf16.mxu0 0
        %2345 = vmatpush1.bf16.msra.mxu0 %v2310
        %2346 = vmatprep.subr.bf16.mxu0 0
        %2347 = vmatpush1.bf16.msra.mxu0 %v2311
        %2348 = vmatprep.subr.bf16.mxu0 0
        %2349 = vmatpush1.bf16.msra.mxu0 %v2312
        %2350 = vmatprep.subr.bf16.mxu0 0
        %2351 = vmatpush1.bf16.msra.mxu0 %v2313
        %2352 = vmatprep.subr.bf16.mxu0 0
        %2353 = vmatpush1.bf16.msra.mxu0 %v2314
        %2354 = vmatprep.subr.bf16.mxu0 0
        %2355 = vmatpush1.bf16.msra.mxu0 %v2315
        %2356 = vmatprep.subr.bf16.mxu0 0
        %2357 = vmatpush1.bf16.msra.mxu0 %v2316
        %2358 = vmatprep.subr.bf16.mxu0 0
        %2359 = vmatpush1.bf16.msra.mxu0 %v2317
        %2360 = vmatprep.subr.bf16.mxu0 0
        %2361 = vmatpush1.bf16.msra.mxu0 %v2318
        %2362 = vmatprep.subr.bf16.mxu0 0
        %2363 = vmatpush1.bf16.msra.mxu0 %v2319
        %2364 = vmatprep.subr.bf16.mxu0 0
        %2365 = vmatpush1.bf16.msra.mxu0 %v2320
        %2366 = vmatprep.subr.bf16.mxu0 0
        %2367 = vmatpush1.bf16.msra.mxu0 %v2321
        %2368 = vmatprep.subr.bf16.mxu0 0
        %2369 = vmatpush1.bf16.msra.mxu0 %v2322
        %2370 = vmatprep.subr.bf16.mxu0 0
        %2371 = vmatpush1.bf16.msra.mxu0 %v2323
        %2372 = vmatprep.mubr.bf16.mxu0 %v2211
        %2373 = vmatmul.mubr.bf16.gmra.mrb[0].mxu0 %v2210
        %v2374 = vpop.f32.mrb[0].mxu0
        %v2375 = vadd.f32 0.0, %v2374
        %v2376 = vpop.f32.mrb[0].mxu0
        %v2377 = vpop.f32.mrb[0].mxu0
        %v2378 = vpop.f32.mrb[0].mxu0
        %2379 = vdwg.mxu0
        %s2380 = scalar_lea.vmem [#allocation10], 128
        %v2381 = vld [vmem:[%s2380] sm:$0xf]
        %v2382 = vld [vmem:[%s2380 + $0x4] sm:$0xf]
        %v2383 = vld [vmem:[%s2380 + $0x8] sm:$0xf]
        %v2384 = vld [vmem:[%s2380 + $0xc] sm:$0xf]
        %v2385 = vld [vmem:[%s2380 + $0x10] sm:$0xf]
        %v2386 = vld [vmem:[%s2380 + $0x14] sm:$0xf]
        %v2387 = vld [vmem:[%s2380 + $0x18] sm:$0xf]
        %v2388 = vld [vmem:[%s2380 + $0x1c] sm:$0xf]
        %v2389 = vld [vmem:[%s2380 + $0x20] sm:$0xf]
        %v2390 = vld [vmem:[%s2380 + $0x24] sm:$0xf]
        %v2391 = vld [vmem:[%s2380 + $0x28] sm:$0xf]
        %v2392 = vld [vmem:[%s2380 + $0x2c] sm:$0xf]
        %v2393 = vld [vmem:[%s2380 + $0x30] sm:$0xf]
        %v2394 = vld [vmem:[%s2380 + $0x34] sm:$0xf]
        %v2395 = vld [vmem:[%s2380 + $0x38] sm:$0xf]
        %v2396 = vld [vmem:[%s2380 + $0x3c] sm:$0xf]
        %v2397 = vld [vmem:[%s2380 + $0x40] sm:$0xf]
        %v2398 = vld [vmem:[%s2380 + $0x44] sm:$0xf]
        %v2399 = vld [vmem:[%s2380 + $0x48] sm:$0xf]
        %v2400 = vld [vmem:[%s2380 + $0x4c] sm:$0xf]
        %v2401 = vld [vmem:[%s2380 + $0x50] sm:$0xf]
        %v2402 = vld [vmem:[%s2380 + $0x54] sm:$0xf]
        %v2403 = vld [vmem:[%s2380 + $0x58] sm:$0xf]
        %v2404 = vld [vmem:[%s2380 + $0x5c] sm:$0xf]
        %v2405 = vld [vmem:[%s2380 + $0x60] sm:$0xf]
        %v2406 = vld [vmem:[%s2380 + $0x64] sm:$0xf]
        %v2407 = vld [vmem:[%s2380 + $0x68] sm:$0xf]
        %v2408 = vld [vmem:[%s2380 + $0x6c] sm:$0xf]
        %v2409 = vld [vmem:[%s2380 + $0x70] sm:$0xf]
        %v2410 = vld [vmem:[%s2380 + $0x74] sm:$0xf]
        %v2411 = vld [vmem:[%s2380 + $0x78] sm:$0xf]
        %v2412 = vld [vmem:[%s2380 + $0x7c] sm:$0xf]
        %v2445 = vunpack.c.l.b16 %v2381
        %v2446 = vunpack.c.l.b16 %v2382
        %v2447 = vunpack.c.l.b16 %v2383
        %v2448 = vunpack.c.l.b16 %v2384
        %v2449 = vunpack.c.l.b16 %v2385
        %v2450 = vunpack.c.l.b16 %v2386
        %v2451 = vunpack.c.l.b16 %v2387
        %v2452 = vunpack.c.l.b16 %v2388
        %v2453 = vunpack.c.l.b16 %v2389
        %v2454 = vunpack.c.l.b16 %v2390
        %v2455 = vunpack.c.l.b16 %v2391
        %v2456 = vunpack.c.l.b16 %v2392
        %v2457 = vunpack.c.l.b16 %v2393
        %v2458 = vunpack.c.l.b16 %v2394
        %v2459 = vunpack.c.l.b16 %v2395
        %v2460 = vunpack.c.l.b16 %v2396
        %v2461 = vunpack.c.l.b16 %v2397
        %v2462 = vunpack.c.l.b16 %v2398
        %v2463 = vunpack.c.l.b16 %v2399
        %v2464 = vunpack.c.l.b16 %v2400
        %v2465 = vunpack.c.l.b16 %v2401
        %v2466 = vunpack.c.l.b16 %v2402
        %v2467 = vunpack.c.l.b16 %v2403
        %v2468 = vunpack.c.l.b16 %v2404
        %v2469 = vunpack.c.l.b16 %v2405
        %v2470 = vunpack.c.l.b16 %v2406
        %v2471 = vunpack.c.l.b16 %v2407
        %v2472 = vunpack.c.l.b16 %v2408
        %v2473 = vunpack.c.l.b16 %v2409
        %v2474 = vunpack.c.l.b16 %v2410
        %v2475 = vunpack.c.l.b16 %v2411
        %v2476 = vunpack.c.l.b16 %v2412
        %v2477 = vpack.c.b16 %v2446, %v2445
        %v2478 = vpack.c.b16 %v2448, %v2447
        %v2479 = vpack.c.b16 %v2450, %v2449
        %v2480 = vpack.c.b16 %v2452, %v2451
        %v2481 = vpack.c.b16 %v2454, %v2453
        %v2482 = vpack.c.b16 %v2456, %v2455
        %v2483 = vpack.c.b16 %v2458, %v2457
        %v2484 = vpack.c.b16 %v2460, %v2459
        %v2485 = vpack.c.b16 %v2462, %v2461
        %v2486 = vpack.c.b16 %v2464, %v2463
        %v2487 = vpack.c.b16 %v2466, %v2465
        %v2488 = vpack.c.b16 %v2468, %v2467
        %v2489 = vpack.c.b16 %v2470, %v2469
        %v2490 = vpack.c.b16 %v2472, %v2471
        %v2491 = vpack.c.b16 %v2474, %v2473
        %v2492 = vpack.c.b16 %v2476, %v2475
        %2509 = vmatprep.subr.bf16.mxu0 0
        %2510 = vmatpush1.bf16.msra.mxu0 %v2477
        %2511 = vmatprep.subr.bf16.mxu0 0
        %2512 = vmatpush1.bf16.msra.mxu0 %v2478
        %2513 = vmatprep.subr.bf16.mxu0 0
        %2514 = vmatpush1.bf16.msra.mxu0 %v2479
        %2515 = vmatprep.subr.bf16.mxu0 0
        %2516 = vmatpush1.bf16.msra.mxu0 %v2480
        %2517 = vmatprep.subr.bf16.mxu0 0
        %2518 = vmatpush1.bf16.msra.mxu0 %v2481
        %2519 = vmatprep.subr.bf16.mxu0 0
        %2520 = vmatpush1.bf16.msra.mxu0 %v2482
        %2521 = vmatprep.subr.bf16.mxu0 0
        %2522 = vmatpush1.bf16.msra.mxu0 %v2483
        %2523 = vmatprep.subr.bf16.mxu0 0
        %2524 = vmatpush1.bf16.msra.mxu0 %v2484
        %2525 = vmatprep.subr.bf16.mxu0 0
        %2526 = vmatpush1.bf16.msra.mxu0 %v2485
        %2527 = vmatprep.subr.bf16.mxu0 0
        %2528 = vmatpush1.bf16.msra.mxu0 %v2486
        %2529 = vmatprep.subr.bf16.mxu0 0
        %2530 = vmatpush1.bf16.msra.mxu0 %v2487
        %2531 = vmatprep.subr.bf16.mxu0 0
        %2532 = vmatpush1.bf16.msra.mxu0 %v2488
        %2533 = vmatprep.subr.bf16.mxu0 0
        %2534 = vmatpush1.bf16.msra.mxu0 %v2489
        %2535 = vmatprep.subr.bf16.mxu0 0
        %2536 = vmatpush1.bf16.msra.mxu0 %v2490
        %2537 = vmatprep.subr.bf16.mxu0 0
        %2538 = vmatpush1.bf16.msra.mxu0 %v2491
        %2539 = vmatprep.subr.bf16.mxu0 0
        %2540 = vmatpush1.bf16.msra.mxu0 %v2492
        %2541 = vmatprep.mubr.bf16.mxu0 %v2211
        %2542 = vmatmul.mubr.bf16.gmra.mrb[0].mxu0 %v2210
        %v2543 = vpop.f32.mrb[0].mxu0
        %v2544 = vadd.f32 0.0, %v2543
        %v2545 = vpop.f32.mrb[0].mxu0
        %v2546 = vpop.f32.mrb[0].mxu0
        %v2547 = vpop.f32.mrb[0].mxu0
        %2548 = vdwg.mxu0
        %v2549 = vmax.f32 %v2375, %v2544
        %v2550 = vmax.f32 %v2549, 0.0
        %v2551 = vpack.c.bf16 %v2550, %v2550
        %v2552 = vld [vmem:[%s12] sm:$0x3]
        %vm2553 = vcmask 31744
        %v2555 = vsel %vm2553, %v2552, 0
        %vm2557 = vcmask 1041408
        %v2559 = vsel %vm2557, %v2551, 0
        %2561 = vmatprep.subr.bf16.mxu0 0
        %2562 = vmatpush1.bf16.msra.mxu0 %v2559
        %2563 = vmatprep.subr.bf16.mxu0 0
        %2564 = vmatpush1.bf16.msra.mxu0 0
        %2565 = vmatprep.subr.bf16.mxu0 0
        %2566 = vmatpush1.bf16.msra.mxu0 0
        %2567 = vmatprep.subr.bf16.mxu0 0
        %2568 = vmatpush1.bf16.msra.mxu0 0
        %2569 = vmatprep.subr.bf16.mxu0 0
        %2570 = vmatpush1.bf16.msra.mxu0 0
        %2571 = vmatprep.subr.bf16.mxu0 0
        %2572 = vmatpush1.bf16.msra.mxu0 0
        %2573 = vmatprep.subr.bf16.mxu0 0
        %2574 = vmatpush1.bf16.msra.mxu0 0
        %2575 = vmatprep.subr.bf16.mxu0 0
        %2576 = vmatpush1.bf16.msra.mxu0 0
        %2577 = vmatprep.subr.bf16.mxu0 0
        %2578 = vmatpush1.bf16.msra.mxu0 0
        %2579 = vmatprep.subr.bf16.mxu0 0
        %2580 = vmatpush1.bf16.msra.mxu0 0
        %2581 = vmatprep.subr.bf16.mxu0 0
        %2582 = vmatpush1.bf16.msra.mxu0 0
        %2583 = vmatprep.subr.bf16.mxu0 0
        %2584 = vmatpush1.bf16.msra.mxu0 0
        %2585 = vmatprep.subr.bf16.mxu0 0
        %2586 = vmatpush1.bf16.msra.mxu0 0
        %2587 = vmatprep.subr.bf16.mxu0 0
        %2588 = vmatpush1.bf16.msra.mxu0 0
        %2589 = vmatprep.subr.bf16.mxu0 0
        %2590 = vmatpush1.bf16.msra.mxu0 0
        %2591 = vmatprep.subr.bf16.mxu0 0
        %2592 = vmatpush1.bf16.msra.mxu0 0
        %2593 = vmatprep.mubr.bf16.mxu0 0
        %2594 = vmatmul.mubr.bf16.gmra.mrb[0].mxu0 %v2555
        %v2595 = vpop.f32.mrb[0].mxu0
        %v2596 = vadd.f32 0.0, %v2595
        %v2597 = vpop.f32.mrb[0].mxu0
        %v2598 = vpop.f32.mrb[0].mxu0
        %v2599 = vpop.f32.mrb[0].mxu0
        %2600 = vdwg.mxu0
        %v2601 = vpack.c.bf16 %v2596, %v2596
        %s2602 = scalar_lea.vmem %s12, 2
        %v2603 = vld [vmem:[%s2602] sm:$0x3]
        %v2605 = vsel %vm2553, %v2603, 0
        %2607 = vmatprep.subr.bf16.mxu0 0
        %2608 = vmatpush1.bf16.msra.mxu0 %v2559
        %2609 = vmatprep.subr.bf16.mxu0 0
        %2610 = vmatpush1.bf16.msra.mxu0 0
        %2611 = vmatprep.subr.bf16.mxu0 0
        %2612 = vmatpush1.bf16.msra.mxu0 0
        %2613 = vmatprep.subr.bf16.mxu0 0
        %2614 = vmatpush1.bf16.msra.mxu0 0
        %2615 = vmatprep.subr.bf16.mxu0 0
        %2616 = vmatpush1.bf16.msra.mxu0 0
        %2617 = vmatprep.subr.bf16.mxu0 0
        %2618 = vmatpush1.bf16.msra.mxu0 0
        %2619 = vmatprep.subr.bf16.mxu0 0
        %2620 = vmatpush1.bf16.msra.mxu0 0
        %2621 = vmatprep.subr.bf16.mxu0 0
        %2622 = vmatpush1.bf16.msra.mxu0 0
        %2623 = vmatprep.subr.bf16.mxu0 0
        %2624 = vmatpush1.bf16.msra.mxu0 0
        %2625 = vmatprep.subr.bf16.mxu0 0
        %2626 = vmatpush1.bf16.msra.mxu0 0
        %2627 = vmatprep.subr.bf16.mxu0 0
        %2628 = vmatpush1.bf16.msra.mxu0 0
        %2629 = vmatprep.subr.bf16.mxu0 0
        %2630 = vmatpush1.bf16.msra.mxu0 0
        %2631 = vmatprep.subr.bf16.mxu0 0
        %2632 = vmatpush1.bf16.msra.mxu0 0
        %2633 = vmatprep.subr.bf16.mxu0 0
        %2634 = vmatpush1.bf16.msra.mxu0 0
        %2635 = vmatprep.subr.bf16.mxu0 0
        %2636 = vmatpush1.bf16.msra.mxu0 0
        %2637 = vmatprep.subr.bf16.mxu0 0
        %2638 = vmatpush1.bf16.msra.mxu0 0
        %2639 = vmatprep.mubr.bf16.mxu0 0
        %2640 = vmatmul.mubr.bf16.gmra.mrb[0].mxu0 %v2605
        %v2641 = vpop.f32.mrb[0].mxu0
        %v2642 = vadd.f32 0.0, %v2641
        %v2643 = vpop.f32.mrb[0].mxu0
        %v2644 = vpop.f32.mrb[0].mxu0
        %v2645 = vpop.f32.mrb[0].mxu0
        %2646 = vdwg.mxu0
        %v2647 = vpack.c.bf16 %v2642, %v2642
        %s2648 = scalar_lea.vmem [#allocation11], 128
        %v2649 = vld [vmem:[%s2648] sm:$0xff]
        %v2650 = vld [vmem:[%s2648 + $0x8] sm:$0xff]
        %v2651 = vld [vmem:[%s2648 + $0x10] sm:$0xff]
        %v2652 = vld [vmem:[%s2648 + $0x18] sm:$0xff]
        %v2653 = vld [vmem:[%s2648 + $0x20] sm:$0xff]
        %v2654 = vld [vmem:[%s2648 + $0x28] sm:$0xff]
        %v2655 = vld [vmem:[%s2648 + $0x30] sm:$0xff]
        %v2656 = vld [vmem:[%s2648 + $0x38] sm:$0xff]
        %v2657 = vld [vmem:[%s2648 + $0x40] sm:$0xff]
        %v2658 = vld [vmem:[%s2648 + $0x48] sm:$0xff]
        %v2659 = vld [vmem:[%s2648 + $0x50] sm:$0xff]
        %v2660 = vld [vmem:[%s2648 + $0x58] sm:$0xff]
        %v2661 = vld [vmem:[%s2648 + $0x60] sm:$0xff]
        %v2662 = vld [vmem:[%s2648 + $0x68] sm:$0xff]
        %v2663 = vld [vmem:[%s2648 + $0x70] sm:$0xff]
        %v2664 = vld [vmem:[%s2648 + $0x78] sm:$0xff]
        %v2665 = vld [vmem:[#allocation11] sm:$0xff]
        %v2666 = vld [vmem:[#allocation11 + $0x8] sm:$0xff]
        %v2667 = vld [vmem:[#allocation11 + $0x10] sm:$0xff]
        %v2668 = vld [vmem:[#allocation11 + $0x18] sm:$0xff]
        %v2669 = vld [vmem:[#allocation11 + $0x20] sm:$0xff]
        %v2670 = vld [vmem:[#allocation11 + $0x28] sm:$0xff]
        %v2671 = vld [vmem:[#allocation11 + $0x30] sm:$0xff]
        %v2672 = vld [vmem:[#allocation11 + $0x38] sm:$0xff]
        %v2673 = vld [vmem:[#allocation11 + $0x40] sm:$0xff]
        %v2674 = vld [vmem:[#allocation11 + $0x48] sm:$0xff]
        %v2675 = vld [vmem:[#allocation11 + $0x50] sm:$0xff]
        %v2676 = vld [vmem:[#allocation11 + $0x58] sm:$0xff]
        %v2677 = vld [vmem:[#allocation11 + $0x60] sm:$0xff]
        %v2678 = vld [vmem:[#allocation11 + $0x68] sm:$0xff]
        %v2679 = vld [vmem:[#allocation11 + $0x70] sm:$0xff]
        %v2680 = vld [vmem:[#allocation11 + $0x78] sm:$0xff]
        %v2697 = vunpack.c.l.b16 %v2665
        %v2698 = vunpack.c.h.b16 %v2665
        %v2699 = vunpack.c.l.b16 %v2666
        %v2700 = vunpack.c.h.b16 %v2666
        %v2701 = vunpack.c.l.b16 %v2667
        %v2702 = vunpack.c.h.b16 %v2667
        %v2703 = vunpack.c.l.b16 %v2668
        %v2704 = vunpack.c.h.b16 %v2668
        %v2705 = vunpack.c.l.b16 %v2669
        %v2706 = vunpack.c.h.b16 %v2669
        %v2707 = vunpack.c.l.b16 %v2670
        %v2708 = vunpack.c.h.b16 %v2670
        %v2709 = vunpack.c.l.b16 %v2671
        %v2710 = vunpack.c.h.b16 %v2671
        %v2711 = vunpack.c.l.b16 %v2672
        %v2712 = vunpack.c.h.b16 %v2672
        %v2713 = vunpack.c.l.b16 %v2673
        %v2714 = vunpack.c.h.b16 %v2673
        %v2715 = vunpack.c.l.b16 %v2674
        %v2716 = vunpack.c.h.b16 %v2674
        %v2717 = vunpack.c.l.b16 %v2675
        %v2718 = vunpack.c.h.b16 %v2675
        %v2719 = vunpack.c.l.b16 %v2676
        %v2720 = vunpack.c.h.b16 %v2676
        %v2721 = vunpack.c.l.b16 %v2677
        %v2722 = vunpack.c.h.b16 %v2677
        %v2723 = vunpack.c.l.b16 %v2678
        %v2724 = vunpack.c.h.b16 %v2678
        %v2725 = vunpack.c.l.b16 %v2679
        %v2726 = vunpack.c.h.b16 %v2679
        %v2727 = vunpack.c.l.b16 %v2680
        %v2728 = vunpack.c.h.b16 %v2680
        %v2729 = vpack.c.b16 %v2699, %v2697
        %v2730 = vpack.c.b16 %v2700, %v2698
        %v2731 = vpack.c.b16 %v2703, %v2701
        %v2732 = vpack.c.b16 %v2704, %v2702
        %v2733 = vpack.c.b16 %v2707, %v2705
        %v2734 = vpack.c.b16 %v2708, %v2706
        %v2735 = vpack.c.b16 %v2711, %v2709
        %v2736 = vpack.c.b16 %v2712, %v2710
        %v2737 = vpack.c.b16 %v2715, %v2713
        %v2738 = vpack.c.b16 %v2716, %v2714
        %v2739 = vpack.c.b16 %v2719, %v2717
        %v2740 = vpack.c.b16 %v2720, %v2718
        %v2741 = vpack.c.b16 %v2723, %v2721
        %v2742 = vpack.c.b16 %v2724, %v2722
        %v2743 = vpack.c.b16 %v2727, %v2725
        %v2744 = vpack.c.b16 %v2728, %v2726
        %2761 = vmatprep.subr.bf16.mxu0 %v2730
        %2762 = vmatpush1.bf16.msra.mxu0 %v2729
        %2763 = vmatprep.subr.bf16.mxu0 %v2732
        %2764 = vmatpush1.bf16.msra.mxu0 %v2731
        %2765 = vmatprep.subr.bf16.mxu0 %v2734
        %2766 = vmatpush1.bf16.msra.mxu0 %v2733
        %2767 = vmatprep.subr.bf16.mxu0 %v2736
        %2768 = vmatpush1.bf16.msra.mxu0 %v2735
        %2769 = vmatprep.subr.bf16.mxu0 %v2738
        %2770 = vmatpush1.bf16.msra.mxu0 %v2737
        %2771 = vmatprep.subr.bf16.mxu0 %v2740
        %2772 = vmatpush1.bf16.msra.mxu0 %v2739
        %2773 = vmatprep.subr.bf16.mxu0 %v2742
        %2774 = vmatpush1.bf16.msra.mxu0 %v2741
        %2775 = vmatprep.subr.bf16.mxu0 %v2744
        %2776 = vmatpush1.bf16.msra.mxu0 %v2743
        %2777 = vmatprep.subr.bf16.mxu0 0
        %2778 = vmatpush1.bf16.msra.mxu0 0
        %2779 = vmatprep.subr.bf16.mxu0 0
        %2780 = vmatpush1.bf16.msra.mxu0 0
        %2781 = vmatprep.subr.bf16.mxu0 0
        %2782 = vmatpush1.bf16.msra.mxu0 0
        %2783 = vmatprep.subr.bf16.mxu0 0
        %2784 = vmatpush1.bf16.msra.mxu0 0
        %2785 = vmatprep.subr.bf16.mxu0 0
        %2786 = vmatpush1.bf16.msra.mxu0 0
        %2787 = vmatprep.subr.bf16.mxu0 0
        %2788 = vmatpush1.bf16.msra.mxu0 0
        %2789 = vmatprep.subr.bf16.mxu0 0
        %2790 = vmatpush1.bf16.msra.mxu0 0
        %2791 = vmatprep.subr.bf16.mxu0 0
        %2792 = vmatpush1.bf16.msra.mxu0 0
        %2793 = vmatprep.mubr.bf16.mxu0 0
        %2794 = vmatmul.mubr.bf16.gmra.mrb[0].mxu0 %v2601
        %v2795 = vpop.f32.mrb[0].mxu0
        %v2796 = vadd.f32 0.0, %v2795
        %v2797 = vpop.f32.mrb[0].mxu0
        %v2798 = vadd.f32 0.0, %v2797
        %v2799 = vpop.f32.mrb[0].mxu0
        %v2800 = vpop.f32.mrb[0].mxu0
        %2801 = vdwg.mxu0
        %v2818 = vunpack.c.l.b16 %v2649
        %v2819 = vunpack.c.h.b16 %v2649
        %v2820 = vunpack.c.l.b16 %v2650
        %v2821 = vunpack.c.h.b16 %v2650
        %v2822 = vunpack.c.l.b16 %v2651
        %v2823 = vunpack.c.h.b16 %v2651
        %v2824 = vunpack.c.l.b16 %v2652
        %v2825 = vunpack.c.h.b16 %v2652
        %v2826 = vunpack.c.l.b16 %v2653
        %v2827 = vunpack.c.h.b16 %v2653
        %v2828 = vunpack.c.l.b16 %v2654
        %v2829 = vunpack.c.h.b16 %v2654
        %v2830 = vunpack.c.l.b16 %v2655
        %v2831 = vunpack.c.h.b16 %v2655
        %v2832 = vunpack.c.l.b16 %v2656
        %v2833 = vunpack.c.h.b16 %v2656
        %v2834 = vunpack.c.l.b16 %v2657
        %v2835 = vunpack.c.h.b16 %v2657
        %v2836 = vunpack.c.l.b16 %v2658
        %v2837 = vunpack.c.h.b16 %v2658
        %v2838 = vunpack.c.l.b16 %v2659
        %v2839 = vunpack.c.h.b16 %v2659
        %v2840 = vunpack.c.l.b16 %v2660
        %v2841 = vunpack.c.h.b16 %v2660
        %v2842 = vunpack.c.l.b16 %v2661
        %v2843 = vunpack.c.h.b16 %v2661
        %v2844 = vunpack.c.l.b16 %v2662
        %v2845 = vunpack.c.h.b16 %v2662
        %v2846 = vunpack.c.l.b16 %v2663
        %v2847 = vunpack.c.h.b16 %v2663
        %v2848 = vunpack.c.l.b16 %v2664
        %v2849 = vunpack.c.h.b16 %v2664
        %v2850 = vpack.c.b16 %v2820, %v2818
        %v2851 = vpack.c.b16 %v2821, %v2819
        %v2852 = vpack.c.b16 %v2824, %v2822
        %v2853 = vpack.c.b16 %v2825, %v2823
        %v2854 = vpack.c.b16 %v2828, %v2826
        %v2855 = vpack.c.b16 %v2829, %v2827
        %v2856 = vpack.c.b16 %v2832, %v2830
        %v2857 = vpack.c.b16 %v2833, %v2831
        %v2858 = vpack.c.b16 %v2836, %v2834
        %v2859 = vpack.c.b16 %v2837, %v2835
        %v2860 = vpack.c.b16 %v2840, %v2838
        %v2861 = vpack.c.b16 %v2841, %v2839
        %v2862 = vpack.c.b16 %v2844, %v2842
        %v2863 = vpack.c.b16 %v2845, %v2843
        %v2864 = vpack.c.b16 %v2848, %v2846
        %v2865 = vpack.c.b16 %v2849, %v2847
        %2882 = vmatprep.subr.bf16.mxu0 %v2851
        %2883 = vmatpush1.bf16.msra.mxu0 %v2850
        %2884 = vmatprep.subr.bf16.mxu0 %v2853
        %2885 = vmatpush1.bf16.msra.mxu0 %v2852
        %2886 = vmatprep.subr.bf16.mxu0 %v2855
        %2887 = vmatpush1.bf16.msra.mxu0 %v2854
        %2888 = vmatprep.subr.bf16.mxu0 %v2857
        %2889 = vmatpush1.bf16.msra.mxu0 %v2856
        %2890 = vmatprep.subr.bf16.mxu0 %v2859
        %2891 = vmatpush1.bf16.msra.mxu0 %v2858
        %2892 = vmatprep.subr.bf16.mxu0 %v2861
        %2893 = vmatpush1.bf16.msra.mxu0 %v2860
        %2894 = vmatprep.subr.bf16.mxu0 %v2863
        %2895 = vmatpush1.bf16.msra.mxu0 %v2862
        %2896 = vmatprep.subr.bf16.mxu0 %v2865
        %2897 = vmatpush1.bf16.msra.mxu0 %v2864
        %2898 = vmatprep.subr.bf16.mxu0 0
        %2899 = vmatpush1.bf16.msra.mxu0 0
        %2900 = vmatprep.subr.bf16.mxu0 0
        %2901 = vmatpush1.bf16.msra.mxu0 0
        %2902 = vmatprep.subr.bf16.mxu0 0
        %2903 = vmatpush1.bf16.msra.mxu0 0
        %2904 = vmatprep.subr.bf16.mxu0 0
        %2905 = vmatpush1.bf16.msra.mxu0 0
        %2906 = vmatprep.subr.bf16.mxu0 0
        %2907 = vmatpush1.bf16.msra.mxu0 0
        %2908 = vmatprep.subr.bf16.mxu0 0
        %2909 = vmatpush1.bf16.msra.mxu0 0
        %2910 = vmatprep.subr.bf16.mxu0 0
        %2911 = vmatpush1.bf16.msra.mxu0 0
        %2912 = vmatprep.subr.bf16.mxu0 0
        %2913 = vmatpush1.bf16.msra.mxu0 0
        %2914 = vmatprep.mubr.bf16.mxu0 0
        %2915 = vmatmul.mubr.bf16.gmra.mrb[0].mxu0 %v2551
        %v2916 = vpop.f32.mrb[0].mxu0
        %v2917 = vadd.f32 %v2796, %v2916
        %v2918 = vpop.f32.mrb[0].mxu0
        %v2919 = vadd.f32 %v2798, %v2918
        %v2920 = vpop.f32.mrb[0].mxu0
        %v2921 = vpop.f32.mrb[0].mxu0
        %2922 = vdwg.mxu0
        %s2923 = scalar_lea.vmem [#allocation11], 256
        %v2924 = vld [vmem:[%s2923] sm:$0xff]
        %v2925 = vld [vmem:[%s2923 + $0x8] sm:$0xff]
        %v2926 = vld [vmem:[%s2923 + $0x10] sm:$0xff]
        %v2927 = vld [vmem:[%s2923 + $0x18] sm:$0xff]
        %v2928 = vld [vmem:[%s2923 + $0x20] sm:$0xff]
        %v2929 = vld [vmem:[%s2923 + $0x28] sm:$0xff]
        %v2930 = vld [vmem:[%s2923 + $0x30] sm:$0xff]
        %v2931 = vld [vmem:[%s2923 + $0x38] sm:$0xff]
        %v2932 = vld [vmem:[%s2923 + $0x40] sm:$0xff]
        %v2933 = vld [vmem:[%s2923 + $0x48] sm:$0xff]
        %v2934 = vld [vmem:[%s2923 + $0x50] sm:$0xff]
        %v2935 = vld [vmem:[%s2923 + $0x58] sm:$0xff]
        %v2936 = vld [vmem:[%s2923 + $0x60] sm:$0xff]
        %v2937 = vld [vmem:[%s2923 + $0x68] sm:$0xff]
        %v2938 = vld [vmem:[%s2923 + $0x70] sm:$0xff]
        %v2939 = vld [vmem:[%s2923 + $0x78] sm:$0xff]
        %v2956 = vunpack.c.l.b16 %v2924
        %v2957 = vunpack.c.h.b16 %v2924
        %v2958 = vunpack.c.l.b16 %v2925
        %v2959 = vunpack.c.h.b16 %v2925
        %v2960 = vunpack.c.l.b16 %v2926
        %v2961 = vunpack.c.h.b16 %v2926
        %v2962 = vunpack.c.l.b16 %v2927
        %v2963 = vunpack.c.h.b16 %v2927
        %v2964 = vunpack.c.l.b16 %v2928
        %v2965 = vunpack.c.h.b16 %v2928
        %v2966 = vunpack.c.l.b16 %v2929
        %v2967 = vunpack.c.h.b16 %v2929
        %v2968 = vunpack.c.l.b16 %v2930
        %v2969 = vunpack.c.h.b16 %v2930
        %v2970 = vunpack.c.l.b16 %v2931
        %v2971 = vunpack.c.h.b16 %v2931
        %v2972 = vunpack.c.l.b16 %v2932
        %v2973 = vunpack.c.h.b16 %v2932
        %v2974 = vunpack.c.l.b16 %v2933
        %v2975 = vunpack.c.h.b16 %v2933
        %v2976 = vunpack.c.l.b16 %v2934
        %v2977 = vunpack.c.h.b16 %v2934
        %v2978 = vunpack.c.l.b16 %v2935
        %v2979 = vunpack.c.h.b16 %v2935
        %v2980 = vunpack.c.l.b16 %v2936
        %v2981 = vunpack.c.h.b16 %v2936
        %v2982 = vunpack.c.l.b16 %v2937
        %v2983 = vunpack.c.h.b16 %v2937
        %v2984 = vunpack.c.l.b16 %v2938
        %v2985 = vunpack.c.h.b16 %v2938
        %v2986 = vunpack.c.l.b16 %v2939
        %v2987 = vunpack.c.h.b16 %v2939
        %v2988 = vpack.c.b16 %v2958, %v2956
        %v2989 = vpack.c.b16 %v2959, %v2957
        %v2990 = vpack.c.b16 %v2962, %v2960
        %v2991 = vpack.c.b16 %v2963, %v2961
        %v2992 = vpack.c.b16 %v2966, %v2964
        %v2993 = vpack.c.b16 %v2967, %v2965
        %v2994 = vpack.c.b16 %v2970, %v2968
        %v2995 = vpack.c.b16 %v2971, %v2969
        %v2996 = vpack.c.b16 %v2974, %v2972
        %v2997 = vpack.c.b16 %v2975, %v2973
        %v2998 = vpack.c.b16 %v2978, %v2976
        %v2999 = vpack.c.b16 %v2979, %v2977
        %v3000 = vpack.c.b16 %v2982, %v2980
        %v3001 = vpack.c.b16 %v2983, %v2981
        %v3002 = vpack.c.b16 %v2986, %v2984
        %v3003 = vpack.c.b16 %v2987, %v2985
        %3020 = vmatprep.subr.bf16.mxu0 %v2989
        %3021 = vmatpush1.bf16.msra.mxu0 %v2988
        %3022 = vmatprep.subr.bf16.mxu0 %v2991
        %3023 = vmatpush1.bf16.msra.mxu0 %v2990
        %3024 = vmatprep.subr.bf16.mxu0 %v2993
        %3025 = vmatpush1.bf16.msra.mxu0 %v2992
        %3026 = vmatprep.subr.bf16.mxu0 %v2995
        %3027 = vmatpush1.bf16.msra.mxu0 %v2994
        %3028 = vmatprep.subr.bf16.mxu0 %v2997
        %3029 = vmatpush1.bf16.msra.mxu0 %v2996
        %3030 = vmatprep.subr.bf16.mxu0 %v2999
        %3031 = vmatpush1.bf16.msra.mxu0 %v2998
        %3032 = vmatprep.subr.bf16.mxu0 %v3001
        %3033 = vmatpush1.bf16.msra.mxu0 %v3000
        %3034 = vmatprep.subr.bf16.mxu0 %v3003
        %3035 = vmatpush1.bf16.msra.mxu0 %v3002
        %3036 = vmatprep.subr.bf16.mxu0 0
        %3037 = vmatpush1.bf16.msra.mxu0 0
        %3038 = vmatprep.subr.bf16.mxu0 0
        %3039 = vmatpush1.bf16.msra.mxu0 0
        %3040 = vmatprep.subr.bf16.mxu0 0
        %3041 = vmatpush1.bf16.msra.mxu0 0
        %3042 = vmatprep.subr.bf16.mxu0 0
        %3043 = vmatpush1.bf16.msra.mxu0 0
        %3044 = vmatprep.subr.bf16.mxu0 0
        %3045 = vmatpush1.bf16.msra.mxu0 0
        %3046 = vmatprep.subr.bf16.mxu0 0
        %3047 = vmatpush1.bf16.msra.mxu0 0
        %3048 = vmatprep.subr.bf16.mxu0 0
        %3049 = vmatpush1.bf16.msra.mxu0 0
        %3050 = vmatprep.subr.bf16.mxu0 0
        %3051 = vmatpush1.bf16.msra.mxu0 0
        %3052 = vmatprep.mubr.bf16.mxu0 0
        %3053 = vmatmul.mubr.bf16.gmra.mrb[0].mxu0 %v2647
        %v3054 = vpop.f32.mrb[0].mxu0
        %v3055 = vadd.f32 0.0, %v3054
        %v3056 = vpop.f32.mrb[0].mxu0
        %v3057 = vadd.f32 0.0, %v3056
        %v3058 = vpop.f32.mrb[0].mxu0
        %v3059 = vpop.f32.mrb[0].mxu0
        %3060 = vdwg.mxu0
        %v3061 = vadd.f32 %v2917, %v3055
        %v3062 = vadd.f32 %v2919, %v3057
        %v3063 = vld [vmem:[%s15] sm:$0x3]
        %v3065 = vlaneseq
        %v3066 = vshrl.u32 %v3065, 7
        %v3067 = vsub.s32 0, %v3066
        %v3068 = vrot.slane %v3063, %v3067
        %v3069 = vlaneseq
        %v3070 = vshrl.u32 %v3069, 7
        %v3071 = vsub.s32 1, %v3070
        %v3072 = vrot.slane %v3063, %v3071
        %v3075 = vadd.f32 %v3061, %v3068
        %v3076 = vadd.f32 %v3062, %v3072
        %v3077 = vpack.c.bf16 %v3075, %v3075
        %v3078 = vpack.c.bf16 %v3076, %v3076
        %v3079 = vld [vmem:[%s13] sm:$0x1]
        %v3081 = vsel %vm2553, %v3079, 0
        %v3084 = vsel %vm2557, %v3077, 0
        %v3087 = vsel %vm2557, %v3078, 0
        %3089 = vmatprep.subr.bf16.mxu0 %v3087
        %3090 = vmatpush1.bf16.msra.mxu0 %v3084
        %3091 = vmatprep.subr.bf16.mxu0 0
        %3092 = vmatpush1.bf16.msra.mxu0 0
        %3093 = vmatprep.subr.bf16.mxu0 0
        %3094 = vmatpush1.bf16.msra.mxu0 0
        %3095 = vmatprep.subr.bf16.mxu0 0
        %3096 = vmatpush1.bf16.msra.mxu0 0
        %3097 = vmatprep.subr.bf16.mxu0 0
        %3098 = vmatpush1.bf16.msra.mxu0 0
        %3099 = vmatprep.subr.bf16.mxu0 0
        %3100 = vmatpush1.bf16.msra.mxu0 0
        %3101 = vmatprep.subr.bf16.mxu0 0
        %3102 = vmatpush1.bf16.msra.mxu0 0
        %3103 = vmatprep.subr.bf16.mxu0 0
        %3104 = vmatpush1.bf16.msra.mxu0 0
        %3105 = vmatprep.subr.bf16.mxu0 0
        %3106 = vmatpush1.bf16.msra.mxu0 0
        %3107 = vmatprep.subr.bf16.mxu0 0
        %3108 = vmatpush1.bf16.msra.mxu0 0
        %3109 = vmatprep.subr.bf16.mxu0 0
        %3110 = vmatpush1.bf16.msra.mxu0 0
        %3111 = vmatprep.subr.bf16.mxu0 0
        %3112 = vmatpush1.bf16.msra.mxu0 0
        %3113 = vmatprep.subr.bf16.mxu0 0
        %3114 = vmatpush1.bf16.msra.mxu0 0
        %3115 = vmatprep.subr.bf16.mxu0 0
        %3116 = vmatpush1.bf16.msra.mxu0 0
        %3117 = vmatprep.subr.bf16.mxu0 0
        %3118 = vmatpush1.bf16.msra.mxu0 0
        %3119 = vmatprep.subr.bf16.mxu0 0
        %3120 = vmatpush1.bf16.msra.mxu0 0
        %3121 = vmatprep.mubr.bf16.mxu0 0
        %3122 = vmatmul.mubr.bf16.gmra.mrb[0].mxu0 %v3081
        %v3123 = vpop.f32.mrb[0].mxu0
        %v3124 = vadd.f32 0.0, %v3123
        %v3125 = vpop.f32.mrb[0].mxu0
        %v3126 = vadd.f32 0.0, %v3125
        %v3127 = vpop.f32.mrb[0].mxu0
        %v3128 = vpop.f32.mrb[0].mxu0
        %3129 = vdwg.mxu0
        %s3130 = scalar_lea.vmem %s13, 1
        %v3131 = vld [vmem:[%s3130] sm:$0x1]
        %v3133 = vsel %vm2553, %v3131, 0
        %3135 = vmatprep.subr.bf16.mxu0 %v3087
        %3136 = vmatpush1.bf16.msra.mxu0 %v3084
        %3137 = vmatprep.subr.bf16.mxu0 0
        %3138 = vmatpush1.bf16.msra.mxu0 0
        %3139 = vmatprep.subr.bf16.mxu0 0
        %3140 = vmatpush1.bf16.msra.mxu0 0
        %3141 = vmatprep.subr.bf16.mxu0 0
        %3142 = vmatpush1.bf16.msra.mxu0 0
        %3143 = vmatprep.subr.bf16.mxu0 0
        %3144 = vmatpush1.bf16.msra.mxu0 0
        %3145 = vmatprep.subr.bf16.mxu0 0
        %3146 = vmatpush1.bf16.msra.mxu0 0
        %3147 = vmatprep.subr.bf16.mxu0 0
        %3148 = vmatpush1.bf16.msra.mxu0 0
        %3149 = vmatprep.subr.bf16.mxu0 0
        %3150 = vmatpush1.bf16.msra.mxu0 0
        %3151 = vmatprep.subr.bf16.mxu0 0
        %3152 = vmatpush1.bf16.msra.mxu0 0
        %3153 = vmatprep.subr.bf16.mxu0 0
        %3154 = vmatpush1.bf16.msra.mxu0 0
        %3155 = vmatprep.subr.bf16.mxu0 0
        %3156 = vmatpush1.bf16.msra.mxu0 0
        %3157 = vmatprep.subr.bf16.mxu0 0
        %3158 = vmatpush1.bf16.msra.mxu0 0
        %3159 = vmatprep.subr.bf16.mxu0 0
        %3160 = vmatpush1.bf16.msra.mxu0 0
        %3161 = vmatprep.subr.bf16.mxu0 0
        %3162 = vmatpush1.bf16.msra.mxu0 0
        %3163 = vmatprep.subr.bf16.mxu0 0
        %3164 = vmatpush1.bf16.msra.mxu0 0
        %3165 = vmatprep.subr.bf16.mxu0 0
        %3166 = vmatpush1.bf16.msra.mxu0 0
        %3167 = vmatprep.mubr.bf16.mxu0 0
        %3168 = vmatmul.mubr.bf16.gmra.mrb[0].mxu0 %v3133
        %v3169 = vpop.f32.mrb[0].mxu0
        %v3170 = vadd.f32 0.0, %v3169
        %v3171 = vpop.f32.mrb[0].mxu0
        %v3172 = vadd.f32 0.0, %v3171
        %v3173 = vpop.f32.mrb[0].mxu0
        %v3174 = vpop.f32.mrb[0].mxu0
        %3175 = vdwg.mxu0
        %v3176 = vmax.f32 %v3124, %v3170
        %v3177 = vmax.f32 %v3126, %v3172
        %v3178 = vpack.c.bf16 %v3176, %v3176
        %v3179 = vpack.c.bf16 %v3177, %v3177
        %v3180 = vld [vmem:[#allocation13] sm:$0xf]
        %v3181 = vld [vmem:[#allocation13 + $0x4] sm:$0xf]
        %v3182 = vld [vmem:[#allocation13 + $0x8] sm:$0xf]
        %v3183 = vld [vmem:[#allocation13 + $0xc] sm:$0xf]
        %v3184 = vld [vmem:[#allocation13 + $0x10] sm:$0xf]
        %v3185 = vld [vmem:[#allocation13 + $0x14] sm:$0xf]
        %v3186 = vld [vmem:[#allocation13 + $0x18] sm:$0xf]
        %v3187 = vld [vmem:[#allocation13 + $0x1c] sm:$0xf]
        %v3188 = vld [vmem:[#allocation13 + $0x20] sm:$0xf]
        %v3189 = vld [vmem:[#allocation13 + $0x24] sm:$0xf]
        %v3190 = vld [vmem:[#allocation13 + $0x28] sm:$0xf]
        %v3191 = vld [vmem:[#allocation13 + $0x2c] sm:$0xf]
        %v3192 = vld [vmem:[#allocation13 + $0x30] sm:$0xf]
        %v3193 = vld [vmem:[#allocation13 + $0x34] sm:$0xf]
        %v3194 = vld [vmem:[#allocation13 + $0x38] sm:$0xf]
        %v3195 = vld [vmem:[#allocation13 + $0x3c] sm:$0xf]
        %v3196 = vld [vmem:[#allocation13 + $0x40] sm:$0xf]
        %v3197 = vld [vmem:[#allocation13 + $0x44] sm:$0xf]
        %v3198 = vld [vmem:[#allocation13 + $0x48] sm:$0xf]
        %v3199 = vld [vmem:[#allocation13 + $0x4c] sm:$0xf]
        %v3200 = vld [vmem:[#allocation13 + $0x50] sm:$0xf]
        %v3201 = vld [vmem:[#allocation13 + $0x54] sm:$0xf]
        %v3202 = vld [vmem:[#allocation13 + $0x58] sm:$0xf]
        %v3203 = vld [vmem:[#allocation13 + $0x5c] sm:$0xf]
        %v3204 = vld [vmem:[#allocation13 + $0x60] sm:$0xf]
        %v3205 = vld [vmem:[#allocation13 + $0x64] sm:$0xf]
        %v3206 = vld [vmem:[#allocation13 + $0x68] sm:$0xf]
        %v3207 = vld [vmem:[#allocation13 + $0x6c] sm:$0xf]
        %v3208 = vld [vmem:[#allocation13 + $0x70] sm:$0xf]
        %v3209 = vld [vmem:[#allocation13 + $0x74] sm:$0xf]
        %v3210 = vld [vmem:[#allocation13 + $0x78] sm:$0xf]
        %v3211 = vld [vmem:[#allocation13 + $0x7c] sm:$0xf]
        %v3244 = vunpack.c.l.b16 %v3180
        %v3245 = vunpack.c.l.b16 %v3181
        %v3246 = vunpack.c.l.b16 %v3182
        %v3247 = vunpack.c.l.b16 %v3183
        %v3248 = vunpack.c.l.b16 %v3184
        %v3249 = vunpack.c.l.b16 %v3185
        %v3250 = vunpack.c.l.b16 %v3186
        %v3251 = vunpack.c.l.b16 %v3187
        %v3252 = vunpack.c.l.b16 %v3188
        %v3253 = vunpack.c.l.b16 %v3189
        %v3254 = vunpack.c.l.b16 %v3190
        %v3255 = vunpack.c.l.b16 %v3191
        %v3256 = vunpack.c.l.b16 %v3192
        %v3257 = vunpack.c.l.b16 %v3193
        %v3258 = vunpack.c.l.b16 %v3194
        %v3259 = vunpack.c.l.b16 %v3195
        %v3260 = vunpack.c.l.b16 %v3196
        %v3261 = vunpack.c.l.b16 %v3197
        %v3262 = vunpack.c.l.b16 %v3198
        %v3263 = vunpack.c.l.b16 %v3199
        %v3264 = vunpack.c.l.b16 %v3200
        %v3265 = vunpack.c.l.b16 %v3201
        %v3266 = vunpack.c.l.b16 %v3202
        %v3267 = vunpack.c.l.b16 %v3203
        %v3268 = vunpack.c.l.b16 %v3204
        %v3269 = vunpack.c.l.b16 %v3205
        %v3270 = vunpack.c.l.b16 %v3206
        %v3271 = vunpack.c.l.b16 %v3207
        %v3272 = vunpack.c.l.b16 %v3208
        %v3273 = vunpack.c.l.b16 %v3209
        %v3274 = vunpack.c.l.b16 %v3210
        %v3275 = vunpack.c.l.b16 %v3211
        %v3276 = vpack.c.b16 %v3245, %v3244
        %v3277 = vpack.c.b16 %v3247, %v3246
        %v3278 = vpack.c.b16 %v3249, %v3248
        %v3279 = vpack.c.b16 %v3251, %v3250
        %v3280 = vpack.c.b16 %v3253, %v3252
        %v3281 = vpack.c.b16 %v3255, %v3254
        %v3282 = vpack.c.b16 %v3257, %v3256
        %v3283 = vpack.c.b16 %v3259, %v3258
        %v3284 = vpack.c.b16 %v3261, %v3260
        %v3285 = vpack.c.b16 %v3263, %v3262
        %v3286 = vpack.c.b16 %v3265, %v3264
        %v3287 = vpack.c.b16 %v3267, %v3266
        %v3288 = vpack.c.b16 %v3269, %v3268
        %v3289 = vpack.c.b16 %v3271, %v3270
        %v3290 = vpack.c.b16 %v3273, %v3272
        %v3291 = vpack.c.b16 %v3275, %v3274
        %3308 = vmatprep.subr.bf16.mxu0 0
        %3309 = vmatpush1.bf16.msra.mxu0 %v3276
        %3310 = vmatprep.subr.bf16.mxu0 0
        %3311 = vmatpush1.bf16.msra.mxu0 %v3277
        %3312 = vmatprep.subr.bf16.mxu0 0
        %3313 = vmatpush1.bf16.msra.mxu0 %v3278
        %3314 = vmatprep.subr.bf16.mxu0 0
        %3315 = vmatpush1.bf16.msra.mxu0 %v3279
        %3316 = vmatprep.subr.bf16.mxu0 0
        %3317 = vmatpush1.bf16.msra.mxu0 %v3280
        %3318 = vmatprep.subr.bf16.mxu0 0
        %3319 = vmatpush1.bf16.msra.mxu0 %v3281
        %3320 = vmatprep.subr.bf16.mxu0 0
        %3321 = vmatpush1.bf16.msra.mxu0 %v3282
        %3322 = vmatprep.subr.bf16.mxu0 0
        %3323 = vmatpush1.bf16.msra.mxu0 %v3283
        %3324 = vmatprep.subr.bf16.mxu0 0
        %3325 = vmatpush1.bf16.msra.mxu0 %v3284
        %3326 = vmatprep.subr.bf16.mxu0 0
        %3327 = vmatpush1.bf16.msra.mxu0 %v3285
        %3328 = vmatprep.subr.bf16.mxu0 0
        %3329 = vmatpush1.bf16.msra.mxu0 %v3286
        %3330 = vmatprep.subr.bf16.mxu0 0
        %3331 = vmatpush1.bf16.msra.mxu0 %v3287
        %3332 = vmatprep.subr.bf16.mxu0 0
        %3333 = vmatpush1.bf16.msra.mxu0 %v3288
        %3334 = vmatprep.subr.bf16.mxu0 0
        %3335 = vmatpush1.bf16.msra.mxu0 %v3289
        %3336 = vmatprep.subr.bf16.mxu0 0
        %3337 = vmatpush1.bf16.msra.mxu0 %v3290
        %3338 = vmatprep.subr.bf16.mxu0 0
        %3339 = vmatpush1.bf16.msra.mxu0 %v3291
        %3340 = vmatprep.mubr.bf16.mxu0 %v3179
        %3341 = vmatmul.mubr.bf16.gmra.mrb[0].mxu0 %v3178
        %v3342 = vpop.f32.mrb[0].mxu0
        %v3343 = vadd.f32 0.0, %v3342
        %v3344 = vpop.f32.mrb[0].mxu0
        %v3345 = vpop.f32.mrb[0].mxu0
        %v3346 = vpop.f32.mrb[0].mxu0
        %3347 = vdwg.mxu0
        %s3348 = scalar_lea.vmem [#allocation13], 128
        %v3349 = vld [vmem:[%s3348] sm:$0xf]
        %v3350 = vld [vmem:[%s3348 + $0x4] sm:$0xf]
        %v3351 = vld [vmem:[%s3348 + $0x8] sm:$0xf]
        %v3352 = vld [vmem:[%s3348 + $0xc] sm:$0xf]
        %v3353 = vld [vmem:[%s3348 + $0x10] sm:$0xf]
        %v3354 = vld [vmem:[%s3348 + $0x14] sm:$0xf]
        %v3355 = vld [vmem:[%s3348 + $0x18] sm:$0xf]
        %v3356 = vld [vmem:[%s3348 + $0x1c] sm:$0xf]
        %v3357 = vld [vmem:[%s3348 + $0x20] sm:$0xf]
        %v3358 = vld [vmem:[%s3348 + $0x24] sm:$0xf]
        %v3359 = vld [vmem:[%s3348 + $0x28] sm:$0xf]
        %v3360 = vld [vmem:[%s3348 + $0x2c] sm:$0xf]
        %v3361 = vld [vmem:[%s3348 + $0x30] sm:$0xf]
        %v3362 = vld [vmem:[%s3348 + $0x34] sm:$0xf]
        %v3363 = vld [vmem:[%s3348 + $0x38] sm:$0xf]
        %v3364 = vld [vmem:[%s3348 + $0x3c] sm:$0xf]
        %v3365 = vld [vmem:[%s3348 + $0x40] sm:$0xf]
        %v3366 = vld [vmem:[%s3348 + $0x44] sm:$0xf]
        %v3367 = vld [vmem:[%s3348 + $0x48] sm:$0xf]
        %v3368 = vld [vmem:[%s3348 + $0x4c] sm:$0xf]
        %v3369 = vld [vmem:[%s3348 + $0x50] sm:$0xf]
        %v3370 = vld [vmem:[%s3348 + $0x54] sm:$0xf]
        %v3371 = vld [vmem:[%s3348 + $0x58] sm:$0xf]
        %v3372 = vld [vmem:[%s3348 + $0x5c] sm:$0xf]
        %v3373 = vld [vmem:[%s3348 + $0x60] sm:$0xf]
        %v3374 = vld [vmem:[%s3348 + $0x64] sm:$0xf]
        %v3375 = vld [vmem:[%s3348 + $0x68] sm:$0xf]
        %v3376 = vld [vmem:[%s3348 + $0x6c] sm:$0xf]
        %v3377 = vld [vmem:[%s3348 + $0x70] sm:$0xf]
        %v3378 = vld [vmem:[%s3348 + $0x74] sm:$0xf]
        %v3379 = vld [vmem:[%s3348 + $0x78] sm:$0xf]
        %v3380 = vld [vmem:[%s3348 + $0x7c] sm:$0xf]
        %v3413 = vunpack.c.l.b16 %v3349
        %v3414 = vunpack.c.l.b16 %v3350
        %v3415 = vunpack.c.l.b16 %v3351
        %v3416 = vunpack.c.l.b16 %v3352
        %v3417 = vunpack.c.l.b16 %v3353
        %v3418 = vunpack.c.l.b16 %v3354
        %v3419 = vunpack.c.l.b16 %v3355
        %v3420 = vunpack.c.l.b16 %v3356
        %v3421 = vunpack.c.l.b16 %v3357
        %v3422 = vunpack.c.l.b16 %v3358
        %v3423 = vunpack.c.l.b16 %v3359
        %v3424 = vunpack.c.l.b16 %v3360
        %v3425 = vunpack.c.l.b16 %v3361
        %v3426 = vunpack.c.l.b16 %v3362
        %v3427 = vunpack.c.l.b16 %v3363
        %v3428 = vunpack.c.l.b16 %v3364
        %v3429 = vunpack.c.l.b16 %v3365
        %v3430 = vunpack.c.l.b16 %v3366
        %v3431 = vunpack.c.l.b16 %v3367
        %v3432 = vunpack.c.l.b16 %v3368
        %v3433 = vunpack.c.l.b16 %v3369
        %v3434 = vunpack.c.l.b16 %v3370
        %v3435 = vunpack.c.l.b16 %v3371
        %v3436 = vunpack.c.l.b16 %v3372
        %v3437 = vunpack.c.l.b16 %v3373
        %v3438 = vunpack.c.l.b16 %v3374
        %v3439 = vunpack.c.l.b16 %v3375
        %v3440 = vunpack.c.l.b16 %v3376
        %v3441 = vunpack.c.l.b16 %v3377
        %v3442 = vunpack.c.l.b16 %v3378
        %v3443 = vunpack.c.l.b16 %v3379
        %v3444 = vunpack.c.l.b16 %v3380
        %v3445 = vpack.c.b16 %v3414, %v3413
        %v3446 = vpack.c.b16 %v3416, %v3415
        %v3447 = vpack.c.b16 %v3418, %v3417
        %v3448 = vpack.c.b16 %v3420, %v3419
        %v3449 = vpack.c.b16 %v3422, %v3421
        %v3450 = vpack.c.b16 %v3424, %v3423
        %v3451 = vpack.c.b16 %v3426, %v3425
        %v3452 = vpack.c.b16 %v3428, %v3427
        %v3453 = vpack.c.b16 %v3430, %v3429
        %v3454 = vpack.c.b16 %v3432, %v3431
        %v3455 = vpack.c.b16 %v3434, %v3433
        %v3456 = vpack.c.b16 %v3436, %v3435
        %v3457 = vpack.c.b16 %v3438, %v3437
        %v3458 = vpack.c.b16 %v3440, %v3439
        %v3459 = vpack.c.b16 %v3442, %v3441
        %v3460 = vpack.c.b16 %v3444, %v3443
        %3477 = vmatprep.subr.bf16.mxu0 0
        %3478 = vmatpush1.bf16.msra.mxu0 %v3445
        %3479 = vmatprep.subr.bf16.mxu0 0
        %3480 = vmatpush1.bf16.msra.mxu0 %v3446
        %3481 = vmatprep.subr.bf16.mxu0 0
        %3482 = vmatpush1.bf16.msra.mxu0 %v3447
        %3483 = vmatprep.subr.bf16.mxu0 0
        %3484 = vmatpush1.bf16.msra.mxu0 %v3448
        %3485 = vmatprep.subr.bf16.mxu0 0
        %3486 = vmatpush1.bf16.msra.mxu0 %v3449
        %3487 = vmatprep.subr.bf16.mxu0 0
        %3488 = vmatpush1.bf16.msra.mxu0 %v3450
        %3489 = vmatprep.subr.bf16.mxu0 0
        %3490 = vmatpush1.bf16.msra.mxu0 %v3451
        %3491 = vmatprep.subr.bf16.mxu0 0
        %3492 = vmatpush1.bf16.msra.mxu0 %v3452
        %3493 = vmatprep.subr.bf16.mxu0 0
        %3494 = vmatpush1.bf16.msra.mxu0 %v3453
        %3495 = vmatprep.subr.bf16.mxu0 0
        %3496 = vmatpush1.bf16.msra.mxu0 %v3454
        %3497 = vmatprep.subr.bf16.mxu0 0
        %3498 = vmatpush1.bf16.msra.mxu0 %v3455
        %3499 = vmatprep.subr.bf16.mxu0 0
        %3500 = vmatpush1.bf16.msra.mxu0 %v3456
        %3501 = vmatprep.subr.bf16.mxu0 0
        %3502 = vmatpush1.bf16.msra.mxu0 %v3457
        %3503 = vmatprep.subr.bf16.mxu0 0
        %3504 = vmatpush1.bf16.msra.mxu0 %v3458
        %3505 = vmatprep.subr.bf16.mxu0 0
        %3506 = vmatpush1.bf16.msra.mxu0 %v3459
        %3507 = vmatprep.subr.bf16.mxu0 0
        %3508 = vmatpush1.bf16.msra.mxu0 %v3460
        %3509 = vmatprep.mubr.bf16.mxu0 %v3179
        %3510 = vmatmul.mubr.bf16.gmra.mrb[0].mxu0 %v3178
        %v3511 = vpop.f32.mrb[0].mxu0
        %v3512 = vadd.f32 0.0, %v3511
        %v3513 = vpop.f32.mrb[0].mxu0
        %v3514 = vpop.f32.mrb[0].mxu0
        %v3515 = vpop.f32.mrb[0].mxu0
        %3516 = vdwg.mxu0
        %v3517 = vmax.f32 %v3343, %v3512
        %v3518 = vmax.f32 %v3517, 0.0
        %v3519 = vpack.c.bf16 %v3518, %v3518
        %v3520 = vld [vmem:[%s17] sm:$0x1]
        %vm3521 = vcmask 15360
        %v3523 = vsel %vm3521, %v3520, 0
        %vm3525 = vcmask 1040384
        %v3527 = vsel %vm3525, %v3519, 0
        %3529 = vmatprep.subr.bf16.mxu0 0
        %3530 = vmatpush1.bf16.msra.mxu0 %v3527
        %3531 = vmatprep.subr.bf16.mxu0 0
        %3532 = vmatpush1.bf16.msra.mxu0 0
        %3533 = vmatprep.subr.bf16.mxu0 0
        %3534 = vmatpush1.bf16.msra.mxu0 0
        %3535 = vmatprep.subr.bf16.mxu0 0
        %3536 = vmatpush1.bf16.msra.mxu0 0
        %3537 = vmatprep.subr.bf16.mxu0 0
        %3538 = vmatpush1.bf16.msra.mxu0 0
        %3539 = vmatprep.subr.bf16.mxu0 0
        %3540 = vmatpush1.bf16.msra.mxu0 0
        %3541 = vmatprep.subr.bf16.mxu0 0
        %3542 = vmatpush1.bf16.msra.mxu0 0
        %3543 = vmatprep.subr.bf16.mxu0 0
        %3544 = vmatpush1.bf16.msra.mxu0 0
        %3545 = vmatprep.subr.bf16.mxu0 0
        %3546 = vmatpush1.bf16.msra.mxu0 0
        %3547 = vmatprep.subr.bf16.mxu0 0
        %3548 = vmatpush1.bf16.msra.mxu0 0
        %3549 = vmatprep.subr.bf16.mxu0 0
        %3550 = vmatpush1.bf16.msra.mxu0 0
        %3551 = vmatprep.subr.bf16.mxu0 0
        %3552 = vmatpush1.bf16.msra.mxu0 0
        %3553 = vmatprep.subr.bf16.mxu0 0
        %3554 = vmatpush1.bf16.msra.mxu0 0
        %3555 = vmatprep.subr.bf16.mxu0 0
        %3556 = vmatpush1.bf16.msra.mxu0 0
        %3557 = vmatprep.subr.bf16.mxu0 0
        %3558 = vmatpush1.bf16.msra.mxu0 0
        %3559 = vmatprep.subr.bf16.mxu0 0
        %3560 = vmatpush1.bf16.msra.mxu0 0
        %3561 = vmatprep.mubr.bf16.mxu0 0
        %3562 = vmatmul.mubr.bf16.gmra.mrb[0].mxu0 %v3523
        %v3563 = vpop.f32.mrb[0].mxu0
        %v3564 = vadd.f32 0.0, %v3563
        %v3565 = vpop.f32.mrb[0].mxu0
        %v3566 = vpop.f32.mrb[0].mxu0
        %v3567 = vpop.f32.mrb[0].mxu0
        %3568 = vdwg.mxu0
        %v3569 = vpack.c.bf16 %v3564, %v3564
        %s3570 = scalar_lea.vmem %s17, 1
        %v3571 = vld [vmem:[%s3570] sm:$0x1]
        %v3573 = vsel %vm3521, %v3571, 0
        %3575 = vmatprep.subr.bf16.mxu0 0
        %3576 = vmatpush1.bf16.msra.mxu0 %v3527
        %3577 = vmatprep.subr.bf16.mxu0 0
        %3578 = vmatpush1.bf16.msra.mxu0 0
        %3579 = vmatprep.subr.bf16.mxu0 0
        %3580 = vmatpush1.bf16.msra.mxu0 0
        %3581 = vmatprep.subr.bf16.mxu0 0
        %3582 = vmatpush1.bf16.msra.mxu0 0
        %3583 = vmatprep.subr.bf16.mxu0 0
        %3584 = vmatpush1.bf16.msra.mxu0 0
        %3585 = vmatprep.subr.bf16.mxu0 0
        %3586 = vmatpush1.bf16.msra.mxu0 0
        %3587 = vmatprep.subr.bf16.mxu0 0
        %3588 = vmatpush1.bf16.msra.mxu0 0
        %3589 = vmatprep.subr.bf16.mxu0 0
        %3590 = vmatpush1.bf16.msra.mxu0 0
        %3591 = vmatprep.subr.bf16.mxu0 0
        %3592 = vmatpush1.bf16.msra.mxu0 0
        %3593 = vmatprep.subr.bf16.mxu0 0
        %3594 = vmatpush1.bf16.msra.mxu0 0
        %3595 = vmatprep.subr.bf16.mxu0 0
        %3596 = vmatpush1.bf16.msra.mxu0 0
        %3597 = vmatprep.subr.bf16.mxu0 0
        %3598 = vmatpush1.bf16.msra.mxu0 0
        %3599 = vmatprep.subr.bf16.mxu0 0
        %3600 = vmatpush1.bf16.msra.mxu0 0
        %3601 = vmatprep.subr.bf16.mxu0 0
        %3602 = vmatpush1.bf16.msra.mxu0 0
        %3603 = vmatprep.subr.bf16.mxu0 0
        %3604 = vmatpush1.bf16.msra.mxu0 0
        %3605 = vmatprep.subr.bf16.mxu0 0
        %3606 = vmatpush1.bf16.msra.mxu0 0
        %3607 = vmatprep.mubr.bf16.mxu0 0
        %3608 = vmatmul.mubr.bf16.gmra.mrb[0].mxu0 %v3573
        %v3609 = vpop.f32.mrb[0].mxu0
        %v3610 = vadd.f32 0.0, %v3609
        %v3611 = vpop.f32.mrb[0].mxu0
        %v3612 = vpop.f32.mrb[0].mxu0
        %v3613 = vpop.f32.mrb[0].mxu0
        %3614 = vdwg.mxu0
        %v3615 = vpack.c.bf16 %v3610, %v3610
        %s3616 = scalar_lea.vmem [#allocation14], 128
        %v3617 = vld [vmem:[%s3616] sm:$0xff]
        %v3618 = vld [vmem:[%s3616 + $0x8] sm:$0xff]
        %v3619 = vld [vmem:[%s3616 + $0x10] sm:$0xff]
        %v3620 = vld [vmem:[%s3616 + $0x18] sm:$0xff]
        %v3621 = vld [vmem:[%s3616 + $0x20] sm:$0xff]
        %v3622 = vld [vmem:[%s3616 + $0x28] sm:$0xff]
        %v3623 = vld [vmem:[%s3616 + $0x30] sm:$0xff]
        %v3624 = vld [vmem:[%s3616 + $0x38] sm:$0xff]
        %v3625 = vld [vmem:[%s3616 + $0x40] sm:$0xff]
        %v3626 = vld [vmem:[%s3616 + $0x48] sm:$0xff]
        %v3627 = vld [vmem:[%s3616 + $0x50] sm:$0xff]
        %v3628 = vld [vmem:[%s3616 + $0x58] sm:$0xff]
        %v3629 = vld [vmem:[%s3616 + $0x60] sm:$0xff]
        %v3630 = vld [vmem:[%s3616 + $0x68] sm:$0xff]
        %v3631 = vld [vmem:[%s3616 + $0x70] sm:$0xff]
        %v3632 = vld [vmem:[%s3616 + $0x78] sm:$0xff]
        %v3633 = vld [vmem:[#allocation14] sm:$0xff]
        %v3634 = vld [vmem:[#allocation14 + $0x8] sm:$0xff]
        %v3635 = vld [vmem:[#allocation14 + $0x10] sm:$0xff]
        %v3636 = vld [vmem:[#allocation14 + $0x18] sm:$0xff]
        %v3637 = vld [vmem:[#allocation14 + $0x20] sm:$0xff]
        %v3638 = vld [vmem:[#allocation14 + $0x28] sm:$0xff]
        %v3639 = vld [vmem:[#allocation14 + $0x30] sm:$0xff]
        %v3640 = vld [vmem:[#allocation14 + $0x38] sm:$0xff]
        %v3641 = vld [vmem:[#allocation14 + $0x40] sm:$0xff]
        %v3642 = vld [vmem:[#allocation14 + $0x48] sm:$0xff]
        %v3643 = vld [vmem:[#allocation14 + $0x50] sm:$0xff]
        %v3644 = vld [vmem:[#allocation14 + $0x58] sm:$0xff]
        %v3645 = vld [vmem:[#allocation14 + $0x60] sm:$0xff]
        %v3646 = vld [vmem:[#allocation14 + $0x68] sm:$0xff]
        %v3647 = vld [vmem:[#allocation14 + $0x70] sm:$0xff]
        %v3648 = vld [vmem:[#allocation14 + $0x78] sm:$0xff]
        %v3665 = vunpack.c.l.b16 %v3633
        %v3666 = vunpack.c.h.b16 %v3633
        %v3667 = vunpack.c.l.b16 %v3634
        %v3668 = vunpack.c.h.b16 %v3634
        %v3669 = vunpack.c.l.b16 %v3635
        %v3670 = vunpack.c.h.b16 %v3635
        %v3671 = vunpack.c.l.b16 %v3636
        %v3672 = vunpack.c.h.b16 %v3636
        %v3673 = vunpack.c.l.b16 %v3637
        %v3674 = vunpack.c.h.b16 %v3637
        %v3675 = vunpack.c.l.b16 %v3638
        %v3676 = vunpack.c.h.b16 %v3638
        %v3677 = vunpack.c.l.b16 %v3639
        %v3678 = vunpack.c.h.b16 %v3639
        %v3679 = vunpack.c.l.b16 %v3640
        %v3680 = vunpack.c.h.b16 %v3640
        %v3681 = vunpack.c.l.b16 %v3641
        %v3682 = vunpack.c.h.b16 %v3641
        %v3683 = vunpack.c.l.b16 %v3642
        %v3684 = vunpack.c.h.b16 %v3642
        %v3685 = vunpack.c.l.b16 %v3643
        %v3686 = vunpack.c.h.b16 %v3643
        %v3687 = vunpack.c.l.b16 %v3644
        %v3688 = vunpack.c.h.b16 %v3644
        %v3689 = vunpack.c.l.b16 %v3645
        %v3690 = vunpack.c.h.b16 %v3645
        %v3691 = vunpack.c.l.b16 %v3646
        %v3692 = vunpack.c.h.b16 %v3646
        %v3693 = vunpack.c.l.b16 %v3647
        %v3694 = vunpack.c.h.b16 %v3647
        %v3695 = vunpack.c.l.b16 %v3648
        %v3696 = vunpack.c.h.b16 %v3648
        %v3697 = vpack.c.b16 %v3667, %v3665
        %v3698 = vpack.c.b16 %v3668, %v3666
        %v3699 = vpack.c.b16 %v3671, %v3669
        %v3700 = vpack.c.b16 %v3672, %v3670
        %v3701 = vpack.c.b16 %v3675, %v3673
        %v3702 = vpack.c.b16 %v3676, %v3674
        %v3703 = vpack.c.b16 %v3679, %v3677
        %v3704 = vpack.c.b16 %v3680, %v3678
        %v3705 = vpack.c.b16 %v3683, %v3681
        %v3706 = vpack.c.b16 %v3684, %v3682
        %v3707 = vpack.c.b16 %v3687, %v3685
        %v3708 = vpack.c.b16 %v3688, %v3686
        %v3709 = vpack.c.b16 %v3691, %v3689
        %v3710 = vpack.c.b16 %v3692, %v3690
        %v3711 = vpack.c.b16 %v3695, %v3693
        %v3712 = vpack.c.b16 %v3696, %v3694
        %3729 = vmatprep.subr.bf16.mxu0 %v3698
        %3730 = vmatpush1.bf16.msra.mxu0 %v3697
        %3731 = vmatprep.subr.bf16.mxu0 %v3700
        %3732 = vmatpush1.bf16.msra.mxu0 %v3699
        %3733 = vmatprep.subr.bf16.mxu0 %v3702
        %3734 = vmatpush1.bf16.msra.mxu0 %v3701
        %3735 = vmatprep.subr.bf16.mxu0 %v3704
        %3736 = vmatpush1.bf16.msra.mxu0 %v3703
        %3737 = vmatprep.subr.bf16.mxu0 %v3706
        %3738 = vmatpush1.bf16.msra.mxu0 %v3705
        %3739 = vmatprep.subr.bf16.mxu0 %v3708
        %3740 = vmatpush1.bf16.msra.mxu0 %v3707
        %3741 = vmatprep.subr.bf16.mxu0 %v3710
        %3742 = vmatpush1.bf16.msra.mxu0 %v3709
        %3743 = vmatprep.subr.bf16.mxu0 %v3712
        %3744 = vmatpush1.bf16.msra.mxu0 %v3711
        %3745 = vmatprep.subr.bf16.mxu0 0
        %3746 = vmatpush1.bf16.msra.mxu0 0
        %3747 = vmatprep.subr.bf16.mxu0 0
        %3748 = vmatpush1.bf16.msra.mxu0 0
        %3749 = vmatprep.subr.bf16.mxu0 0
        %3750 = vmatpush1.bf16.msra.mxu0 0
        %3751 = vmatprep.subr.bf16.mxu0 0
        %3752 = vmatpush1.bf16.msra.mxu0 0
        %3753 = vmatprep.subr.bf16.mxu0 0
        %3754 = vmatpush1.bf16.msra.mxu0 0
        %3755 = vmatprep.subr.bf16.mxu0 0
        %3756 = vmatpush1.bf16.msra.mxu0 0
        %3757 = vmatprep.subr.bf16.mxu0 0
        %3758 = vmatpush1.bf16.msra.mxu0 0
        %3759 = vmatprep.subr.bf16.mxu0 0
        %3760 = vmatpush1.bf16.msra.mxu0 0
        %3761 = vmatprep.mubr.bf16.mxu0 0
        %3762 = vmatmul.mubr.bf16.gmra.mrb[0].mxu0 %v3569
        %v3763 = vpop.f32.mrb[0].mxu0
        %v3764 = vadd.f32 0.0, %v3763
        %v3765 = vpop.f32.mrb[0].mxu0
        %v3766 = vadd.f32 0.0, %v3765
        %v3767 = vpop.f32.mrb[0].mxu0
        %v3768 = vpop.f32.mrb[0].mxu0
        %3769 = vdwg.mxu0
        %v3786 = vunpack.c.l.b16 %v3617
        %v3787 = vunpack.c.h.b16 %v3617
        %v3788 = vunpack.c.l.b16 %v3618
        %v3789 = vunpack.c.h.b16 %v3618
        %v3790 = vunpack.c.l.b16 %v3619
        %v3791 = vunpack.c.h.b16 %v3619
        %v3792 = vunpack.c.l.b16 %v3620
        %v3793 = vunpack.c.h.b16 %v3620
        %v3794 = vunpack.c.l.b16 %v3621
        %v3795 = vunpack.c.h.b16 %v3621
        %v3796 = vunpack.c.l.b16 %v3622
        %v3797 = vunpack.c.h.b16 %v3622
        %v3798 = vunpack.c.l.b16 %v3623
        %v3799 = vunpack.c.h.b16 %v3623
        %v3800 = vunpack.c.l.b16 %v3624
        %v3801 = vunpack.c.h.b16 %v3624
        %v3802 = vunpack.c.l.b16 %v3625
        %v3803 = vunpack.c.h.b16 %v3625
        %v3804 = vunpack.c.l.b16 %v3626
        %v3805 = vunpack.c.h.b16 %v3626
        %v3806 = vunpack.c.l.b16 %v3627
        %v3807 = vunpack.c.h.b16 %v3627
        %v3808 = vunpack.c.l.b16 %v3628
        %v3809 = vunpack.c.h.b16 %v3628
        %v3810 = vunpack.c.l.b16 %v3629
        %v3811 = vunpack.c.h.b16 %v3629
        %v3812 = vunpack.c.l.b16 %v3630
        %v3813 = vunpack.c.h.b16 %v3630
        %v3814 = vunpack.c.l.b16 %v3631
        %v3815 = vunpack.c.h.b16 %v3631
        %v3816 = vunpack.c.l.b16 %v3632
        %v3817 = vunpack.c.h.b16 %v3632
        %v3818 = vpack.c.b16 %v3788, %v3786
        %v3819 = vpack.c.b16 %v3789, %v3787
        %v3820 = vpack.c.b16 %v3792, %v3790
        %v3821 = vpack.c.b16 %v3793, %v3791
        %v3822 = vpack.c.b16 %v3796, %v3794
        %v3823 = vpack.c.b16 %v3797, %v3795
        %v3824 = vpack.c.b16 %v3800, %v3798
        %v3825 = vpack.c.b16 %v3801, %v3799
        %v3826 = vpack.c.b16 %v3804, %v3802
        %v3827 = vpack.c.b16 %v3805, %v3803
        %v3828 = vpack.c.b16 %v3808, %v3806
        %v3829 = vpack.c.b16 %v3809, %v3807
        %v3830 = vpack.c.b16 %v3812, %v3810
        %v3831 = vpack.c.b16 %v3813, %v3811
        %v3832 = vpack.c.b16 %v3816, %v3814
        %v3833 = vpack.c.b16 %v3817, %v3815
        %3850 = vmatprep.subr.bf16.mxu0 %v3819
        %3851 = vmatpush1.bf16.msra.mxu0 %v3818
        %3852 = vmatprep.subr.bf16.mxu0 %v3821
        %3853 = vmatpush1.bf16.msra.mxu0 %v3820
        %3854 = vmatprep.subr.bf16.mxu0 %v3823
        %3855 = vmatpush1.bf16.msra.mxu0 %v3822
        %3856 = vmatprep.subr.bf16.mxu0 %v3825
        %3857 = vmatpush1.bf16.msra.mxu0 %v3824
        %3858 = vmatprep.subr.bf16.mxu0 %v3827
        %3859 = vmatpush1.bf16.msra.mxu0 %v3826
        %3860 = vmatprep.subr.bf16.mxu0 %v3829
        %3861 = vmatpush1.bf16.msra.mxu0 %v3828
        %3862 = vmatprep.subr.bf16.mxu0 %v3831
        %3863 = vmatpush1.bf16.msra.mxu0 %v3830
        %3864 = vmatprep.subr.bf16.mxu0 %v3833
        %3865 = vmatpush1.bf16.msra.mxu0 %v3832
        %3866 = vmatprep.subr.bf16.mxu0 0
        %3867 = vmatpush1.bf16.msra.mxu0 0
        %3868 = vmatprep.subr.bf16.mxu0 0
        %3869 = vmatpush1.bf16.msra.mxu0 0
        %3870 = vmatprep.subr.bf16.mxu0 0
        %3871 = vmatpush1.bf16.msra.mxu0 0
        %3872 = vmatprep.subr.bf16.mxu0 0
        %3873 = vmatpush1.bf16.msra.mxu0 0
        %3874 = vmatprep.subr.bf16.mxu0 0
        %3875 = vmatpush1.bf16.msra.mxu0 0
        %3876 = vmatprep.subr.bf16.mxu0 0
        %3877 = vmatpush1.bf16.msra.mxu0 0
        %3878 = vmatprep.subr.bf16.mxu0 0
        %3879 = vmatpush1.bf16.msra.mxu0 0
        %3880 = vmatprep.subr.bf16.mxu0 0
        %3881 = vmatpush1.bf16.msra.mxu0 0
        %3882 = vmatprep.mubr.bf16.mxu0 0
        %3883 = vmatmul.mubr.bf16.gmra.mrb[0].mxu0 %v3519
        %v3884 = vpop.f32.mrb[0].mxu0
        %v3885 = vadd.f32 %v3764, %v3884
        %v3886 = vpop.f32.mrb[0].mxu0
        %v3887 = vadd.f32 %v3766, %v3886
        %v3888 = vpop.f32.mrb[0].mxu0
        %v3889 = vpop.f32.mrb[0].mxu0
        %3890 = vdwg.mxu0
        %s3891 = scalar_lea.vmem [#allocation14], 256
        %v3892 = vld [vmem:[%s3891] sm:$0xff]
        %v3893 = vld [vmem:[%s3891 + $0x8] sm:$0xff]
        %v3894 = vld [vmem:[%s3891 + $0x10] sm:$0xff]
        %v3895 = vld [vmem:[%s3891 + $0x18] sm:$0xff]
        %v3896 = vld [vmem:[%s3891 + $0x20] sm:$0xff]
        %v3897 = vld [vmem:[%s3891 + $0x28] sm:$0xff]
        %v3898 = vld [vmem:[%s3891 + $0x30] sm:$0xff]
        %v3899 = vld [vmem:[%s3891 + $0x38] sm:$0xff]
        %v3900 = vld [vmem:[%s3891 + $0x40] sm:$0xff]
        %v3901 = vld [vmem:[%s3891 + $0x48] sm:$0xff]
        %v3902 = vld [vmem:[%s3891 + $0x50] sm:$0xff]
        %v3903 = vld [vmem:[%s3891 + $0x58] sm:$0xff]
        %v3904 = vld [vmem:[%s3891 + $0x60] sm:$0xff]
        %v3905 = vld [vmem:[%s3891 + $0x68] sm:$0xff]
        %v3906 = vld [vmem:[%s3891 + $0x70] sm:$0xff]
        %v3907 = vld [vmem:[%s3891 + $0x78] sm:$0xff]
        %v3924 = vunpack.c.l.b16 %v3892
        %v3925 = vunpack.c.h.b16 %v3892
        %v3926 = vunpack.c.l.b16 %v3893
        %v3927 = vunpack.c.h.b16 %v3893
        %v3928 = vunpack.c.l.b16 %v3894
        %v3929 = vunpack.c.h.b16 %v3894
        %v3930 = vunpack.c.l.b16 %v3895
        %v3931 = vunpack.c.h.b16 %v3895
        %v3932 = vunpack.c.l.b16 %v3896
        %v3933 = vunpack.c.h.b16 %v3896
        %v3934 = vunpack.c.l.b16 %v3897
        %v3935 = vunpack.c.h.b16 %v3897
        %v3936 = vunpack.c.l.b16 %v3898
        %v3937 = vunpack.c.h.b16 %v3898
        %v3938 = vunpack.c.l.b16 %v3899
        %v3939 = vunpack.c.h.b16 %v3899
        %v3940 = vunpack.c.l.b16 %v3900
        %v3941 = vunpack.c.h.b16 %v3900
        %v3942 = vunpack.c.l.b16 %v3901
        %v3943 = vunpack.c.h.b16 %v3901
        %v3944 = vunpack.c.l.b16 %v3902
        %v3945 = vunpack.c.h.b16 %v3902
        %v3946 = vunpack.c.l.b16 %v3903
        %v3947 = vunpack.c.h.b16 %v3903
        %v3948 = vunpack.c.l.b16 %v3904
        %v3949 = vunpack.c.h.b16 %v3904
        %v3950 = vunpack.c.l.b16 %v3905
        %v3951 = vunpack.c.h.b16 %v3905
        %v3952 = vunpack.c.l.b16 %v3906
        %v3953 = vunpack.c.h.b16 %v3906
        %v3954 = vunpack.c.l.b16 %v3907
        %v3955 = vunpack.c.h.b16 %v3907
        %v3956 = vpack.c.b16 %v3926, %v3924
        %v3957 = vpack.c.b16 %v3927, %v3925
        %v3958 = vpack.c.b16 %v3930, %v3928
        %v3959 = vpack.c.b16 %v3931, %v3929
        %v3960 = vpack.c.b16 %v3934, %v3932
        %v3961 = vpack.c.b16 %v3935, %v3933
        %v3962 = vpack.c.b16 %v3938, %v3936
        %v3963 = vpack.c.b16 %v3939, %v3937
        %v3964 = vpack.c.b16 %v3942, %v3940
        %v3965 = vpack.c.b16 %v3943, %v3941
        %v3966 = vpack.c.b16 %v3946, %v3944
        %v3967 = vpack.c.b16 %v3947, %v3945
        %v3968 = vpack.c.b16 %v3950, %v3948
        %v3969 = vpack.c.b16 %v3951, %v3949
        %v3970 = vpack.c.b16 %v3954, %v3952
        %v3971 = vpack.c.b16 %v3955, %v3953
        %3988 = vmatprep.subr.bf16.mxu0 %v3957
        %3989 = vmatpush1.bf16.msra.mxu0 %v3956
        %3990 = vmatprep.subr.bf16.mxu0 %v3959
        %3991 = vmatpush1.bf16.msra.mxu0 %v3958
        %3992 = vmatprep.subr.bf16.mxu0 %v3961
        %3993 = vmatpush1.bf16.msra.mxu0 %v3960
        %3994 = vmatprep.subr.bf16.mxu0 %v3963
        %3995 = vmatpush1.bf16.msra.mxu0 %v3962
        %3996 = vmatprep.subr.bf16.mxu0 %v3965
        %3997 = vmatpush1.bf16.msra.mxu0 %v3964
        %3998 = vmatprep.subr.bf16.mxu0 %v3967
        %3999 = vmatpush1.bf16.msra.mxu0 %v3966
        %4000 = vmatprep.subr.bf16.mxu0 %v3969
        %4001 = vmatpush1.bf16.msra.mxu0 %v3968
        %4002 = vmatprep.subr.bf16.mxu0 %v3971
        %4003 = vmatpush1.bf16.msra.mxu0 %v3970
        %4004 = vmatprep.subr.bf16.mxu0 0
        %4005 = vmatpush1.bf16.msra.mxu0 0
        %4006 = vmatprep.subr.bf16.mxu0 0
        %4007 = vmatpush1.bf16.msra.mxu0 0
        %4008 = vmatprep.subr.bf16.mxu0 0
        %4009 = vmatpush1.bf16.msra.mxu0 0
        %4010 = vmatprep.subr.bf16.mxu0 0
        %4011 = vmatpush1.bf16.msra.mxu0 0
        %4012 = vmatprep.subr.bf16.mxu0 0
        %4013 = vmatpush1.bf16.msra.mxu0 0
        %4014 = vmatprep.subr.bf16.mxu0 0
        %4015 = vmatpush1.bf16.msra.mxu0 0
        %4016 = vmatprep.subr.bf16.mxu0 0
        %4017 = vmatpush1.bf16.msra.mxu0 0
        %4018 = vmatprep.subr.bf16.mxu0 0
        %4019 = vmatpush1.bf16.msra.mxu0 0
        %4020 = vmatprep.mubr.bf16.mxu0 0
        %4021 = vmatmul.mubr.bf16.gmra.mrb[0].mxu0 %v3615
        %v4022 = vpop.f32.mrb[0].mxu0
        %v4023 = vadd.f32 0.0, %v4022
        %v4024 = vpop.f32.mrb[0].mxu0
        %v4025 = vadd.f32 0.0, %v4024
        %v4026 = vpop.f32.mrb[0].mxu0
        %v4027 = vpop.f32.mrb[0].mxu0
        %4028 = vdwg.mxu0
        %v4029 = vadd.f32 %v3885, %v4023
        %v4030 = vadd.f32 %v3887, %v4025
        %v4031 = vld [vmem:[%s20] sm:$0x3]
        %v4033 = vlaneseq
        %v4034 = vshrl.u32 %v4033, 7
        %v4035 = vsub.s32 0, %v4034
        %v4036 = vrot.slane %v4031, %v4035
        %v4037 = vlaneseq
        %v4038 = vshrl.u32 %v4037, 7
        %v4039 = vsub.s32 1, %v4038
        %v4040 = vrot.slane %v4031, %v4039
        %v4043 = vadd.f32 %v4029, %v4036
        %v4044 = vadd.f32 %v4030, %v4040
        %v4045 = vpack.c.bf16 %v4043, %v4043
        %v4046 = vpack.c.bf16 %v4044, %v4044
        %v4047 = vld [vmem:[%s18] sm:$0x1]
        %v4049 = vsel %vm3521, %v4047, 0
        %v4052 = vsel %vm3525, %v4045, 0
        %v4055 = vsel %vm3525, %v4046, 0
        %4057 = vmatprep.subr.bf16.mxu0 %v4055
        %4058 = vmatpush1.bf16.msra.mxu0 %v4052
        %4059 = vmatprep.subr.bf16.mxu0 0
        %4060 = vmatpush1.bf16.msra.mxu0 0
        %4061 = vmatprep.subr.bf16.mxu0 0
        %4062 = vmatpush1.bf16.msra.mxu0 0
        %4063 = vmatprep.subr.bf16.mxu0 0
        %4064 = vmatpush1.bf16.msra.mxu0 0
        %4065 = vmatprep.subr.bf16.mxu0 0
        %4066 = vmatpush1.bf16.msra.mxu0 0
        %4067 = vmatprep.subr.bf16.mxu0 0
        %4068 = vmatpush1.bf16.msra.mxu0 0
        %4069 = vmatprep.subr.bf16.mxu0 0
        %4070 = vmatpush1.bf16.msra.mxu0 0
        %4071 = vmatprep.subr.bf16.mxu0 0
        %4072 = vmatpush1.bf16.msra.mxu0 0
        %4073 = vmatprep.subr.bf16.mxu0 0
        %4074 = vmatpush1.bf16.msra.mxu0 0
        %4075 = vmatprep.subr.bf16.mxu0 0
        %4076 = vmatpush1.bf16.msra.mxu0 0
        %4077 = vmatprep.subr.bf16.mxu0 0
        %4078 = vmatpush1.bf16.msra.mxu0 0
        %4079 = vmatprep.subr.bf16.mxu0 0
        %4080 = vmatpush1.bf16.msra.mxu0 0
        %4081 = vmatprep.subr.bf16.mxu0 0
        %4082 = vmatpush1.bf16.msra.mxu0 0
        %4083 = vmatprep.subr.bf16.mxu0 0
        %4084 = vmatpush1.bf16.msra.mxu0 0
        %4085 = vmatprep.subr.bf16.mxu0 0
        %4086 = vmatpush1.bf16.msra.mxu0 0
        %4087 = vmatprep.subr.bf16.mxu0 0
        %4088 = vmatpush1.bf16.msra.mxu0 0
        %4089 = vmatprep.mubr.bf16.mxu0 0
        %4090 = vmatmul.mubr.bf16.gmra.mrb[0].mxu0 %v4049
        %v4091 = vpop.f32.mrb[0].mxu0
        %v4092 = vadd.f32 0.0, %v4091
        %v4093 = vpop.f32.mrb[0].mxu0
        %v4094 = vadd.f32 0.0, %v4093
        %v4095 = vpop.f32.mrb[0].mxu0
        %v4096 = vpop.f32.mrb[0].mxu0
        %4097 = vdwg.mxu0
        %s4098 = scalar_lea.vmem %s18, 1
        %v4099 = vld [vmem:[%s4098] sm:$0x1]
        %v4101 = vsel %vm3521, %v4099, 0
        %4103 = vmatprep.subr.bf16.mxu0 %v4055
        %4104 = vmatpush1.bf16.msra.mxu0 %v4052
        %4105 = vmatprep.subr.bf16.mxu0 0
        %4106 = vmatpush1.bf16.msra.mxu0 0
        %4107 = vmatprep.subr.bf16.mxu0 0
        %4108 = vmatpush1.bf16.msra.mxu0 0
        %4109 = vmatprep.subr.bf16.mxu0 0
        %4110 = vmatpush1.bf16.msra.mxu0 0
        %4111 = vmatprep.subr.bf16.mxu0 0
        %4112 = vmatpush1.bf16.msra.mxu0 0
        %4113 = vmatprep.subr.bf16.mxu0 0
        %4114 = vmatpush1.bf16.msra.mxu0 0
        %4115 = vmatprep.subr.bf16.mxu0 0
        %4116 = vmatpush1.bf16.msra.mxu0 0
        %4117 = vmatprep.subr.bf16.mxu0 0
        %4118 = vmatpush1.bf16.msra.mxu0 0
        %4119 = vmatprep.subr.bf16.mxu0 0
        %4120 = vmatpush1.bf16.msra.mxu0 0
        %4121 = vmatprep.subr.bf16.mxu0 0
        %4122 = vmatpush1.bf16.msra.mxu0 0
        %4123 = vmatprep.subr.bf16.mxu0 0
        %4124 = vmatpush1.bf16.msra.mxu0 0
        %4125 = vmatprep.subr.bf16.mxu0 0
        %4126 = vmatpush1.bf16.msra.mxu0 0
        %4127 = vmatprep.subr.bf16.mxu0 0
        %4128 = vmatpush1.bf16.msra.mxu0 0
        %4129 = vmatprep.subr.bf16.mxu0 0
        %4130 = vmatpush1.bf16.msra.mxu0 0
        %4131 = vmatprep.subr.bf16.mxu0 0
        %4132 = vmatpush1.bf16.msra.mxu0 0
        %4133 = vmatprep.subr.bf16.mxu0 0
        %4134 = vmatpush1.bf16.msra.mxu0 0
        %4135 = vmatprep.mubr.bf16.mxu0 0
        %4136 = vmatmul.mubr.bf16.gmra.mrb[0].mxu0 %v4101
        %v4137 = vpop.f32.mrb[0].mxu0
        %v4138 = vadd.f32 0.0, %v4137
        %v4139 = vpop.f32.mrb[0].mxu0
        %v4140 = vadd.f32 0.0, %v4139
        %v4141 = vpop.f32.mrb[0].mxu0
        %v4142 = vpop.f32.mrb[0].mxu0
        %4143 = vdwg.mxu0
        %v4144 = vmax.f32 %v4092, %v4138
        %v4145 = vmax.f32 %v4094, %v4140
        %v4146 = vpack.c.bf16 %v4144, %v4144
        %v4147 = vpack.c.bf16 %v4145, %v4145
        %v4148 = vld [vmem:[#allocation16] sm:$0xf]
        %v4149 = vld [vmem:[#allocation16 + $0x4] sm:$0xf]
        %v4150 = vld [vmem:[#allocation16 + $0x8] sm:$0xf]
        %v4151 = vld [vmem:[#allocation16 + $0xc] sm:$0xf]
        %v4152 = vld [vmem:[#allocation16 + $0x10] sm:$0xf]
        %v4153 = vld [vmem:[#allocation16 + $0x14] sm:$0xf]
        %v4154 = vld [vmem:[#allocation16 + $0x18] sm:$0xf]
        %v4155 = vld [vmem:[#allocation16 + $0x1c] sm:$0xf]
        %v4156 = vld [vmem:[#allocation16 + $0x20] sm:$0xf]
        %v4157 = vld [vmem:[#allocation16 + $0x24] sm:$0xf]
        %v4158 = vld [vmem:[#allocation16 + $0x28] sm:$0xf]
        %v4159 = vld [vmem:[#allocation16 + $0x2c] sm:$0xf]
        %v4160 = vld [vmem:[#allocation16 + $0x30] sm:$0xf]
        %v4161 = vld [vmem:[#allocation16 + $0x34] sm:$0xf]
        %v4162 = vld [vmem:[#allocation16 + $0x38] sm:$0xf]
        %v4163 = vld [vmem:[#allocation16 + $0x3c] sm:$0xf]
        %v4164 = vld [vmem:[#allocation16 + $0x40] sm:$0xf]
        %v4165 = vld [vmem:[#allocation16 + $0x44] sm:$0xf]
        %v4166 = vld [vmem:[#allocation16 + $0x48] sm:$0xf]
        %v4167 = vld [vmem:[#allocation16 + $0x4c] sm:$0xf]
        %v4168 = vld [vmem:[#allocation16 + $0x50] sm:$0xf]
        %v4169 = vld [vmem:[#allocation16 + $0x54] sm:$0xf]
        %v4170 = vld [vmem:[#allocation16 + $0x58] sm:$0xf]
        %v4171 = vld [vmem:[#allocation16 + $0x5c] sm:$0xf]
        %v4172 = vld [vmem:[#allocation16 + $0x60] sm:$0xf]
        %v4173 = vld [vmem:[#allocation16 + $0x64] sm:$0xf]
        %v4174 = vld [vmem:[#allocation16 + $0x68] sm:$0xf]
        %v4175 = vld [vmem:[#allocation16 + $0x6c] sm:$0xf]
        %v4176 = vld [vmem:[#allocation16 + $0x70] sm:$0xf]
        %v4177 = vld [vmem:[#allocation16 + $0x74] sm:$0xf]
        %v4178 = vld [vmem:[#allocation16 + $0x78] sm:$0xf]
        %v4179 = vld [vmem:[#allocation16 + $0x7c] sm:$0xf]
        %v4212 = vunpack.c.l.b16 %v4148
        %v4213 = vunpack.c.l.b16 %v4149
        %v4214 = vunpack.c.l.b16 %v4150
        %v4215 = vunpack.c.l.b16 %v4151
        %v4216 = vunpack.c.l.b16 %v4152
        %v4217 = vunpack.c.l.b16 %v4153
        %v4218 = vunpack.c.l.b16 %v4154
        %v4219 = vunpack.c.l.b16 %v4155
        %v4220 = vunpack.c.l.b16 %v4156
        %v4221 = vunpack.c.l.b16 %v4157
        %v4222 = vunpack.c.l.b16 %v4158
        %v4223 = vunpack.c.l.b16 %v4159
        %v4224 = vunpack.c.l.b16 %v4160
        %v4225 = vunpack.c.l.b16 %v4161
        %v4226 = vunpack.c.l.b16 %v4162
        %v4227 = vunpack.c.l.b16 %v4163
        %v4228 = vunpack.c.l.b16 %v4164
        %v4229 = vunpack.c.l.b16 %v4165
        %v4230 = vunpack.c.l.b16 %v4166
        %v4231 = vunpack.c.l.b16 %v4167
        %v4232 = vunpack.c.l.b16 %v4168
        %v4233 = vunpack.c.l.b16 %v4169
        %v4234 = vunpack.c.l.b16 %v4170
        %v4235 = vunpack.c.l.b16 %v4171
        %v4236 = vunpack.c.l.b16 %v4172
        %v4237 = vunpack.c.l.b16 %v4173
        %v4238 = vunpack.c.l.b16 %v4174
        %v4239 = vunpack.c.l.b16 %v4175
        %v4240 = vunpack.c.l.b16 %v4176
        %v4241 = vunpack.c.l.b16 %v4177
        %v4242 = vunpack.c.l.b16 %v4178
        %v4243 = vunpack.c.l.b16 %v4179
        %v4244 = vpack.c.b16 %v4213, %v4212
        %v4245 = vpack.c.b16 %v4215, %v4214
        %v4246 = vpack.c.b16 %v4217, %v4216
        %v4247 = vpack.c.b16 %v4219, %v4218
        %v4248 = vpack.c.b16 %v4221, %v4220
        %v4249 = vpack.c.b16 %v4223, %v4222
        %v4250 = vpack.c.b16 %v4225, %v4224
        %v4251 = vpack.c.b16 %v4227, %v4226
        %v4252 = vpack.c.b16 %v4229, %v4228
        %v4253 = vpack.c.b16 %v4231, %v4230
        %v4254 = vpack.c.b16 %v4233, %v4232
        %v4255 = vpack.c.b16 %v4235, %v4234
        %v4256 = vpack.c.b16 %v4237, %v4236
        %v4257 = vpack.c.b16 %v4239, %v4238
        %v4258 = vpack.c.b16 %v4241, %v4240
        %v4259 = vpack.c.b16 %v4243, %v4242
        %4276 = vmatprep.subr.bf16.mxu0 0
        %4277 = vmatpush1.bf16.msra.mxu0 %v4244
        %4278 = vmatprep.subr.bf16.mxu0 0
        %4279 = vmatpush1.bf16.msra.mxu0 %v4245
        %4280 = vmatprep.subr.bf16.mxu0 0
        %4281 = vmatpush1.bf16.msra.mxu0 %v4246
        %4282 = vmatprep.subr.bf16.mxu0 0
        %4283 = vmatpush1.bf16.msra.mxu0 %v4247
        %4284 = vmatprep.subr.bf16.mxu0 0
        %4285 = vmatpush1.bf16.msra.mxu0 %v4248
        %4286 = vmatprep.subr.bf16.mxu0 0
        %4287 = vmatpush1.bf16.msra.mxu0 %v4249
        %4288 = vmatprep.subr.bf16.mxu0 0
        %4289 = vmatpush1.bf16.msra.mxu0 %v4250
        %4290 = vmatprep.subr.bf16.mxu0 0
        %4291 = vmatpush1.bf16.msra.mxu0 %v4251
        %4292 = vmatprep.subr.bf16.mxu0 0
        %4293 = vmatpush1.bf16.msra.mxu0 %v4252
        %4294 = vmatprep.subr.bf16.mxu0 0
        %4295 = vmatpush1.bf16.msra.mxu0 %v4253
        %4296 = vmatprep.subr.bf16.mxu0 0
        %4297 = vmatpush1.bf16.msra.mxu0 %v4254
        %4298 = vmatprep.subr.bf16.mxu0 0
        %4299 = vmatpush1.bf16.msra.mxu0 %v4255
        %4300 = vmatprep.subr.bf16.mxu0 0
        %4301 = vmatpush1.bf16.msra.mxu0 %v4256
        %4302 = vmatprep.subr.bf16.mxu0 0
        %4303 = vmatpush1.bf16.msra.mxu0 %v4257
        %4304 = vmatprep.subr.bf16.mxu0 0
        %4305 = vmatpush1.bf16.msra.mxu0 %v4258
        %4306 = vmatprep.subr.bf16.mxu0 0
        %4307 = vmatpush1.bf16.msra.mxu0 %v4259
        %4308 = vmatprep.mubr.bf16.mxu0 %v4147
        %4309 = vmatmul.mubr.bf16.gmra.mrb[0].mxu0 %v4146
        %v4310 = vpop.f32.mrb[0].mxu0
        %v4311 = vadd.f32 0.0, %v4310
        %v4312 = vpop.f32.mrb[0].mxu0
        %v4313 = vpop.f32.mrb[0].mxu0
        %v4314 = vpop.f32.mrb[0].mxu0
        %4315 = vdwg.mxu0
        %s4316 = scalar_lea.vmem [#allocation16], 128
        %v4317 = vld [vmem:[%s4316] sm:$0xf]
        %v4318 = vld [vmem:[%s4316 + $0x4] sm:$0xf]
        %v4319 = vld [vmem:[%s4316 + $0x8] sm:$0xf]
        %v4320 = vld [vmem:[%s4316 + $0xc] sm:$0xf]
        %v4321 = vld [vmem:[%s4316 + $0x10] sm:$0xf]
        %v4322 = vld [vmem:[%s4316 + $0x14] sm:$0xf]
        %v4323 = vld [vmem:[%s4316 + $0x18] sm:$0xf]
        %v4324 = vld [vmem:[%s4316 + $0x1c] sm:$0xf]
        %v4325 = vld [vmem:[%s4316 + $0x20] sm:$0xf]
        %v4326 = vld [vmem:[%s4316 + $0x24] sm:$0xf]
        %v4327 = vld [vmem:[%s4316 + $0x28] sm:$0xf]
        %v4328 = vld [vmem:[%s4316 + $0x2c] sm:$0xf]
        %v4329 = vld [vmem:[%s4316 + $0x30] sm:$0xf]
        %v4330 = vld [vmem:[%s4316 + $0x34] sm:$0xf]
        %v4331 = vld [vmem:[%s4316 + $0x38] sm:$0xf]
        %v4332 = vld [vmem:[%s4316 + $0x3c] sm:$0xf]
        %v4333 = vld [vmem:[%s4316 + $0x40] sm:$0xf]
        %v4334 = vld [vmem:[%s4316 + $0x44] sm:$0xf]
        %v4335 = vld [vmem:[%s4316 + $0x48] sm:$0xf]
        %v4336 = vld [vmem:[%s4316 + $0x4c] sm:$0xf]
        %v4337 = vld [vmem:[%s4316 + $0x50] sm:$0xf]
        %v4338 = vld [vmem:[%s4316 + $0x54] sm:$0xf]
        %v4339 = vld [vmem:[%s4316 + $0x58] sm:$0xf]
        %v4340 = vld [vmem:[%s4316 + $0x5c] sm:$0xf]
        %v4341 = vld [vmem:[%s4316 + $0x60] sm:$0xf]
        %v4342 = vld [vmem:[%s4316 + $0x64] sm:$0xf]
        %v4343 = vld [vmem:[%s4316 + $0x68] sm:$0xf]
        %v4344 = vld [vmem:[%s4316 + $0x6c] sm:$0xf]
        %v4345 = vld [vmem:[%s4316 + $0x70] sm:$0xf]
        %v4346 = vld [vmem:[%s4316 + $0x74] sm:$0xf]
        %v4347 = vld [vmem:[%s4316 + $0x78] sm:$0xf]
        %v4348 = vld [vmem:[%s4316 + $0x7c] sm:$0xf]
        %v4381 = vunpack.c.l.b16 %v4317
        %v4382 = vunpack.c.l.b16 %v4318
        %v4383 = vunpack.c.l.b16 %v4319
        %v4384 = vunpack.c.l.b16 %v4320
        %v4385 = vunpack.c.l.b16 %v4321
        %v4386 = vunpack.c.l.b16 %v4322
        %v4387 = vunpack.c.l.b16 %v4323
        %v4388 = vunpack.c.l.b16 %v4324
        %v4389 = vunpack.c.l.b16 %v4325
        %v4390 = vunpack.c.l.b16 %v4326
        %v4391 = vunpack.c.l.b16 %v4327
        %v4392 = vunpack.c.l.b16 %v4328
        %v4393 = vunpack.c.l.b16 %v4329
        %v4394 = vunpack.c.l.b16 %v4330
        %v4395 = vunpack.c.l.b16 %v4331
        %v4396 = vunpack.c.l.b16 %v4332
        %v4397 = vunpack.c.l.b16 %v4333
        %v4398 = vunpack.c.l.b16 %v4334
        %v4399 = vunpack.c.l.b16 %v4335
        %v4400 = vunpack.c.l.b16 %v4336
        %v4401 = vunpack.c.l.b16 %v4337
        %v4402 = vunpack.c.l.b16 %v4338
        %v4403 = vunpack.c.l.b16 %v4339
        %v4404 = vunpack.c.l.b16 %v4340
        %v4405 = vunpack.c.l.b16 %v4341
        %v4406 = vunpack.c.l.b16 %v4342
        %v4407 = vunpack.c.l.b16 %v4343
        %v4408 = vunpack.c.l.b16 %v4344
        %v4409 = vunpack.c.l.b16 %v4345
        %v4410 = vunpack.c.l.b16 %v4346
        %v4411 = vunpack.c.l.b16 %v4347
        %v4412 = vunpack.c.l.b16 %v4348
        %v4413 = vpack.c.b16 %v4382, %v4381
        %v4414 = vpack.c.b16 %v4384, %v4383
        %v4415 = vpack.c.b16 %v4386, %v4385
        %v4416 = vpack.c.b16 %v4388, %v4387
        %v4417 = vpack.c.b16 %v4390, %v4389
        %v4418 = vpack.c.b16 %v4392, %v4391
        %v4419 = vpack.c.b16 %v4394, %v4393
        %v4420 = vpack.c.b16 %v4396, %v4395
        %v4421 = vpack.c.b16 %v4398, %v4397
        %v4422 = vpack.c.b16 %v4400, %v4399
        %v4423 = vpack.c.b16 %v4402, %v4401
        %v4424 = vpack.c.b16 %v4404, %v4403
        %v4425 = vpack.c.b16 %v4406, %v4405
        %v4426 = vpack.c.b16 %v4408, %v4407
        %v4427 = vpack.c.b16 %v4410, %v4409
        %v4428 = vpack.c.b16 %v4412, %v4411
        %4445 = vmatprep.subr.bf16.mxu0 0
        %4446 = vmatpush1.bf16.msra.mxu0 %v4413
        %4447 = vmatprep.subr.bf16.mxu0 0
        %4448 = vmatpush1.bf16.msra.mxu0 %v4414
        %4449 = vmatprep.subr.bf16.mxu0 0
        %4450 = vmatpush1.bf16.msra.mxu0 %v4415
        %4451 = vmatprep.subr.bf16.mxu0 0
        %4452 = vmatpush1.bf16.msra.mxu0 %v4416
        %4453 = vmatprep.subr.bf16.mxu0 0
        %4454 = vmatpush1.bf16.msra.mxu0 %v4417
        %4455 = vmatprep.subr.bf16.mxu0 0
        %4456 = vmatpush1.bf16.msra.mxu0 %v4418
        %4457 = vmatprep.subr.bf16.mxu0 0
        %4458 = vmatpush1.bf16.msra.mxu0 %v4419
        %4459 = vmatprep.subr.bf16.mxu0 0
        %4460 = vmatpush1.bf16.msra.mxu0 %v4420
        %4461 = vmatprep.subr.bf16.mxu0 0
        %4462 = vmatpush1.bf16.msra.mxu0 %v4421
        %4463 = vmatprep.subr.bf16.mxu0 0
        %4464 = vmatpush1.bf16.msra.mxu0 %v4422
        %4465 = vmatprep.subr.bf16.mxu0 0
        %4466 = vmatpush1.bf16.msra.mxu0 %v4423
        %4467 = vmatprep.subr.bf16.mxu0 0
        %4468 = vmatpush1.bf16.msra.mxu0 %v4424
        %4469 = vmatprep.subr.bf16.mxu0 0
        %4470 = vmatpush1.bf16.msra.mxu0 %v4425
        %4471 = vmatprep.subr.bf16.mxu0 0
        %4472 = vmatpush1.bf16.msra.mxu0 %v4426
        %4473 = vmatprep.subr.bf16.mxu0 0
        %4474 = vmatpush1.bf16.msra.mxu0 %v4427
        %4475 = vmatprep.subr.bf16.mxu0 0
        %4476 = vmatpush1.bf16.msra.mxu0 %v4428
        %4477 = vmatprep.mubr.bf16.mxu0 %v4147
        %4478 = vmatmul.mubr.bf16.gmra.mrb[0].mxu0 %v4146
        %v4479 = vpop.f32.mrb[0].mxu0
        %v4480 = vadd.f32 0.0, %v4479
        %v4481 = vpop.f32.mrb[0].mxu0
        %v4482 = vpop.f32.mrb[0].mxu0
        %v4483 = vpop.f32.mrb[0].mxu0
        %4484 = vdwg.mxu0
        %v4485 = vmax.f32 %v4311, %v4480
        %v4486 = vmax.f32 %v4485, 0.0
        %v4487 = vpack.c.bf16 %v4486, %v4486
        %v4488 = vld [vmem:[%s21] sm:$0xf]
        %v4489 = vld [vmem:[%s21 + $0x4] sm:$0xf]
        %v4490 = vld [vmem:[%s21 + $0x8] sm:$0xf]
        %v4491 = vld [vmem:[%s21 + $0xc] sm:$0xf]
        %v4492 = vld [vmem:[%s21 + $0x10] sm:$0xf]
        %v4493 = vld [vmem:[%s21 + $0x14] sm:$0xf]
        %v4494 = vld [vmem:[%s21 + $0x18] sm:$0xf]
        %v4495 = vld [vmem:[%s21 + $0x1c] sm:$0xf]
        %v4496 = vld [vmem:[%s21 + $0x20] sm:$0xf]
        %v4497 = vld [vmem:[%s21 + $0x24] sm:$0xf]
        %v4498 = vld [vmem:[%s21 + $0x28] sm:$0xf]
        %v4499 = vld [vmem:[%s21 + $0x2c] sm:$0xf]
        %v4500 = vld [vmem:[%s21 + $0x30] sm:$0xf]
        %v4501 = vld [vmem:[%s21 + $0x34] sm:$0xf]
        %v4502 = vld [vmem:[%s21 + $0x38] sm:$0xf]
        %v4503 = vld [vmem:[%s21 + $0x3c] sm:$0xf]
        %v4504 = vld [vmem:[%s22] sm:$0x1]
        %v4521 = vunpack.c.l.b16 %v4488
        %v4522 = vunpack.c.l.b16 %v4489
        %v4523 = vunpack.c.l.b16 %v4490
        %v4524 = vunpack.c.l.b16 %v4491
        %v4525 = vunpack.c.l.b16 %v4492
        %v4526 = vunpack.c.l.b16 %v4493
        %v4527 = vunpack.c.l.b16 %v4494
        %v4528 = vunpack.c.l.b16 %v4495
        %v4529 = vunpack.c.l.b16 %v4496
        %v4530 = vunpack.c.l.b16 %v4497
        %v4531 = vunpack.c.l.b16 %v4498
        %v4532 = vunpack.c.l.b16 %v4499
        %v4533 = vunpack.c.l.b16 %v4500
        %v4534 = vunpack.c.l.b16 %v4501
        %v4535 = vunpack.c.l.b16 %v4502
        %v4536 = vunpack.c.l.b16 %v4503
        %v4537 = vpack.c.b16 %v4522, %v4521
        %v4538 = vpack.c.b16 %v4524, %v4523
        %v4539 = vpack.c.b16 %v4526, %v4525
        %v4540 = vpack.c.b16 %v4528, %v4527
        %v4541 = vpack.c.b16 %v4530, %v4529
        %v4542 = vpack.c.b16 %v4532, %v4531
        %v4543 = vpack.c.b16 %v4534, %v4533
        %v4544 = vpack.c.b16 %v4536, %v4535
        %4553 = vmatprep.subr.bf16.mxu0 0
        %4554 = vmatpush1.bf16.msra.mxu0 %v4537
        %4555 = vmatprep.subr.bf16.mxu0 0
        %4556 = vmatpush1.bf16.msra.mxu0 %v4538
        %4557 = vmatprep.subr.bf16.mxu0 0
        %4558 = vmatpush1.bf16.msra.mxu0 %v4539
        %4559 = vmatprep.subr.bf16.mxu0 0
        %4560 = vmatpush1.bf16.msra.mxu0 %v4540
        %4561 = vmatprep.subr.bf16.mxu0 0
        %4562 = vmatpush1.bf16.msra.mxu0 %v4541
        %4563 = vmatprep.subr.bf16.mxu0 0
        %4564 = vmatpush1.bf16.msra.mxu0 %v4542
        %4565 = vmatprep.subr.bf16.mxu0 0
        %4566 = vmatpush1.bf16.msra.mxu0 %v4543
        %4567 = vmatprep.subr.bf16.mxu0 0
        %4568 = vmatpush1.bf16.msra.mxu0 %v4544
        %4569 = vmatprep.subr.bf16.mxu0 0
        %4570 = vmatpush1.bf16.msra.mxu0 0
        %4571 = vmatprep.subr.bf16.mxu0 0
        %4572 = vmatpush1.bf16.msra.mxu0 0
        %4573 = vmatprep.subr.bf16.mxu0 0
        %4574 = vmatpush1.bf16.msra.mxu0 0
        %4575 = vmatprep.subr.bf16.mxu0 0
        %4576 = vmatpush1.bf16.msra.mxu0 0
        %4577 = vmatprep.subr.bf16.mxu0 0
        %4578 = vmatpush1.bf16.msra.mxu0 0
        %4579 = vmatprep.subr.bf16.mxu0 0
        %4580 = vmatpush1.bf16.msra.mxu0 0
        %4581 = vmatprep.subr.bf16.mxu0 0
        %4582 = vmatpush1.bf16.msra.mxu0 0
        %4583 = vmatprep.subr.bf16.mxu0 0
        %4584 = vmatpush1.bf16.msra.mxu0 0
        %4585 = vmatprep.mubr.bf16.mxu0 0
        %4586 = vmatmul.mubr.bf16.gmra.mrb[0].mxu0 %v4487
        %v4587 = vpop.f32.mrb[0].mxu0
        %v4588 = vadd.f32 %v4504, %v4587
        %v4589 = vpop.f32.mrb[0].mxu0
        %v4590 = vpop.f32.mrb[0].mxu0
        %v4591 = vpop.f32.mrb[0].mxu0
        %4592 = vdwg.mxu0
        %vm4593 = vcmask 73728
        %4594 = vst.msk [vmem:[%s834] sm:$0x1] %vm4593, %v4588
        %s4595 = sand.u32 %s538, 1
        %s4596 = scalar_lea.sflag [#allocation4], %s4595
        %s4597 = sand.u32 %s538, 1
        %s4598 = scalar_lea.vmem [#allocation17], %s4597
        // Predicated region
        $region149: #{cnn_fc_forward.1} parent=111 // pred_check
          %p4599 = pneg %p548
        $region150: #{cnn_fc_forward.1} parent=111 // pred_check_branch
          %4601 = sbr.rel (%p4599) target = $region152
        $region151: #{cnn_fc_forward.1} parent=111 // pred_region
          %s4603 = ssub.s32 16, 16
          %4604 = vsyncadd %s4596, %s4603
          %s4605 = smul.addr %s42, 16
          %s4606 = scalar_lea.hbm %s23, %s4605
          %s4608 = sshll.u32 %s4598, 4
          %s4609 = int_to_ptr.vmem [resolvable:$true] %s4608
          %4611 = dma.vmem_to_hbm [thread:$0]  %s4609, 16, %s4606, %s4596
        $region152: #{cnn_fc_forward.1} parent=111 // pred_fallthru
          _
      $region112: #{cnn_fc_forward.1} parent=5 // pred_fallthru
        _
      %p4612 = scmp.le.s32.totalorder 2, %s37
      // Predicated region
      $region153: #{cnn_fc_forward.1} parent=5 // pred_check
        %p4613 = pneg %p4612
      $region154: #{cnn_fc_forward.1} parent=5 // pred_check_branch
        %4615 = sbr.rel (%p4613) target = $region156
      $region155: #{cnn_fc_forward.1} parent=5 // pred_region
        %s4616 = ssub.s32 %s37, 2
        // Predicated region
        $region157: #{cnn_fc_forward.1} parent=155 // pred_check
          %p4617 = pneg %p554
        $region158: #{cnn_fc_forward.1} parent=155 // pred_check_branch
          %4619 = sbr.rel (%p4617) target = $region160
        $region159: #{cnn_fc_forward.1} parent=155 // pred_region
          %s4620 = sand.u32 %s539, 1
          %s4621 = scalar_lea.sflag [#allocation4], %s4620
          %s4622 = sand.u32 %s539, 1
          %s4623 = scalar_lea.vmem [#allocation17], %s4622
          %4624 = dma.done %s4621, 16
        $region160: #{cnn_fc_forward.1} parent=155 // pred_fallthru
          _
      $region156: #{cnn_fc_forward.1} parent=5 // pred_fallthru
        _
    $region6: #{cnn_fc_forward.1} parent=1 // loop_footer
      %s41 = sadd.s32 1, %s37
    $region7: #{cnn_fc_forward.1} parent=1 // loop_footer_branch
      %36 = sbr.rel target = $region3
    $region8: #{cnn_fc_forward.1} parent=1 // loop_exit
      _
    %4625 = vsyncpa [#allocation3], 1
    %s4626 = scalar_lea.sflag [#allocation3], 1
    %4627 = vsyncpa %s4626, 1
    %4628 = vsyncpa [#allocation6], 1
    %4629 = vsyncpa [#allocation9], 1
    %4630 = vsyncpa [#allocation12], 1
    %4631 = vsyncpa [#allocation15], 1
    %4632 = vsyncpa [#allocation4], 1
    %s4633 = scalar_lea.sflag [#allocation4], 1
    %4634 = vsyncpa %s4633, 1

</llo_original>
